<compile_context>
chip_gen: v7x
topology: tpu7x:2x2x1
jax: 0.10.0
libtpu: 0.0.40
codegen_flags: <defaults>
</compile_context>

<pallas_src>
import functools
import math

import jax
import jax.numpy as jnp
from jax import lax
from jax.experimental import pallas as pl
from jax.experimental.pallas import tpu as pltpu

_NEG_BIG = -1e30  # large finite negative (avoids inf-inf NaNs)
_VMEM_LIMIT = 64 * 1024 * 1024


def _pick_tile(dim, target, align):
    """Largest tile <= target that divides dim and is a multiple of align.

    Falls back to the full dim (legal: a block equal to the array dim always
    satisfies the (8,128) constraint)."""
    if dim <= target:
        return dim
    t = (target // align) * align
    while t >= align:
        if dim % t == 0:
            return t
        t -= align
    return dim


# ----------------------------- kernels --------------------------------------


def ln_qkv_kernel(x_ref, g_ref, b_ref, wq_ref, wk_ref, wv_ref,
                  bq_ref, bk_ref, bv_ref, q_ref, k_ref, v_ref):
    """q/k/v = LayerNorm(x) @ W_{q,k,v} + b.  x read once, LN computed once."""
    x = x_ref[...].astype(jnp.float32)
    mean = jnp.mean(x, axis=-1, keepdims=True)
    var = jnp.mean(jnp.square(x - mean), axis=-1, keepdims=True)
    xn = (x - mean) * lax.rsqrt(var + 1e-5)
    xn = (xn * g_ref[...] + b_ref[...]).astype(wq_ref.dtype)
    q_ref[...] = (jnp.dot(xn, wq_ref[...], preferred_element_type=jnp.float32)
                  + bq_ref[...]).astype(q_ref.dtype)
    k_ref[...] = (jnp.dot(xn, wk_ref[...], preferred_element_type=jnp.float32)
                  + bk_ref[...]).astype(k_ref.dtype)
    v_ref[...] = (jnp.dot(xn, wv_ref[...], preferred_element_type=jnp.float32)
                  + bv_ref[...]).astype(v_ref.dtype)


def ln_matmul_kernel(x_ref, g_ref, b_ref, w_ref, bias_ref, o_ref, *, activation):
    """out = act(LayerNorm(x) @ W + bias).  LN math in f32, matmul in bf16."""
    x = x_ref[...].astype(jnp.float32)
    mean = jnp.mean(x, axis=-1, keepdims=True)
    var = jnp.mean(jnp.square(x - mean), axis=-1, keepdims=True)
    xn = (x - mean) * lax.rsqrt(var + 1e-5)
    xn = xn * g_ref[...] + b_ref[...]
    acc = jnp.dot(xn.astype(w_ref.dtype), w_ref[...],
                  preferred_element_type=jnp.float32)
    acc = acc + bias_ref[...]
    if activation == "gelu":
        acc = jax.nn.gelu(acc, approximate=True)
    o_ref[...] = acc.astype(o_ref.dtype)


def matmul_res_kernel(x_ref, w_ref, bias_ref, res_ref, o_ref, acc_ref):
    """out = residual + x @ W + bias, K-tiled with f32 accumulator scratch."""
    k = pl.program_id(2)

    @pl.when(k == 0)
    def _init():
        acc_ref[...] = jnp.zeros(acc_ref.shape, acc_ref.dtype)

    acc_ref[...] += jnp.dot(x_ref[...], w_ref[...],
                            preferred_element_type=jnp.float32)

    @pl.when(k == pl.num_programs(2) - 1)
    def _finalize():
        out = acc_ref[...] + bias_ref[...] + res_ref[...].astype(jnp.float32)
        o_ref[...] = out.astype(o_ref.dtype)


def ln_kernel(x_ref, g_ref, b_ref, o_ref):
    """o = LayerNorm(x) (f32 math, bf16 out) — hoists ln_f out of the lm_head."""
    x = x_ref[...].astype(jnp.float32)
    mean = jnp.mean(x, axis=-1, keepdims=True)
    var = jnp.mean(jnp.square(x - mean), axis=-1, keepdims=True)
    xn = (x - mean) * lax.rsqrt(var + 1e-5)
    o_ref[...] = (xn * g_ref[...] + b_ref[...]).astype(o_ref.dtype)


def lm_head_kernel(x_ref, emb_ref, o_ref):
    """logits_tile = x @ tok_emb.T (NT dot_general, tok_emb untransposed)."""
    o_ref[...] = lax.dot_general(
        x_ref[...], emb_ref[...], (((1,), (1,)), ((), ())),
        preferred_element_type=jnp.float32).astype(o_ref.dtype)


def flash_attn_kernel(qi_ref, ki_ref, q_ref, k_ref, v_ref, o_ref,
                      m_sc, l_sc, acc_sc, *, sm_scale, block_q, block_k):
    """Flash-style causal attention over a lower-triangular flattened schedule.

    Grid = (B*H, n_lower_tri_blocks); qi_ref/ki_ref are scalar-prefetched maps
    flat step -> (q_tile, k_tile), so above-diagonal K/V blocks are never DMA'd.
    """
    t = pl.program_id(1)
    qi = qi_ref[t]
    ki = ki_ref[t]

    @pl.when(ki == 0)
    def _init():
        m_sc[...] = jnp.full(m_sc.shape, _NEG_BIG, m_sc.dtype)
        l_sc[...] = jnp.zeros(l_sc.shape, l_sc.dtype)
        acc_sc[...] = jnp.zeros(acc_sc.shape, acc_sc.dtype)

    q = q_ref[0]  # (block_q, hd) bf16
    k = k_ref[0]  # (block_k, hd)
    v = v_ref[0]
    # NT matmul: contract on the last axes of both operands (no K transpose).
    s = lax.dot_general(q, k, (((1,), (1,)), ((), ())),
                        preferred_element_type=jnp.float32) * sm_scale
    row = qi * block_q + lax.broadcasted_iota(jnp.int32, (block_q, block_k), 0)
    col = ki * block_k + lax.broadcasted_iota(jnp.int32, (block_q, block_k), 1)
    s = jnp.where(col <= row, s, _NEG_BIG)

    m_prev = m_sc[...]
    m_new = jnp.maximum(m_prev, jnp.max(s, axis=-1, keepdims=True))
    alpha = jnp.exp(m_prev - m_new)
    p = jnp.exp(s - m_new)
    l_sc[...] = alpha * l_sc[...] + jnp.sum(p, axis=-1, keepdims=True)
    acc_sc[...] = alpha * acc_sc[...] + jnp.dot(
        p.astype(v.dtype), v, preferred_element_type=jnp.float32)
    m_sc[...] = m_new

    @pl.when(ki == qi)  # last (diagonal) block for this q tile
    def _finalize():
        o_ref[0] = (acc_sc[...] * pl.reciprocal(l_sc[...], approx=True)
                    ).astype(o_ref.dtype)


# ----------------------------- wrappers --------------------------------------


def _params(semantics):
    return pltpu.CompilerParams(dimension_semantics=semantics,
                                vmem_limit_bytes=_VMEM_LIMIT)


def ln_qkv(x, gamma, beta, wq, wk, wv, bq, bk, bv):
    M, D = x.shape
    tm = _pick_tile(M, 512, 8)
    row_spec = pl.BlockSpec((tm, D), lambda i: (i, 0))
    w_spec = pl.BlockSpec((D, D), lambda i: (0, 0))
    vec_spec = pl.BlockSpec((1, D), lambda i: (0, 0))
    vec = lambda a: a.reshape(1, D)
    return pl.pallas_call(
        ln_qkv_kernel,
        out_shape=(jax.ShapeDtypeStruct((M, D), jnp.bfloat16),) * 3,
        grid=(M // tm,),
        in_specs=[row_spec, vec_spec, vec_spec, w_spec, w_spec, w_spec,
                  vec_spec, vec_spec, vec_spec],
        out_specs=(row_spec, row_spec, row_spec),
        compiler_params=_params(("parallel",)),
    )(x, vec(gamma), vec(beta), wq, wk, wv, vec(bq), vec(bk), vec(bv))


def ln_matmul(x, gamma, beta, w, bias, *, activation=None, out_dtype=jnp.bfloat16):
    M, D = x.shape
    N = w.shape[1]
    tm = _pick_tile(M, 512, 8)
    tn = _pick_tile(N, 1024, 128)
    kernel = functools.partial(ln_matmul_kernel, activation=activation)
    return pl.pallas_call(
        kernel,
        out_shape=jax.ShapeDtypeStruct((M, N), out_dtype),
        grid=(M // tm, N // tn),
        in_specs=[
            pl.BlockSpec((tm, D), lambda i, j: (i, 0)),
            pl.BlockSpec((1, D), lambda i, j: (0, 0)),
            pl.BlockSpec((1, D), lambda i, j: (0, 0)),
            pl.BlockSpec((D, tn), lambda i, j: (0, j)),
            pl.BlockSpec((1, tn), lambda i, j: (0, j)),
        ],
        out_specs=pl.BlockSpec((tm, tn), lambda i, j: (i, j)),
        compiler_params=_params(("parallel", "parallel")),
    )(x, gamma.reshape(1, D), beta.reshape(1, D), w, bias.reshape(1, N))


def matmul_bias_residual(x, w, bias, residual):
    M, K = x.shape
    N = w.shape[1]
    tm = _pick_tile(M, 512, 8)
    tn = _pick_tile(N, 1024, 128)
    tk = _pick_tile(K, 512, 128)
    return pl.pallas_call(
        matmul_res_kernel,
        out_shape=jax.ShapeDtypeStruct((M, N), residual.dtype),
        grid=(M // tm, N // tn, K // tk),
        in_specs=[
            pl.BlockSpec((tm, tk), lambda i, j, k: (i, k)),
            pl.BlockSpec((tk, tn), lambda i, j, k: (k, j)),
            pl.BlockSpec((1, tn), lambda i, j, k: (0, j)),
            pl.BlockSpec((tm, tn), lambda i, j, k: (i, j)),
        ],
        out_specs=pl.BlockSpec((tm, tn), lambda i, j, k: (i, j)),
        scratch_shapes=[pltpu.VMEM((tm, tn), jnp.float32)],
        compiler_params=_params(("parallel", "parallel", "arbitrary")),
    )(x, w, bias.reshape(1, N), residual)


def layer_norm(x, gamma, beta, out_dtype=jnp.bfloat16):
    M, D = x.shape
    tm = _pick_tile(M, 512, 8)
    return pl.pallas_call(
        ln_kernel,
        out_shape=jax.ShapeDtypeStruct((M, D), out_dtype),
        grid=(M // tm,),
        in_specs=[pl.BlockSpec((tm, D), lambda i: (i, 0)),
                  pl.BlockSpec((1, D), lambda i: (0, 0)),
                  pl.BlockSpec((1, D), lambda i: (0, 0))],
        out_specs=pl.BlockSpec((tm, D), lambda i: (i, 0)),
        compiler_params=_params(("parallel",)),
    )(x, gamma.reshape(1, D), beta.reshape(1, D))


def lm_head(xf, tok_emb):
    """Weight-stationary tied lm_head: vocab tile outer, so each (tv, D) slice of
    tok_emb is read from HBM exactly once; xf (small) is re-streamed instead."""
    M, D = xf.shape
    V = tok_emb.shape[0]
    tm = _pick_tile(M, 512, 8)
    tv = _pick_tile(V, 1024, 128)
    return pl.pallas_call(
        lm_head_kernel,
        out_shape=jax.ShapeDtypeStruct((M, V), jnp.float32),
        grid=(V // tv, M // tm),
        in_specs=[pl.BlockSpec((tm, D), lambda vj, mi: (mi, 0)),
                  pl.BlockSpec((tv, D), lambda vj, mi: (vj, 0))],
        out_specs=pl.BlockSpec((tm, tv), lambda vj, mi: (mi, vj)),
        compiler_params=_params(("parallel", "parallel")),
    )(xf, tok_emb)


def causal_attention(q, k, v):
    """q, k, v: (B*H, S, hd).  Lower-triangular flattened flash attention."""
    BH, S, hd = q.shape
    blk = _pick_tile(S, 128, 128)  # 128-aligned lane-dense score / K-V blocks
    n_blk = S // blk
    qi_list, ki_list = [], []
    for i in range(n_blk):
        for j in range(i + 1):
            qi_list.append(i)
            ki_list.append(j)
    qi_map = jnp.asarray(qi_list, dtype=jnp.int32)
    ki_map = jnp.asarray(ki_list, dtype=jnp.int32)
    n_steps = len(qi_list)

    kernel = functools.partial(flash_attn_kernel,
                               sm_scale=1.0 / math.sqrt(hd),
                               block_q=blk, block_k=blk)
    grid_spec = pltpu.PrefetchScalarGridSpec(
        num_scalar_prefetch=2,
        grid=(BH, n_steps),
        in_specs=[
            pl.BlockSpec((1, blk, hd), lambda b, t, qi, ki: (b, qi[t], 0)),
            pl.BlockSpec((1, blk, hd), lambda b, t, qi, ki: (b, ki[t], 0)),
            pl.BlockSpec((1, blk, hd), lambda b, t, qi, ki: (b, ki[t], 0)),
        ],
        out_specs=pl.BlockSpec((1, blk, hd), lambda b, t, qi, ki: (b, qi[t], 0)),
        scratch_shapes=[
            pltpu.VMEM((blk, 1), jnp.float32),    # running max
            pltpu.VMEM((blk, 1), jnp.float32),    # running denom
            pltpu.VMEM((blk, hd), jnp.float32),   # output accumulator
        ],
    )
    return pl.pallas_call(
        kernel,
        out_shape=jax.ShapeDtypeStruct((BH, S, hd), jnp.bfloat16),
        grid_spec=grid_spec,
        compiler_params=_params(("parallel", "arbitrary")),
    )(qi_map, ki_map, q, k, v)


# ----------------------------- model -----------------------------------------


def init_params(key, cfg):
    D, V, L, Mx = cfg["d_embed"], cfg["vocab_size"], cfg["n_layers"], cfg["max_seq_len"]
    std = 0.02
    n_w = 6  # w_q, w_k, w_v, w_o, w_fc, w_proj
    keys = jax.random.split(key, 2 + n_w * L)

    def nrm(k, shape):
        return (std * jax.random.normal(k, shape, dtype=jnp.float32)).astype(jnp.bfloat16)

    params = {
        "tok_emb": nrm(keys[0], (V, D)),      # tied with lm_head
        "pos_emb": nrm(keys[1], (Mx, D)),
        "lnf_g": jnp.ones((D,), jnp.float32),
        "lnf_b": jnp.zeros((D,), jnp.float32),
        "layers": [],
    }
    for i in range(L):
        k = keys[2 + n_w * i: 2 + n_w * (i + 1)]
        params["layers"].append({
            "ln1_g": jnp.ones((D,), jnp.float32),
            "ln1_b": jnp.zeros((D,), jnp.float32),
            "w_q": nrm(k[0], (D, D)), "b_q": jnp.zeros((D,), jnp.float32),
            "w_k": nrm(k[1], (D, D)), "b_k": jnp.zeros((D,), jnp.float32),
            "w_v": nrm(k[2], (D, D)), "b_v": jnp.zeros((D,), jnp.float32),
            "w_o": nrm(k[3], (D, D)), "b_o": jnp.zeros((D,), jnp.float32),
            "ln2_g": jnp.ones((D,), jnp.float32),
            "ln2_b": jnp.zeros((D,), jnp.float32),
            "w_fc": nrm(k[4], (D, 4 * D)), "b_fc": jnp.zeros((4 * D,), jnp.float32),
            "w_proj": nrm(k[5], (4 * D, D)), "b_proj": jnp.zeros((D,), jnp.float32),
        })
    return params


def gpt_forward(params, x, cfg):
    B, S = x.shape
    D, H, V = cfg["d_embed"], cfg["n_heads"], cfg["vocab_size"]
    hd = D // H
    M = B * S

    def split_heads(a):   # (M, D) -> (B*H, S, hd)
        return a.reshape(B, S, H, hd).transpose(0, 2, 1, 3).reshape(B * H, S, hd)

    def merge_heads(a):   # (B*H, S, hd) -> (M, D)
        return a.reshape(B, H, S, hd).transpose(0, 2, 1, 3).reshape(M, D)

    # token + position embeddings (gather is glue, stays in JAX)
    e = jnp.take(params["tok_emb"], x, axis=0)           # (B, S, D) bf16
    p = params["pos_emb"][:S][None, :, :]                 # (1, S, D) bf16
    h = (e + p).astype(jnp.float32).reshape(M, D)         # f32 residual stream

    for layer in params["layers"]:
        # --- causal self-attention block (ln1 + fused q/k/v projections) ---
        q, k, v = ln_qkv(h, layer["ln1_g"], layer["ln1_b"],
                         layer["w_q"], layer["w_k"], layer["w_v"],
                         layer["b_q"], layer["b_k"], layer["b_v"])
        o = causal_attention(split_heads(q), split_heads(k), split_heads(v))
        h = matmul_bias_residual(merge_heads(o), layer["w_o"], layer["b_o"], h)
        # --- MLP block (ln2 + GELU fused into the up-projection) ---
        m = ln_matmul(h, layer["ln2_g"], layer["ln2_b"], layer["w_fc"],
                      layer["b_fc"], activation="gelu")
        h = matmul_bias_residual(m, layer["w_proj"], layer["b_proj"], h)

    # ln_f precomputed once, then weight-stationary tied lm_head (no transpose)
    xf = layer_norm(h, params["lnf_g"], params["lnf_b"])
    logits = lm_head(xf, params["tok_emb"])
    return logits.reshape(B, S, V), None


# ----------------------------- main -------------------------------------------

if __name__ == "__main__":
    cfg = dict(vocab_size=64, max_seq_len=16, d_embed=32, n_heads=4, n_layers=2)
    key = jax.random.PRNGKey(0)
    k_params, k_tokens = jax.random.split(key)

    params = init_params(k_params, cfg)
    B, S = 2, 8
    tokens = jax.random.randint(k_tokens, (B, S), 0, cfg["vocab_size"], dtype=jnp.int32)

    fwd = jax.jit(functools.partial(gpt_forward, cfg=cfg))
    logits, loss = fwd(params, tokens)
    logits = jax.block_until_ready(logits)
    assert logits.shape == (B, S, cfg["vocab_size"])
    assert loss is None
    print("KERNEL_OK")
</pallas_src>

<mosaic_0001>
module attributes {stable_mosaic.version = 11 : i64} {
  func.func @ln_qkv_kernel(%arg0: i32, %arg1: memref<16x32xf32, #tpu.memory_space<vmem>>, %arg2: memref<1x32xf32, #tpu.memory_space<vmem>>, %arg3: memref<1x32xf32, #tpu.memory_space<vmem>>, %arg4: memref<32x32xbf16, #tpu.memory_space<vmem>>, %arg5: memref<32x32xbf16, #tpu.memory_space<vmem>>, %arg6: memref<32x32xbf16, #tpu.memory_space<vmem>>, %arg7: memref<1x32xf32, #tpu.memory_space<vmem>>, %arg8: memref<1x32xf32, #tpu.memory_space<vmem>>, %arg9: memref<1x32xf32, #tpu.memory_space<vmem>>, %arg10: memref<16x32xbf16, #tpu.memory_space<vmem>>, %arg11: memref<16x32xbf16, #tpu.memory_space<vmem>>, %arg12: memref<16x32xbf16, #tpu.memory_space<vmem>>) attributes {dimension_semantics = [#tpu.dimension_semantics<parallel>], iteration_bounds = array<i64: 1>, scalar_prefetch = 0 : i64, scratch_operands = 0 : i64, tpu.core_type = #tpu.core_type<tc>, window_params = [{transform_indices = @transform_0, window_bounds = array<i64: 16, 32>}, {pipeline_mode = #tpu.pipeline_mode<synchronous>, transform_indices = @transform_1, window_bounds = array<i64: 1, 32>}, {pipeline_mode = #tpu.pipeline_mode<synchronous>, transform_indices = @transform_2, window_bounds = array<i64: 1, 32>}, {pipeline_mode = #tpu.pipeline_mode<synchronous>, transform_indices = @transform_3, window_bounds = array<i64: 32, 32>}, {pipeline_mode = #tpu.pipeline_mode<synchronous>, transform_indices = @transform_4, window_bounds = array<i64: 32, 32>}, {pipeline_mode = #tpu.pipeline_mode<synchronous>, transform_indices = @transform_5, window_bounds = array<i64: 32, 32>}, {pipeline_mode = #tpu.pipeline_mode<synchronous>, transform_indices = @transform_6, window_bounds = array<i64: 1, 32>}, {pipeline_mode = #tpu.pipeline_mode<synchronous>, transform_indices = @transform_7, window_bounds = array<i64: 1, 32>}, {pipeline_mode = #tpu.pipeline_mode<synchronous>, transform_indices = @transform_8, window_bounds = array<i64: 1, 32>}, {transform_indices = @transform_9, window_bounds = array<i64: 16, 32>}, {transform_indices = @transform_10, window_bounds = array<i64: 16, 32>}, {transform_indices = @transform_11, window_bounds = array<i64: 16, 32>}]} {
    %c0 = arith.constant 0 : index
    %c0_0 = arith.constant 0 : index
    %0 = vector.load %arg1[%c0, %c0_0] : memref<16x32xf32, #tpu.memory_space<vmem>>, vector<16x32xf32>
    %cst = arith.constant dense<0.000000e+00> : vector<16xf32>
    %1 = vector.multi_reduction <add>, %0, %cst [1] : vector<16x32xf32> to vector<16xf32>
    %2 = vector.shape_cast %1 : vector<16xf32> to vector<16x1xf32>
    %cst_1 = arith.constant 3.200000e+01 : f32
    %3 = vector.broadcast %cst_1 : f32 to vector<16x1xf32>
    %4 = arith.divf %2, %3 : vector<16x1xf32>
    %5 = vector.broadcast %4 : vector<16x1xf32> to vector<16x32xf32>
    %6 = arith.subf %0, %5 : vector<16x32xf32>
    %7 = arith.mulf %6, %6 : vector<16x32xf32>
    %cst_2 = arith.constant dense<0.000000e+00> : vector<16xf32>
    %8 = vector.multi_reduction <add>, %7, %cst_2 [1] : vector<16x32xf32> to vector<16xf32>
    %9 = vector.shape_cast %8 : vector<16xf32> to vector<16x1xf32>
    %cst_3 = arith.constant 3.200000e+01 : f32
    %10 = vector.broadcast %cst_3 : f32 to vector<16x1xf32>
    %11 = arith.divf %9, %10 : vector<16x1xf32>
    %12 = vector.broadcast %4 : vector<16x1xf32> to vector<16x32xf32>
    %13 = arith.subf %0, %12 : vector<16x32xf32>
    %cst_4 = arith.constant 9.99999974E-6 : f32
    %14 = vector.broadcast %cst_4 : f32 to vector<16x1xf32>
    %15 = arith.addf %11, %14 : vector<16x1xf32>
    %16 = math.rsqrt %15 : vector<16x1xf32>
    %17 = vector.broadcast %16 : vector<16x1xf32> to vector<16x32xf32>
    %18 = arith.mulf %13, %17 : vector<16x32xf32>
    %c0_5 = arith.constant 0 : index
    %c0_6 = arith.constant 0 : index
    %19 = vector.load %arg2[%c0_5, %c0_6] : memref<1x32xf32, #tpu.memory_space<vmem>>, vector<1x32xf32>
    %20 = vector.broadcast %19 : vector<1x32xf32> to vector<16x32xf32>
    %21 = arith.mulf %18, %20 : vector<16x32xf32>
    %c0_7 = arith.constant 0 : index
    %c0_8 = arith.constant 0 : index
    %22 = vector.load %arg3[%c0_7, %c0_8] : memref<1x32xf32, #tpu.memory_space<vmem>>, vector<1x32xf32>
    %23 = vector.broadcast %22 : vector<1x32xf32> to vector<16x32xf32>
    %24 = arith.addf %21, %23 : vector<16x32xf32>
    %25 = arith.truncf %24 : vector<16x32xf32> to vector<16x32xbf16>
    %c0_9 = arith.constant 0 : index
    %c0_10 = arith.constant 0 : index
    %26 = vector.load %arg4[%c0_9, %c0_10] : memref<32x32xbf16, #tpu.memory_space<vmem>>, vector<32x32xbf16>
    %cst_11 = arith.constant dense<0.000000e+00> : vector<16x32xf32>
    %27 = tpu.matmul %25, %26, %cst_11 {dimension_numbers = #tpu.dot_dimension_numbers<[1], [0], [0], [1], [0, 0, 1, 1], [], []>} : vector<16x32xbf16>, vector<32x32xbf16>, vector<16x32xf32> -> vector<16x32xf32>
    %c0_12 = arith.constant 0 : index
    %c0_13 = arith.constant 0 : index
    %28 = vector.load %arg7[%c0_12, %c0_13] : memref<1x32xf32, #tpu.memory_space<vmem>>, vector<1x32xf32>
    %29 = vector.broadcast %28 : vector<1x32xf32> to vector<16x32xf32>
    %30 = arith.addf %27, %29 : vector<16x32xf32>
    %31 = arith.truncf %30 : vector<16x32xf32> to vector<16x32xbf16>
    %c0_14 = arith.constant 0 : index
    %c0_15 = arith.constant 0 : index
    %32 = vector.load %arg10[%c0_14, %c0_15] : memref<16x32xbf16, #tpu.memory_space<vmem>>, vector<16x32xbf16>
    tpu.vector_store %arg10[%c0_14, %c0_15], %31 {strides = array<i32>} : memref<16x32xbf16, #tpu.memory_space<vmem>>, vector<16x32xbf16>,
    %c0_16 = arith.constant 0 : index
    %c0_17 = arith.constant 0 : index
    %33 = vector.load %arg5[%c0_16, %c0_17] : memref<32x32xbf16, #tpu.memory_space<vmem>>, vector<32x32xbf16>
    %cst_18 = arith.constant dense<0.000000e+00> : vector<16x32xf32>
    %34 = tpu.matmul %25, %33, %cst_18 {dimension_numbers = #tpu.dot_dimension_numbers<[1], [0], [0], [1], [0, 0, 1, 1], [], []>} : vector<16x32xbf16>, vector<32x32xbf16>, vector<16x32xf32> -> vector<16x32xf32>
    %c0_19 = arith.constant 0 : index
    %c0_20 = arith.constant 0 : index
    %35 = vector.load %arg8[%c0_19, %c0_20] : memref<1x32xf32, #tpu.memory_space<vmem>>, vector<1x32xf32>
    %36 = vector.broadcast %35 : vector<1x32xf32> to vector<16x32xf32>
    %37 = arith.addf %34, %36 : vector<16x32xf32>
    %38 = arith.truncf %37 : vector<16x32xf32> to vector<16x32xbf16>
    %c0_21 = arith.constant 0 : index
    %c0_22 = arith.constant 0 : index
    %39 = vector.load %arg11[%c0_21, %c0_22] : memref<16x32xbf16, #tpu.memory_space<vmem>>, vector<16x32xbf16>
    tpu.vector_store %arg11[%c0_21, %c0_22], %38 {strides = array<i32>} : memref<16x32xbf16, #tpu.memory_space<vmem>>, vector<16x32xbf16>,
    %c0_23 = arith.constant 0 : index
    %c0_24 = arith.constant 0 : index
    %40 = vector.load %arg6[%c0_23, %c0_24] : memref<32x32xbf16, #tpu.memory_space<vmem>>, vector<32x32xbf16>
    %cst_25 = arith.constant dense<0.000000e+00> : vector<16x32xf32>
    %41 = tpu.matmul %25, %40, %cst_25 {dimension_numbers = #tpu.dot_dimension_numbers<[1], [0], [0], [1], [0, 0, 1, 1], [], []>} : vector<16x32xbf16>, vector<32x32xbf16>, vector<16x32xf32> -> vector<16x32xf32>
    %c0_26 = arith.constant 0 : index
    %c0_27 = arith.constant 0 : index
    %42 = vector.load %arg9[%c0_26, %c0_27] : memref<1x32xf32, #tpu.memory_space<vmem>>, vector<1x32xf32>
    %43 = vector.broadcast %42 : vector<1x32xf32> to vector<16x32xf32>
    %44 = arith.addf %41, %43 : vector<16x32xf32>
    %45 = arith.truncf %44 : vector<16x32xf32> to vector<16x32xbf16>
    %c0_28 = arith.constant 0 : index
    %c0_29 = arith.constant 0 : index
    %46 = vector.load %arg12[%c0_28, %c0_29] : memref<16x32xbf16, #tpu.memory_space<vmem>>, vector<16x32xbf16>
    tpu.vector_store %arg12[%c0_28, %c0_29], %45 {strides = array<i32>} : memref<16x32xbf16, #tpu.memory_space<vmem>>, vector<16x32xbf16>,
    return
  }
  func.func @transform_0(%arg0: i32) -> (i32, i32) {
    %c0_i32 = arith.constant 0 : i32
    %c0_i32_0 = arith.constant 0 : i32
    return %arg0, %c0_i32 : i32, i32
  }
  func.func @transform_1(%arg0: i32) -> (i32, i32) {
    %c0_i32 = arith.constant 0 : i32
    %c0_i32_0 = arith.constant 0 : i32
    %c0_i32_1 = arith.constant 0 : i32
    return %c0_i32, %c0_i32_0 : i32, i32
  }
  func.func @transform_2(%arg0: i32) -> (i32, i32) {
    %c0_i32 = arith.constant 0 : i32
    %c0_i32_0 = arith.constant 0 : i32
    %c0_i32_1 = arith.constant 0 : i32
    return %c0_i32, %c0_i32_0 : i32, i32
  }
  func.func @transform_3(%arg0: i32) -> (i32, i32) {
    %c0_i32 = arith.constant 0 : i32
    %c0_i32_0 = arith.constant 0 : i32
    %c0_i32_1 = arith.constant 0 : i32
    return %c0_i32, %c0_i32_0 : i32, i32
  }
  func.func @transform_4(%arg0: i32) -> (i32, i32) {
    %c0_i32 = arith.constant 0 : i32
    %c0_i32_0 = arith.constant 0 : i32
    %c0_i32_1 = arith.constant 0 : i32
    return %c0_i32, %c0_i32_0 : i32, i32
  }
  func.func @transform_5(%arg0: i32) -> (i32, i32) {
    %c0_i32 = arith.constant 0 : i32
    %c0_i32_0 = arith.constant 0 : i32
    %c0_i32_1 = arith.constant 0 : i32
    return %c0_i32, %c0_i32_0 : i32, i32
  }
  func.func @transform_6(%arg0: i32) -> (i32, i32) {
    %c0_i32 = arith.constant 0 : i32
    %c0_i32_0 = arith.constant 0 : i32
    %c0_i32_1 = arith.constant 0 : i32
    return %c0_i32, %c0_i32_0 : i32, i32
  }
  func.func @transform_7(%arg0: i32) -> (i32, i32) {
    %c0_i32 = arith.constant 0 : i32
    %c0_i32_0 = arith.constant 0 : i32
    %c0_i32_1 = arith.constant 0 : i32
    return %c0_i32, %c0_i32_0 : i32, i32
  }
  func.func @transform_8(%arg0: i32) -> (i32, i32) {
    %c0_i32 = arith.constant 0 : i32
    %c0_i32_0 = arith.constant 0 : i32
    %c0_i32_1 = arith.constant 0 : i32
    return %c0_i32, %c0_i32_0 : i32, i32
  }
  func.func @transform_9(%arg0: i32) -> (i32, i32) {
    %c0_i32 = arith.constant 0 : i32
    %c0_i32_0 = arith.constant 0 : i32
    return %arg0, %c0_i32 : i32, i32
  }
  func.func @transform_10(%arg0: i32) -> (i32, i32) {
    %c0_i32 = arith.constant 0 : i32
    %c0_i32_0 = arith.constant 0 : i32
    return %arg0, %c0_i32 : i32, i32
  }
  func.func @transform_11(%arg0: i32) -> (i32, i32) {
    %c0_i32 = arith.constant 0 : i32
    %c0_i32_0 = arith.constant 0 : i32
    return %arg0, %c0_i32 : i32, i32
  }
}

module attributes {stable_mosaic.version = 11 : i64} {
  func.func @flash_attn_kernel(%arg0: i32, %arg1: i32, %arg2: memref<1xi32, #tpu.memory_space<smem>>, %arg3: memref<1xi32, #tpu.memory_space<smem>>, %arg4: memref<1x8x8xbf16, #tpu.memory_space<vmem>>, %arg5: memref<1x8x8xbf16, #tpu.memory_space<vmem>>, %arg6: memref<1x8x8xbf16, #tpu.memory_space<vmem>>, %arg7: memref<1x8x8xbf16, #tpu.memory_space<vmem>>, %arg8: memref<8x1xf32, #tpu.memory_space<vmem>>, %arg9: memref<8x1xf32, #tpu.memory_space<vmem>>, %arg10: memref<8x8xf32, #tpu.memory_space<vmem>>) attributes {dimension_semantics = [#tpu.dimension_semantics<parallel>, #tpu.dimension_semantics<arbitrary>], iteration_bounds = array<i64: 8, 1>, scalar_prefetch = 2 : i64, scratch_operands = 3 : i64, tpu.core_type = #tpu.core_type<tc>, window_params = [{transform_indices = @transform_0, window_bounds = array<i64: 1, 8, 8>}, {transform_indices = @transform_1, window_bounds = array<i64: 1, 8, 8>}, {transform_indices = @transform_2, window_bounds = array<i64: 1, 8, 8>}, {transform_indices = @transform_3, window_bounds = array<i64: 1, 8, 8>}]} {
    %0 = arith.index_cast %arg1 : i32 to index
    %1 = memref.load %arg2[%0] : memref<1xi32, #tpu.memory_space<smem>>
    %2 = arith.index_cast %arg1 : i32 to index
    %3 = memref.load %arg3[%2] : memref<1xi32, #tpu.memory_space<smem>>
    %c0_i32 = arith.constant 0 : i32
    %4 = arith.cmpi eq, %3, %c0_i32 : i32
    %5 = arith.extui %4 : i1 to i32
    %c0_i32_0 = arith.constant 0 : i32
    %6 = arith.cmpi ne, %5, %c0_i32_0 : i32
    scf.if %6 {
      %cst_28 = arith.constant -1.000000e+30 : f32
      %53 = vector.broadcast %cst_28 : f32 to vector<8x1xf32>
      %c0_29 = arith.constant 0 : index
      %c0_30 = arith.constant 0 : index
      %54 = vector.load %arg8[%c0_29, %c0_30] : memref<8x1xf32, #tpu.memory_space<vmem>>, vector<8x1xf32>
      tpu.vector_store %arg8[%c0_29, %c0_30], %53 {strides = array<i32>} : memref<8x1xf32, #tpu.memory_space<vmem>>, vector<8x1xf32>,
      %cst_31 = arith.constant 0.000000e+00 : f32
      %55 = vector.broadcast %cst_31 : f32 to vector<8x1xf32>
      %c0_32 = arith.constant 0 : index
      %c0_33 = arith.constant 0 : index
      %56 = vector.load %arg9[%c0_32, %c0_33] : memref<8x1xf32, #tpu.memory_space<vmem>>, vector<8x1xf32>
      tpu.vector_store %arg9[%c0_32, %c0_33], %55 {strides = array<i32>} : memref<8x1xf32, #tpu.memory_space<vmem>>, vector<8x1xf32>,
      %cst_34 = arith.constant 0.000000e+00 : f32
      %57 = vector.broadcast %cst_34 : f32 to vector<8x8xf32>
      %c0_35 = arith.constant 0 : index
      %c0_36 = arith.constant 0 : index
      %58 = vector.load %arg10[%c0_35, %c0_36] : memref<8x8xf32, #tpu.memory_space<vmem>>, vector<8x8xf32>
      tpu.vector_store %arg10[%c0_35, %c0_36], %57 {strides = array<i32>} : memref<8x8xf32, #tpu.memory_space<vmem>>, vector<8x8xf32>,
    } else {
    }
    %c0 = arith.constant 0 : index
    %c0_1 = arith.constant 0 : index
    %c0_2 = arith.constant 0 : index
    %7 = vector.load %arg4[%c0, %c0_1, %c0_2] : memref<1x8x8xbf16, #tpu.memory_space<vmem>>, vector<1x8x8xbf16>
    %8 = vector.shape_cast %7 : vector<1x8x8xbf16> to vector<8x8xbf16>
    %c0_3 = arith.constant 0 : index
    %c0_4 = arith.constant 0 : index
    %c0_5 = arith.constant 0 : index
    %9 = vector.load %arg5[%c0_3, %c0_4, %c0_5] : memref<1x8x8xbf16, #tpu.memory_space<vmem>>, vector<1x8x8xbf16>
    %10 = vector.shape_cast %9 : vector<1x8x8xbf16> to vector<8x8xbf16>
    %c0_6 = arith.constant 0 : index
    %c0_7 = arith.constant 0 : index
    %c0_8 = arith.constant 0 : index
    %11 = vector.load %arg6[%c0_6, %c0_7, %c0_8] : memref<1x8x8xbf16, #tpu.memory_space<vmem>>, vector<1x8x8xbf16>
    %12 = vector.shape_cast %11 : vector<1x8x8xbf16> to vector<8x8xbf16>
    %cst = arith.constant dense<0.000000e+00> : vector<8x8xf32>
    %13 = tpu.matmul %8, %10, %cst {dimension_numbers = #tpu.dot_dimension_numbers<[1], [1], [0], [0], [0, 0, 1, 0], [], []>} : vector<8x8xbf16>, vector<8x8xbf16>, vector<8x8xf32> -> vector<8x8xf32>
    %cst_9 = arith.constant 0.353553385 : f32
    %14 = vector.broadcast %cst_9 : f32 to vector<8x8xf32>
    %15 = arith.mulf %13, %14 : vector<8x8xf32>
    %c8_i32 = arith.constant 8 : i32
    %16 = arith.muli %1, %c8_i32 : i32
    %17 = tpu.iota {dimensions = array<i32: 0>} : vector<8x8xi32>
    %18 = vector.broadcast %16 : i32 to vector<8x8xi32>
    %19 = arith.addi %18, %17 : vector<8x8xi32>
    %c8_i32_10 = arith.constant 8 : i32
    %20 = arith.muli %3, %c8_i32_10 : i32
    %21 = tpu.iota {dimensions = array<i32: 1>} : vector<8x8xi32>
    %22 = vector.broadcast %20 : i32 to vector<8x8xi32>
    %23 = arith.addi %22, %21 : vector<8x8xi32>
    %24 = arith.cmpi sle, %23, %19 : vector<8x8xi32>
    %cst_11 = arith.constant -1.000000e+30 : f32
    %25 = vector.broadcast %cst_11 : f32 to vector<8x8xf32>
    %26 = arith.select %24, %15, %25 : vector<8x8xi1>, vector<8x8xf32>
    %c0_12 = arith.constant 0 : index
    %c0_13 = arith.constant 0 : index
    %27 = vector.load %arg8[%c0_12, %c0_13] : memref<8x1xf32, #tpu.memory_space<vmem>>, vector<8x1xf32>
    %cst_14 = arith.constant dense<0xFF800000> : vector<8xf32>
    %28 = vector.multi_reduction <maximumf>, %26, %cst_14 [1] : vector<8x8xf32> to vector<8xf32>
    %29 = vector.shape_cast %28 : vector<8xf32> to vector<8x1xf32>
    %30 = arith.maximumf %27, %29 : vector<8x1xf32>
    %31 = arith.subf %27, %30 : vector<8x1xf32>
    %32 = math.exp %31 : vector<8x1xf32>
    %33 = vector.broadcast %30 : vector<8x1xf32> to vector<8x8xf32>
    %34 = arith.subf %26, %33 : vector<8x8xf32>
    %35 = math.exp %34 : vector<8x8xf32>
    %c0_15 = arith.constant 0 : index
    %c0_16 = arith.constant 0 : index
    %36 = vector.load %arg9[%c0_15, %c0_16] : memref<8x1xf32, #tpu.memory_space<vmem>>, vector<8x1xf32>
    %37 = arith.mulf %32, %36 : vector<8x1xf32>
    %cst_17 = arith.constant dense<0.000000e+00> : vector<8xf32>
    %38 = vector.multi_reduction <add>, %35, %cst_17 [1] : vector<8x8xf32> to vector<8xf32>
    %39 = vector.shape_cast %38 : vector<8xf32> to vector<8x1xf32>
    %40 = arith.addf %37, %39 : vector<8x1xf32>
    %c0_18 = arith.constant 0 : index
    %c0_19 = arith.constant 0 : index
    %41 = vector.load %arg9[%c0_18, %c0_19] : memref<8x1xf32, #tpu.memory_space<vmem>>, vector<8x1xf32>
    tpu.vector_store %arg9[%c0_18, %c0_19], %40 {strides = array<i32>} : memref<8x1xf32, #tpu.memory_space<vmem>>, vector<8x1xf32>,
    %c0_20 = arith.constant 0 : index
    %c0_21 = arith.constant 0 : index
    %42 = vector.load %arg10[%c0_20, %c0_21] : memref<8x8xf32, #tpu.memory_space<vmem>>, vector<8x8xf32>
    %43 = vector.broadcast %32 : vector<8x1xf32> to vector<8x8xf32>
    %44 = arith.mulf %43, %42 : vector<8x8xf32>
    %45 = arith.truncf %35 : vector<8x8xf32> to vector<8x8xbf16>
    %cst_22 = arith.constant dense<0.000000e+00> : vector<8x8xf32>
    %46 = tpu.matmul %45, %12, %cst_22 {dimension_numbers = #tpu.dot_dimension_numbers<[1], [0], [0], [1], [0, 0, 1, 1], [], []>} : vector<8x8xbf16>, vector<8x8xbf16>, vector<8x8xf32> -> vector<8x8xf32>
    %47 = arith.addf %44, %46 : vector<8x8xf32>
    %c0_23 = arith.constant 0 : index
    %c0_24 = arith.constant 0 : index
    %48 = vector.load %arg10[%c0_23, %c0_24] : memref<8x8xf32, #tpu.memory_space<vmem>>, vector<8x8xf32>
    tpu.vector_store %arg10[%c0_23, %c0_24], %47 {strides = array<i32>} : memref<8x8xf32, #tpu.memory_space<vmem>>, vector<8x8xf32>,
    %c0_25 = arith.constant 0 : index
    %c0_26 = arith.constant 0 : index
    %49 = vector.load %arg8[%c0_25, %c0_26] : memref<8x1xf32, #tpu.memory_space<vmem>>, vector<8x1xf32>
    tpu.vector_store %arg8[%c0_25, %c0_26], %30 {strides = array<i32>} : memref<8x1xf32, #tpu.memory_space<vmem>>, vector<8x1xf32>,
    %50 = arith.cmpi eq, %3, %1 : i32
    %51 = arith.extui %50 : i1 to i32
    %c0_i32_27 = arith.constant 0 : i32
    %52 = arith.cmpi ne, %51, %c0_i32_27 : i32
    scf.if %52 {
      %c0_28 = arith.constant 0 : index
      %c0_29 = arith.constant 0 : index
      %53 = vector.load %arg10[%c0_28, %c0_29] : memref<8x8xf32, #tpu.memory_space<vmem>>, vector<8x8xf32>
      %c0_30 = arith.constant 0 : index
      %c0_31 = arith.constant 0 : index
      %54 = vector.load %arg9[%c0_30, %c0_31] : memref<8x1xf32, #tpu.memory_space<vmem>>, vector<8x1xf32>
      %55 = tpu.reciprocal %54 {approx = true} : vector<8x1xf32> -> vector<8x1xf32>
      %56 = vector.broadcast %55 : vector<8x1xf32> to vector<8x8xf32>
      %57 = arith.mulf %53, %56 : vector<8x8xf32>
      %58 = arith.truncf %57 : vector<8x8xf32> to vector<8x8xbf16>
      %c0_32 = arith.constant 0 : index
      %c0_33 = arith.constant 0 : index
      %c0_34 = arith.constant 0 : index
      %59 = vector.load %arg7[%c0_32, %c0_33, %c0_34] : memref<1x8x8xbf16, #tpu.memory_space<vmem>>, vector<1x8x8xbf16>
      %60 = vector.shape_cast %59 : vector<1x8x8xbf16> to vector<8x8xbf16>
      %61 = vector.shape_cast %58 : vector<8x8xbf16> to vector<1x8x8xbf16>
      tpu.vector_store %arg7[%c0_32, %c0_33, %c0_34], %61 {strides = array<i32>} : memref<1x8x8xbf16, #tpu.memory_space<vmem>>, vector<1x8x8xbf16>,
    } else {
    }
    return
  }
  func.func @transform_0(%arg0: i32, %arg1: i32, %arg2: memref<1xi32, #tpu.memory_space<smem>>, %arg3: memref<1xi32, #tpu.memory_space<smem>>) -> (i32, i32, i32) {
    %0 = arith.index_cast %arg1 : i32 to index
    %1 = memref.load %arg2[%0] : memref<1xi32, #tpu.memory_space<smem>>
    %c0_i32 = arith.constant 0 : i32
    %c0_i32_0 = arith.constant 0 : i32
    return %arg0, %1, %c0_i32 : i32, i32, i32
  }
  func.func @transform_1(%arg0: i32, %arg1: i32, %arg2: memref<1xi32, #tpu.memory_space<smem>>, %arg3: memref<1xi32, #tpu.memory_space<smem>>) -> (i32, i32, i32) {
    %0 = arith.index_cast %arg1 : i32 to index
    %1 = memref.load %arg3[%0] : memref<1xi32, #tpu.memory_space<smem>>
    %c0_i32 = arith.constant 0 : i32
    %c0_i32_0 = arith.constant 0 : i32
    return %arg0, %1, %c0_i32 : i32, i32, i32
  }
  func.func @transform_2(%arg0: i32, %arg1: i32, %arg2: memref<1xi32, #tpu.memory_space<smem>>, %arg3: memref<1xi32, #tpu.memory_space<smem>>) -> (i32, i32, i32) {
    %0 = arith.index_cast %arg1 : i32 to index
    %1 = memref.load %arg3[%0] : memref<1xi32, #tpu.memory_space<smem>>
    %c0_i32 = arith.constant 0 : i32
    %c0_i32_0 = arith.constant 0 : i32
    return %arg0, %1, %c0_i32 : i32, i32, i32
  }
  func.func @transform_3(%arg0: i32, %arg1: i32, %arg2: memref<1xi32, #tpu.memory_space<smem>>, %arg3: memref<1xi32, #tpu.memory_space<smem>>) -> (i32, i32, i32) {
    %0 = arith.index_cast %arg1 : i32 to index
    %1 = memref.load %arg2[%0] : memref<1xi32, #tpu.memory_space<smem>>
    %c0_i32 = arith.constant 0 : i32
    %c0_i32_0 = arith.constant 0 : i32
    return %arg0, %1, %c0_i32 : i32, i32, i32
  }
}

module attributes {stable_mosaic.version = 11 : i64} {
  func.func @matmul_res_kernel(%arg0: i32, %arg1: i32, %arg2: i32, %arg3: memref<16x32xbf16, #tpu.memory_space<vmem>>, %arg4: memref<32x32xbf16, #tpu.memory_space<vmem>>, %arg5: memref<1x32xf32, #tpu.memory_space<vmem>>, %arg6: memref<16x32xf32, #tpu.memory_space<vmem>>, %arg7: memref<16x32xf32, #tpu.memory_space<vmem>>, %arg8: memref<16x32xf32, #tpu.memory_space<vmem>>) attributes {dimension_semantics = [#tpu.dimension_semantics<parallel>, #tpu.dimension_semantics<parallel>, #tpu.dimension_semantics<arbitrary>], iteration_bounds = array<i64: 1, 1, 1>, scalar_prefetch = 0 : i64, scratch_operands = 1 : i64, tpu.core_type = #tpu.core_type<tc>, window_params = [{transform_indices = @transform_0, window_bounds = array<i64: 16, 32>}, {transform_indices = @transform_1, window_bounds = array<i64: 32, 32>}, {transform_indices = @transform_2, window_bounds = array<i64: 1, 32>}, {transform_indices = @transform_3, window_bounds = array<i64: 16, 32>}, {transform_indices = @transform_4, window_bounds = array<i64: 16, 32>}]} {
    %c0_i32 = arith.constant 0 : i32
    %0 = arith.cmpi eq, %arg2, %c0_i32 : i32
    %1 = arith.extui %0 : i1 to i32
    %c0_i32_0 = arith.constant 0 : i32
    %2 = arith.cmpi ne, %1, %c0_i32_0 : i32
    scf.if %2 {
      %cst_10 = arith.constant 0.000000e+00 : f32
      %12 = vector.broadcast %cst_10 : f32 to vector<16x32xf32>
      %c0_11 = arith.constant 0 : index
      %c0_12 = arith.constant 0 : index
      %13 = vector.load %arg8[%c0_11, %c0_12] : memref<16x32xf32, #tpu.memory_space<vmem>>, vector<16x32xf32>
      tpu.vector_store %arg8[%c0_11, %c0_12], %12 {strides = array<i32>} : memref<16x32xf32, #tpu.memory_space<vmem>>, vector<16x32xf32>,
    } else {
    }
    %c0 = arith.constant 0 : index
    %c0_1 = arith.constant 0 : index
    %3 = vector.load %arg8[%c0, %c0_1] : memref<16x32xf32, #tpu.memory_space<vmem>>, vector<16x32xf32>
    %c0_2 = arith.constant 0 : index
    %c0_3 = arith.constant 0 : index
    %4 = vector.load %arg3[%c0_2, %c0_3] : memref<16x32xbf16, #tpu.memory_space<vmem>>, vector<16x32xbf16>
    %c0_4 = arith.constant 0 : index
    %c0_5 = arith.constant 0 : index
    %5 = vector.load %arg4[%c0_4, %c0_5] : memref<32x32xbf16, #tpu.memory_space<vmem>>, vector<32x32xbf16>
    %cst = arith.constant dense<0.000000e+00> : vector<16x32xf32>
    %6 = tpu.matmul %4, %5, %cst {dimension_numbers = #tpu.dot_dimension_numbers<[1], [0], [0], [1], [0, 0, 1, 1], [], []>} : vector<16x32xbf16>, vector<32x32xbf16>, vector<16x32xf32> -> vector<16x32xf32>
    %7 = arith.addf %3, %6 : vector<16x32xf32>
    %c0_6 = arith.constant 0 : index
    %c0_7 = arith.constant 0 : index
    %8 = vector.load %arg8[%c0_6, %c0_7] : memref<16x32xf32, #tpu.memory_space<vmem>>, vector<16x32xf32>
    tpu.vector_store %arg8[%c0_6, %c0_7], %7 {strides = array<i32>} : memref<16x32xf32, #tpu.memory_space<vmem>>, vector<16x32xf32>,
    %c0_i32_8 = arith.constant 0 : i32
    %9 = arith.cmpi eq, %arg2, %c0_i32_8 : i32
    %10 = arith.extui %9 : i1 to i32
    %c0_i32_9 = arith.constant 0 : i32
    %11 = arith.cmpi ne, %10, %c0_i32_9 : i32
    scf.if %11 {
      %c0_10 = arith.constant 0 : index
      %c0_11 = arith.constant 0 : index
      %12 = vector.load %arg8[%c0_10, %c0_11] : memref<16x32xf32, #tpu.memory_space<vmem>>, vector<16x32xf32>
      %c0_12 = arith.constant 0 : index
      %c0_13 = arith.constant 0 : index
      %13 = vector.load %arg5[%c0_12, %c0_13] : memref<1x32xf32, #tpu.memory_space<vmem>>, vector<1x32xf32>
      %14 = vector.broadcast %13 : vector<1x32xf32> to vector<16x32xf32>
      %15 = arith.addf %12, %14 : vector<16x32xf32>
      %c0_14 = arith.constant 0 : index
      %c0_15 = arith.constant 0 : index
      %16 = vector.load %arg6[%c0_14, %c0_15] : memref<16x32xf32, #tpu.memory_space<vmem>>, vector<16x32xf32>
      %17 = arith.addf %15, %16 : vector<16x32xf32>
      %c0_16 = arith.constant 0 : index
      %c0_17 = arith.constant 0 : index
      %18 = vector.load %arg7[%c0_16, %c0_17] : memref<16x32xf32, #tpu.memory_space<vmem>>, vector<16x32xf32>
      tpu.vector_store %arg7[%c0_16, %c0_17], %17 {strides = array<i32>} : memref<16x32xf32, #tpu.memory_space<vmem>>, vector<16x32xf32>,
    } else {
    }
    return
  }
  func.func @transform_0(%arg0: i32, %arg1: i32, %arg2: i32) -> (i32, i32) {
    %c0_i32 = arith.constant 0 : i32
    return %arg0, %arg2 : i32, i32
  }
  func.func @transform_1(%arg0: i32, %arg1: i32, %arg2: i32) -> (i32, i32) {
    %c0_i32 = arith.constant 0 : i32
    return %arg2, %arg1 : i32, i32
  }
  func.func @transform_2(%arg0: i32, %arg1: i32, %arg2: i32) -> (i32, i32) {
    %c0_i32 = arith.constant 0 : i32
    %c0_i32_0 = arith.constant 0 : i32
    return %c0_i32, %arg1 : i32, i32
  }
  func.func @transform_3(%arg0: i32, %arg1: i32, %arg2: i32) -> (i32, i32) {
    %c0_i32 = arith.constant 0 : i32
    return %arg0, %arg1 : i32, i32
  }
  func.func @transform_4(%arg0: i32, %arg1: i32, %arg2: i32) -> (i32, i32) {
    %c0_i32 = arith.constant 0 : i32
    return %arg0, %arg1 : i32, i32
  }
}

module attributes {stable_mosaic.version = 11 : i64} {
  func.func @ln_matmul_kernel(%arg0: i32, %arg1: i32, %arg2: memref<16x32xf32, #tpu.memory_space<vmem>>, %arg3: memref<1x32xf32, #tpu.memory_space<vmem>>, %arg4: memref<1x32xf32, #tpu.memory_space<vmem>>, %arg5: memref<32x128xbf16, #tpu.memory_space<vmem>>, %arg6: memref<1x128xf32, #tpu.memory_space<vmem>>, %arg7: memref<16x128xbf16, #tpu.memory_space<vmem>>) attributes {dimension_semantics = [#tpu.dimension_semantics<parallel>, #tpu.dimension_semantics<parallel>], iteration_bounds = array<i64: 1, 1>, scalar_prefetch = 0 : i64, scratch_operands = 0 : i64, tpu.core_type = #tpu.core_type<tc>, window_params = [{transform_indices = @transform_0, window_bounds = array<i64: 16, 32>}, {pipeline_mode = #tpu.pipeline_mode<synchronous>, transform_indices = @transform_1, window_bounds = array<i64: 1, 32>}, {pipeline_mode = #tpu.pipeline_mode<synchronous>, transform_indices = @transform_2, window_bounds = array<i64: 1, 32>}, {transform_indices = @transform_3, window_bounds = array<i64: 32, 128>}, {transform_indices = @transform_4, window_bounds = array<i64: 1, 128>}, {transform_indices = @transform_5, window_bounds = array<i64: 16, 128>}]} {
    %c0 = arith.constant 0 : index
    %c0_0 = arith.constant 0 : index
    %0 = vector.load %arg2[%c0, %c0_0] : memref<16x32xf32, #tpu.memory_space<vmem>>, vector<16x32xf32>
    %cst = arith.constant dense<0.000000e+00> : vector<16xf32>
    %1 = vector.multi_reduction <add>, %0, %cst [1] : vector<16x32xf32> to vector<16xf32>
    %2 = vector.shape_cast %1 : vector<16xf32> to vector<16x1xf32>
    %cst_1 = arith.constant 3.200000e+01 : f32
    %3 = vector.broadcast %cst_1 : f32 to vector<16x1xf32>
    %4 = arith.divf %2, %3 : vector<16x1xf32>
    %5 = vector.broadcast %4 : vector<16x1xf32> to vector<16x32xf32>
    %6 = arith.subf %0, %5 : vector<16x32xf32>
    %7 = arith.mulf %6, %6 : vector<16x32xf32>
    %cst_2 = arith.constant dense<0.000000e+00> : vector<16xf32>
    %8 = vector.multi_reduction <add>, %7, %cst_2 [1] : vector<16x32xf32> to vector<16xf32>
    %9 = vector.shape_cast %8 : vector<16xf32> to vector<16x1xf32>
    %cst_3 = arith.constant 3.200000e+01 : f32
    %10 = vector.broadcast %cst_3 : f32 to vector<16x1xf32>
    %11 = arith.divf %9, %10 : vector<16x1xf32>
    %12 = vector.broadcast %4 : vector<16x1xf32> to vector<16x32xf32>
    %13 = arith.subf %0, %12 : vector<16x32xf32>
    %cst_4 = arith.constant 9.99999974E-6 : f32
    %14 = vector.broadcast %cst_4 : f32 to vector<16x1xf32>
    %15 = arith.addf %11, %14 : vector<16x1xf32>
    %16 = math.rsqrt %15 : vector<16x1xf32>
    %17 = vector.broadcast %16 : vector<16x1xf32> to vector<16x32xf32>
    %18 = arith.mulf %13, %17 : vector<16x32xf32>
    %c0_5 = arith.constant 0 : index
    %c0_6 = arith.constant 0 : index
    %19 = vector.load %arg3[%c0_5, %c0_6] : memref<1x32xf32, #tpu.memory_space<vmem>>, vector<1x32xf32>
    %20 = vector.broadcast %19 : vector<1x32xf32> to vector<16x32xf32>
    %21 = arith.mulf %18, %20 : vector<16x32xf32>
    %c0_7 = arith.constant 0 : index
    %c0_8 = arith.constant 0 : index
    %22 = vector.load %arg4[%c0_7, %c0_8] : memref<1x32xf32, #tpu.memory_space<vmem>>, vector<1x32xf32>
    %23 = vector.broadcast %22 : vector<1x32xf32> to vector<16x32xf32>
    %24 = arith.addf %21, %23 : vector<16x32xf32>
    %25 = arith.truncf %24 : vector<16x32xf32> to vector<16x32xbf16>
    %c0_9 = arith.constant 0 : index
    %c0_10 = arith.constant 0 : index
    %26 = vector.load %arg5[%c0_9, %c0_10] : memref<32x128xbf16, #tpu.memory_space<vmem>>, vector<32x128xbf16>
    %cst_11 = arith.constant dense<0.000000e+00> : vector<16x128xf32>
    %27 = tpu.matmul %25, %26, %cst_11 {dimension_numbers = #tpu.dot_dimension_numbers<[1], [0], [0], [1], [0, 0, 1, 1], [], []>} : vector<16x32xbf16>, vector<32x128xbf16>, vector<16x128xf32> -> vector<16x128xf32>
    %c0_12 = arith.constant 0 : index
    %c0_13 = arith.constant 0 : index
    %28 = vector.load %arg6[%c0_12, %c0_13] : memref<1x128xf32, #tpu.memory_space<vmem>>, vector<1x128xf32>
    %29 = vector.broadcast %28 : vector<1x128xf32> to vector<16x128xf32>
    %30 = arith.addf %27, %29 : vector<16x128xf32>
    %31 = arith.mulf %30, %30 : vector<16x128xf32>
    %32 = arith.mulf %30, %31 : vector<16x128xf32>
    %cst_14 = arith.constant 4.471500e-02 : f32
    %33 = vector.broadcast %cst_14 : f32 to vector<16x128xf32>
    %34 = arith.mulf %33, %32 : vector<16x128xf32>
    %35 = arith.addf %30, %34 : vector<16x128xf32>
    %cst_15 = arith.constant 0.797884583 : f32
    %36 = vector.broadcast %cst_15 : f32 to vector<16x128xf32>
    %37 = arith.mulf %36, %35 : vector<16x128xf32>
    %38 = math.tanh %37 : vector<16x128xf32>
    %cst_16 = arith.constant 1.000000e+00 : f32
    %39 = vector.broadcast %cst_16 : f32 to vector<16x128xf32>
    %40 = arith.addf %39, %38 : vector<16x128xf32>
    %cst_17 = arith.constant 5.000000e-01 : f32
    %41 = vector.broadcast %cst_17 : f32 to vector<16x128xf32>
    %42 = arith.mulf %41, %40 : vector<16x128xf32>
    %43 = arith.mulf %30, %42 : vector<16x128xf32>
    %44 = arith.truncf %43 : vector<16x128xf32> to vector<16x128xbf16>
    %c0_18 = arith.constant 0 : index
    %c0_19 = arith.constant 0 : index
    %45 = vector.load %arg7[%c0_18, %c0_19] : memref<16x128xbf16, #tpu.memory_space<vmem>>, vector<16x128xbf16>
    tpu.vector_store %arg7[%c0_18, %c0_19], %44 {strides = array<i32>} : memref<16x128xbf16, #tpu.memory_space<vmem>>, vector<16x128xbf16>,
    return
  }
  func.func @transform_0(%arg0: i32, %arg1: i32) -> (i32, i32) {
    %c0_i32 = arith.constant 0 : i32
    %c0_i32_0 = arith.constant 0 : i32
    return %arg0, %c0_i32 : i32, i32
  }
  func.func @transform_1(%arg0: i32, %arg1: i32) -> (i32, i32) {
    %c0_i32 = arith.constant 0 : i32
    %c0_i32_0 = arith.constant 0 : i32
    %c0_i32_1 = arith.constant 0 : i32
    return %c0_i32, %c0_i32_0 : i32, i32
  }
  func.func @transform_2(%arg0: i32, %arg1: i32) -> (i32, i32) {
    %c0_i32 = arith.constant 0 : i32
    %c0_i32_0 = arith.constant 0 : i32
    %c0_i32_1 = arith.constant 0 : i32
    return %c0_i32, %c0_i32_0 : i32, i32
  }
  func.func @transform_3(%arg0: i32, %arg1: i32) -> (i32, i32) {
    %c0_i32 = arith.constant 0 : i32
    %c0_i32_0 = arith.constant 0 : i32
    return %c0_i32, %arg1 : i32, i32
  }
  func.func @transform_4(%arg0: i32, %arg1: i32) -> (i32, i32) {
    %c0_i32 = arith.constant 0 : i32
    %c0_i32_0 = arith.constant 0 : i32
    return %c0_i32, %arg1 : i32, i32
  }
  func.func @transform_5(%arg0: i32, %arg1: i32) -> (i32, i32) {
    %c0_i32 = arith.constant 0 : i32
    return %arg0, %arg1 : i32, i32
  }
}

module attributes {stable_mosaic.version = 11 : i64} {
  func.func @ln_kernel(%arg0: i32, %arg1: memref<16x32xf32, #tpu.memory_space<vmem>>, %arg2: memref<1x32xf32, #tpu.memory_space<vmem>>, %arg3: memref<1x32xf32, #tpu.memory_space<vmem>>, %arg4: memref<16x32xbf16, #tpu.memory_space<vmem>>) attributes {dimension_semantics = [#tpu.dimension_semantics<parallel>], iteration_bounds = array<i64: 1>, scalar_prefetch = 0 : i64, scratch_operands = 0 : i64, tpu.core_type = #tpu.core_type<tc>, window_params = [{transform_indices = @transform_0, window_bounds = array<i64: 16, 32>}, {pipeline_mode = #tpu.pipeline_mode<synchronous>, transform_indices = @transform_1, window_bounds = array<i64: 1, 32>}, {pipeline_mode = #tpu.pipeline_mode<synchronous>, transform_indices = @transform_2, window_bounds = array<i64: 1, 32>}, {transform_indices = @transform_3, window_bounds = array<i64: 16, 32>}]} {
    %c0 = arith.constant 0 : index
    %c0_0 = arith.constant 0 : index
    %0 = vector.load %arg1[%c0, %c0_0] : memref<16x32xf32, #tpu.memory_space<vmem>>, vector<16x32xf32>
    %cst = arith.constant dense<0.000000e+00> : vector<16xf32>
    %1 = vector.multi_reduction <add>, %0, %cst [1] : vector<16x32xf32> to vector<16xf32>
    %2 = vector.shape_cast %1 : vector<16xf32> to vector<16x1xf32>
    %cst_1 = arith.constant 3.200000e+01 : f32
    %3 = vector.broadcast %cst_1 : f32 to vector<16x1xf32>
    %4 = arith.divf %2, %3 : vector<16x1xf32>
    %5 = vector.broadcast %4 : vector<16x1xf32> to vector<16x32xf32>
    %6 = arith.subf %0, %5 : vector<16x32xf32>
    %7 = arith.mulf %6, %6 : vector<16x32xf32>
    %cst_2 = arith.constant dense<0.000000e+00> : vector<16xf32>
    %8 = vector.multi_reduction <add>, %7, %cst_2 [1] : vector<16x32xf32> to vector<16xf32>
    %9 = vector.shape_cast %8 : vector<16xf32> to vector<16x1xf32>
    %cst_3 = arith.constant 3.200000e+01 : f32
    %10 = vector.broadcast %cst_3 : f32 to vector<16x1xf32>
    %11 = arith.divf %9, %10 : vector<16x1xf32>
    %12 = vector.broadcast %4 : vector<16x1xf32> to vector<16x32xf32>
    %13 = arith.subf %0, %12 : vector<16x32xf32>
    %cst_4 = arith.constant 9.99999974E-6 : f32
    %14 = vector.broadcast %cst_4 : f32 to vector<16x1xf32>
    %15 = arith.addf %11, %14 : vector<16x1xf32>
    %16 = math.rsqrt %15 : vector<16x1xf32>
    %17 = vector.broadcast %16 : vector<16x1xf32> to vector<16x32xf32>
    %18 = arith.mulf %13, %17 : vector<16x32xf32>
    %c0_5 = arith.constant 0 : index
    %c0_6 = arith.constant 0 : index
    %19 = vector.load %arg2[%c0_5, %c0_6] : memref<1x32xf32, #tpu.memory_space<vmem>>, vector<1x32xf32>
    %20 = vector.broadcast %19 : vector<1x32xf32> to vector<16x32xf32>
    %21 = arith.mulf %18, %20 : vector<16x32xf32>
    %c0_7 = arith.constant 0 : index
    %c0_8 = arith.constant 0 : index
    %22 = vector.load %arg3[%c0_7, %c0_8] : memref<1x32xf32, #tpu.memory_space<vmem>>, vector<1x32xf32>
    %23 = vector.broadcast %22 : vector<1x32xf32> to vector<16x32xf32>
    %24 = arith.addf %21, %23 : vector<16x32xf32>
    %25 = arith.truncf %24 : vector<16x32xf32> to vector<16x32xbf16>
    %c0_9 = arith.constant 0 : index
    %c0_10 = arith.constant 0 : index
    %26 = vector.load %arg4[%c0_9, %c0_10] : memref<16x32xbf16, #tpu.memory_space<vmem>>, vector<16x32xbf16>
    tpu.vector_store %arg4[%c0_9, %c0_10], %25 {strides = array<i32>} : memref<16x32xbf16, #tpu.memory_space<vmem>>, vector<16x32xbf16>,
    return
  }
  func.func @transform_0(%arg0: i32) -> (i32, i32) {
    %c0_i32 = arith.constant 0 : i32
    %c0_i32_0 = arith.constant 0 : i32
    return %arg0, %c0_i32 : i32, i32
  }
  func.func @transform_1(%arg0: i32) -> (i32, i32) {
    %c0_i32 = arith.constant 0 : i32
    %c0_i32_0 = arith.constant 0 : i32
    %c0_i32_1 = arith.constant 0 : i32
    return %c0_i32, %c0_i32_0 : i32, i32
  }
  func.func @transform_2(%arg0: i32) -> (i32, i32) {
    %c0_i32 = arith.constant 0 : i32
    %c0_i32_0 = arith.constant 0 : i32
    %c0_i32_1 = arith.constant 0 : i32
    return %c0_i32, %c0_i32_0 : i32, i32
  }
  func.func @transform_3(%arg0: i32) -> (i32, i32) {
    %c0_i32 = arith.constant 0 : i32
    %c0_i32_0 = arith.constant 0 : i32
    return %arg0, %c0_i32 : i32, i32
  }
}

module attributes {stable_mosaic.version = 11 : i64} {
  func.func @matmul_res_kernel(%arg0: i32, %arg1: i32, %arg2: i32, %arg3: memref<16x128xbf16, #tpu.memory_space<vmem>>, %arg4: memref<128x32xbf16, #tpu.memory_space<vmem>>, %arg5: memref<1x32xf32, #tpu.memory_space<vmem>>, %arg6: memref<16x32xf32, #tpu.memory_space<vmem>>, %arg7: memref<16x32xf32, #tpu.memory_space<vmem>>, %arg8: memref<16x32xf32, #tpu.memory_space<vmem>>) attributes {dimension_semantics = [#tpu.dimension_semantics<parallel>, #tpu.dimension_semantics<parallel>, #tpu.dimension_semantics<arbitrary>], iteration_bounds = array<i64: 1, 1, 1>, scalar_prefetch = 0 : i64, scratch_operands = 1 : i64, tpu.core_type = #tpu.core_type<tc>, window_params = [{transform_indices = @transform_0, window_bounds = array<i64: 16, 128>}, {transform_indices = @transform_1, window_bounds = array<i64: 128, 32>}, {transform_indices = @transform_2, window_bounds = array<i64: 1, 32>}, {transform_indices = @transform_3, window_bounds = array<i64: 16, 32>}, {transform_indices = @transform_4, window_bounds = array<i64: 16, 32>}]} {
    %c0_i32 = arith.constant 0 : i32
    %0 = arith.cmpi eq, %arg2, %c0_i32 : i32
    %1 = arith.extui %0 : i1 to i32
    %c0_i32_0 = arith.constant 0 : i32
    %2 = arith.cmpi ne, %1, %c0_i32_0 : i32
    scf.if %2 {
      %cst_10 = arith.constant 0.000000e+00 : f32
      %12 = vector.broadcast %cst_10 : f32 to vector<16x32xf32>
      %c0_11 = arith.constant 0 : index
      %c0_12 = arith.constant 0 : index
      %13 = vector.load %arg8[%c0_11, %c0_12] : memref<16x32xf32, #tpu.memory_space<vmem>>, vector<16x32xf32>
      tpu.vector_store %arg8[%c0_11, %c0_12], %12 {strides = array<i32>} : memref<16x32xf32, #tpu.memory_space<vmem>>, vector<16x32xf32>,
    } else {
    }
    %c0 = arith.constant 0 : index
    %c0_1 = arith.constant 0 : index
    %3 = vector.load %arg8[%c0, %c0_1] : memref<16x32xf32, #tpu.memory_space<vmem>>, vector<16x32xf32>
    %c0_2 = arith.constant 0 : index
    %c0_3 = arith.constant 0 : index
    %4 = vector.load %arg3[%c0_2, %c0_3] : memref<16x128xbf16, #tpu.memory_space<vmem>>, vector<16x128xbf16>
    %c0_4 = arith.constant 0 : index
    %c0_5 = arith.constant 0 : index
    %5 = vector.load %arg4[%c0_4, %c0_5] : memref<128x32xbf16, #tpu.memory_space<vmem>>, vector<128x32xbf16>
    %cst = arith.constant dense<0.000000e+00> : vector<16x32xf32>
    %6 = tpu.matmul %4, %5, %cst {dimension_numbers = #tpu.dot_dimension_numbers<[1], [0], [0], [1], [0, 0, 1, 1], [], []>} : vector<16x128xbf16>, vector<128x32xbf16>, vector<16x32xf32> -> vector<16x32xf32>
    %7 = arith.addf %3, %6 : vector<16x32xf32>
    %c0_6 = arith.constant 0 : index
    %c0_7 = arith.constant 0 : index
    %8 = vector.load %arg8[%c0_6, %c0_7] : memref<16x32xf32, #tpu.memory_space<vmem>>, vector<16x32xf32>
    tpu.vector_store %arg8[%c0_6, %c0_7], %7 {strides = array<i32>} : memref<16x32xf32, #tpu.memory_space<vmem>>, vector<16x32xf32>,
    %c0_i32_8 = arith.constant 0 : i32
    %9 = arith.cmpi eq, %arg2, %c0_i32_8 : i32
    %10 = arith.extui %9 : i1 to i32
    %c0_i32_9 = arith.constant 0 : i32
    %11 = arith.cmpi ne, %10, %c0_i32_9 : i32
    scf.if %11 {
      %c0_10 = arith.constant 0 : index
      %c0_11 = arith.constant 0 : index
      %12 = vector.load %arg8[%c0_10, %c0_11] : memref<16x32xf32, #tpu.memory_space<vmem>>, vector<16x32xf32>
      %c0_12 = arith.constant 0 : index
      %c0_13 = arith.constant 0 : index
      %13 = vector.load %arg5[%c0_12, %c0_13] : memref<1x32xf32, #tpu.memory_space<vmem>>, vector<1x32xf32>
      %14 = vector.broadcast %13 : vector<1x32xf32> to vector<16x32xf32>
      %15 = arith.addf %12, %14 : vector<16x32xf32>
      %c0_14 = arith.constant 0 : index
      %c0_15 = arith.constant 0 : index
      %16 = vector.load %arg6[%c0_14, %c0_15] : memref<16x32xf32, #tpu.memory_space<vmem>>, vector<16x32xf32>
      %17 = arith.addf %15, %16 : vector<16x32xf32>
      %c0_16 = arith.constant 0 : index
      %c0_17 = arith.constant 0 : index
      %18 = vector.load %arg7[%c0_16, %c0_17] : memref<16x32xf32, #tpu.memory_space<vmem>>, vector<16x32xf32>
      tpu.vector_store %arg7[%c0_16, %c0_17], %17 {strides = array<i32>} : memref<16x32xf32, #tpu.memory_space<vmem>>, vector<16x32xf32>,
    } else {
    }
    return
  }
  func.func @transform_0(%arg0: i32, %arg1: i32, %arg2: i32) -> (i32, i32) {
    %c0_i32 = arith.constant 0 : i32
    return %arg0, %arg2 : i32, i32
  }
  func.func @transform_1(%arg0: i32, %arg1: i32, %arg2: i32) -> (i32, i32) {
    %c0_i32 = arith.constant 0 : i32
    return %arg2, %arg1 : i32, i32
  }
  func.func @transform_2(%arg0: i32, %arg1: i32, %arg2: i32) -> (i32, i32) {
    %c0_i32 = arith.constant 0 : i32
    %c0_i32_0 = arith.constant 0 : i32
    return %c0_i32, %arg1 : i32, i32
  }
  func.func @transform_3(%arg0: i32, %arg1: i32, %arg2: i32) -> (i32, i32) {
    %c0_i32 = arith.constant 0 : i32
    return %arg0, %arg1 : i32, i32
  }
  func.func @transform_4(%arg0: i32, %arg1: i32, %arg2: i32) -> (i32, i32) {
    %c0_i32 = arith.constant 0 : i32
    return %arg0, %arg1 : i32, i32
  }
}

module attributes {stable_mosaic.version = 11 : i64} {
  func.func @lm_head_kernel(%arg0: i32, %arg1: i32, %arg2: memref<16x32xbf16, #tpu.memory_space<vmem>>, %arg3: memref<64x32xbf16, #tpu.memory_space<vmem>>, %arg4: memref<16x64xf32, #tpu.memory_space<vmem>>) attributes {dimension_semantics = [#tpu.dimension_semantics<parallel>, #tpu.dimension_semantics<parallel>], iteration_bounds = array<i64: 1, 1>, scalar_prefetch = 0 : i64, scratch_operands = 0 : i64, tpu.core_type = #tpu.core_type<tc>, window_params = [{transform_indices = @transform_0, window_bounds = array<i64: 16, 32>}, {transform_indices = @transform_1, window_bounds = array<i64: 64, 32>}, {transform_indices = @transform_2, window_bounds = array<i64: 16, 64>}]} {
    %c0 = arith.constant 0 : index
    %c0_0 = arith.constant 0 : index
    %0 = vector.load %arg2[%c0, %c0_0] : memref<16x32xbf16, #tpu.memory_space<vmem>>, vector<16x32xbf16>
    %c0_1 = arith.constant 0 : index
    %c0_2 = arith.constant 0 : index
    %1 = vector.load %arg3[%c0_1, %c0_2] : memref<64x32xbf16, #tpu.memory_space<vmem>>, vector<64x32xbf16>
    %cst = arith.constant dense<0.000000e+00> : vector<16x64xf32>
    %2 = tpu.matmul %0, %1, %cst {dimension_numbers = #tpu.dot_dimension_numbers<[1], [1], [0], [0], [0, 0, 1, 0], [], []>} : vector<16x32xbf16>, vector<64x32xbf16>, vector<16x64xf32> -> vector<16x64xf32>
    %c0_3 = arith.constant 0 : index
    %c0_4 = arith.constant 0 : index
    %3 = vector.load %arg4[%c0_3, %c0_4] : memref<16x64xf32, #tpu.memory_space<vmem>>, vector<16x64xf32>
    tpu.vector_store %arg4[%c0_3, %c0_4], %2 {strides = array<i32>} : memref<16x64xf32, #tpu.memory_space<vmem>>, vector<16x64xf32>,
    return
  }
  func.func @transform_0(%arg0: i32, %arg1: i32) -> (i32, i32) {
    %c0_i32 = arith.constant 0 : i32
    %c0_i32_0 = arith.constant 0 : i32
    return %arg1, %c0_i32 : i32, i32
  }
  func.func @transform_1(%arg0: i32, %arg1: i32) -> (i32, i32) {
    %c0_i32 = arith.constant 0 : i32
    %c0_i32_0 = arith.constant 0 : i32
    return %arg0, %c0_i32 : i32, i32
  }
  func.func @transform_2(%arg0: i32, %arg1: i32) -> (i32, i32) {
    %c0_i32 = arith.constant 0 : i32
    return %arg1, %arg0 : i32, i32
  }
}

</mosaic_0001>

<llo_original>
// kernel: gpt_forward.14
$region0: #{gpt_forward.14}
  #allocation0 [shape = 'u32[]', space=smem, size = 0x4, offset = 0x4, fixed_abs, tag = 'smem constant byte address 0x4 - core index']
  #allocation1 [shape = 'u32[144,128]{1,0:T(1,128)}', space=vmem, size = 0x12000, scoped, tag = 'internal scratch']
  #allocation2 [shape = 'f32[16,32]{1,0:T(8,128)}', space=vmem, size = 0x2000, scoped, tag = 'scratch operand']
  %s0 = inlined_call_operand.hbm [shape: bf16[16,32], index: 0, kind: input, shape index: {}]
  %s1 = inlined_call_operand.hbm [shape: bf16[32,32], index: 1, kind: input, shape index: {}]
  %s2 = inlined_call_operand.hbm [shape: f32[1,32], index: 2, kind: input, shape index: {}]
  %s3 = inlined_call_operand.hbm [shape: f32[16,32], index: 3, kind: input, shape index: {}]
  %s4 = inlined_call_operand.hbm [shape: f32[16,32], index: 4, kind: output, shape index: {}]
  %s5 = sld [smem:[#allocation0]]
  $region50: #{gpt_forward.14} parent=0
    _
  %s7 = ssub.s32 1, %s5
  %s8 = scalar_select 0, %s7, %s5
  $region1: #{gpt_forward.14} parent=0
    #allocation3 [shape = 'u8[4096]{0}', space=vmem, size = 0x1000, scoped, tag = 'input window, operand 0, single buffered']
    #allocation4 [shape = 's32[1]{0}', space=sflag, size = 0x4, scoped, tag = 'scoped memory for gpt_forward.14']
    #allocation5 [shape = 's32[1]{0}', space=sflag, size = 0x4, scoped, tag = 'scoped memory for gpt_forward.14']
    #allocation6 [shape = 'u8[8192]{0}', space=vmem, size = 0x2000, scoped, tag = 'input window, operand 1, single buffered']
    #allocation7 [shape = 's32[1]{0}', space=sflag, size = 0x4, scoped, tag = 'scoped memory for gpt_forward.14']
    #allocation8 [shape = 'u8[512]{0}', space=vmem, size = 0x400, scoped, tag = 'input window, operand 2, single buffered']
    #allocation9 [shape = 'u8[8192]{0}', space=vmem, size = 0x2000, scoped, tag = 'input window, operand 3, single buffered']
    #allocation10 [shape = 's32[1]{0}', space=sflag, size = 0x4, scoped, tag = 'scoped memory for gpt_forward.14']
    #allocation11 [shape = 'u8[8192]{0}', space=vmem, size = 0x2000, scoped, tag = 'output window, operand 0, single buffered']
    %9 = vsyncpa [#allocation4], 0
    %10 = vsyncpa [#allocation7], 0
    %11 = vsyncpa [#allocation10], 0
    %12 = vsyncpa [#allocation5], 0
    // Predicated region
    $region2: #{gpt_forward.14} parent=1 // pred_check
      _
    $region3: #{gpt_forward.14} parent=1 // pred_check_branch
      %14 = sbr.rel (0) target = $region5
    $region4: #{gpt_forward.14} parent=1 // pred_region
      %s16 = ssub.s32 128, 128
      %17 = vsyncadd [#allocation4], %s16
      %s18 = sshll.u32 [#allocation3], 4
      %s19 = int_to_ptr.vmem [resolvable:$true] %s18
      %24 = dma.hbm_to_vmem [thread:$0]  %s0, 128, %s19, [#allocation4], 64, 64, 4
    $region5: #{gpt_forward.14} parent=1 // pred_fallthru
      _
    // Predicated region
    $region6: #{gpt_forward.14} parent=1 // pred_check
      _
    $region7: #{gpt_forward.14} parent=1 // pred_check_branch
      %26 = sbr.rel (0) target = $region9
    $region8: #{gpt_forward.14} parent=1 // pred_region
      %s28 = ssub.s32 256, 256
      %29 = vsyncadd [#allocation7], %s28
      %s30 = sshll.u32 [#allocation6], 4
      %s31 = int_to_ptr.vmem [resolvable:$true] %s30
      %36 = dma.hbm_to_vmem [thread:$0]  %s1, 256, %s31, [#allocation7], 64, 64, 4
    $region9: #{gpt_forward.14} parent=1 // pred_fallthru
      _
    // Predicated region
    $region10: #{gpt_forward.14} parent=1 // pred_check
      _
    $region11: #{gpt_forward.14} parent=1 // pred_check_branch
      %38 = sbr.rel (0) target = $region13
    $region12: #{gpt_forward.14} parent=1 // pred_region
      %s40 = ssub.s32 16, 16
      %41 = vsyncadd [#allocation7], %s40
      %s43 = sshll.u32 [#allocation8], 4
      %s44 = int_to_ptr.vmem [resolvable:$true] %s43
      %46 = dma.hbm_to_vmem [thread:$0]  %s2, 16, %s44, [#allocation7]
    $region13: #{gpt_forward.14} parent=1 // pred_fallthru
      _
    // Predicated region
    $region14: #{gpt_forward.14} parent=1 // pred_check
      _
    $region15: #{gpt_forward.14} parent=1 // pred_check_branch
      %48 = sbr.rel (0) target = $region17
    $region16: #{gpt_forward.14} parent=1 // pred_region
      %s50 = ssub.s32 256, 256
      %51 = vsyncadd [#allocation10], %s50
      %s52 = sshll.u32 [#allocation9], 4
      %s53 = int_to_ptr.vmem [resolvable:$true] %s52
      %58 = dma.hbm_to_vmem [thread:$0]  %s3, 256, %s53, [#allocation10], 128, 128, 8
    $region17: #{gpt_forward.14} parent=1 // pred_fallthru
      _
    // Predicated region
    $region18: #{gpt_forward.14} parent=1 // pred_check
      _
    $region19: #{gpt_forward.14} parent=1 // pred_check_branch
      %60 = sbr.rel (0) target = $region21
    $region20: #{gpt_forward.14} parent=1 // pred_region
      %61 = dma.done [#allocation4], 128
    $region21: #{gpt_forward.14} parent=1 // pred_fallthru
      _
    // Predicated region
    $region22: #{gpt_forward.14} parent=1 // pred_check
      _
    $region23: #{gpt_forward.14} parent=1 // pred_check_branch
      %63 = sbr.rel (0) target = $region25
    $region24: #{gpt_forward.14} parent=1 // pred_region
      %64 = dma.done [#allocation7], 256
    $region25: #{gpt_forward.14} parent=1 // pred_fallthru
      _
    // Predicated region
    $region26: #{gpt_forward.14} parent=1 // pred_check
      _
    $region27: #{gpt_forward.14} parent=1 // pred_check_branch
      %66 = sbr.rel (0) target = $region29
    $region28: #{gpt_forward.14} parent=1 // pred_region
      %67 = dma.done [#allocation7], 16
    $region29: #{gpt_forward.14} parent=1 // pred_fallthru
      _
    // Predicated region
    $region30: #{gpt_forward.14} parent=1 // pred_check
      _
    $region31: #{gpt_forward.14} parent=1 // pred_check_branch
      %69 = sbr.rel (0) target = $region33
    $region32: #{gpt_forward.14} parent=1 // pred_region
      %70 = dma.done [#allocation10], 256
    $region33: #{gpt_forward.14} parent=1 // pred_fallthru
      _
    %p72 = scmp.eq.s32.totalorder 0, 0
    // Predicated region
    $region34: #{gpt_forward.14} parent=1 // pred_check
      %p73 = pneg %p72
    $region35: #{gpt_forward.14} parent=1 // pred_check_branch
      %75 = sbr.rel (%p73) target = $region37
    $region36: #{gpt_forward.14} parent=1 // pred_region
      %vm76 = vcmask 261120
      %77 = vst.msk [vmem:[#allocation2] sm:$0xff] %vm76, 0.0
      %78 = vst.msk [vmem:[#allocation2 + $0x8] sm:$0xff] %vm76, 0.0
    $region37: #{gpt_forward.14} parent=1 // pred_fallthru
      _
    %v79 = vld [vmem:[#allocation2] sm:$0xff]
    %v80 = vld [vmem:[#allocation2 + $0x8] sm:$0xff]
    %v81 = vld [vmem:[#allocation3] sm:$0xf]
    %v82 = vld [vmem:[#allocation3 + $0x4] sm:$0xf]
    %v83 = vld [vmem:[#allocation6] sm:$0xf]
    %v84 = vld [vmem:[#allocation6 + $0x4] sm:$0xf]
    %v85 = vld [vmem:[#allocation6 + $0x8] sm:$0xf]
    %v86 = vld [vmem:[#allocation6 + $0xc] sm:$0xf]
    %v89 = vunpack.c.l.b16 %v81
    %v90 = vunpack.c.l.b16 %v82
    %v91 = vpack.c.b16 %v90, %v89
    %v96 = vunpack.c.l.b16 %v83
    %v97 = vunpack.c.l.b16 %v84
    %v98 = vunpack.c.l.b16 %v85
    %v99 = vunpack.c.l.b16 %v86
    %v100 = vpack.c.b16 %v97, %v96
    %v101 = vpack.c.b16 %v99, %v98
    %vm104 = vcmask 261120
    %v106 = vsel %vm104, %v91, 0
    %108 = vmatprep.subr.bf16.mxu0 0
    %109 = vmatpush1.bf16.msra.mxu0 %v100
    %110 = vmatprep.subr.bf16.mxu0 0
    %111 = vmatpush1.bf16.msra.mxu0 %v101
    %112 = vmatprep.subr.bf16.mxu0 0
    %113 = vmatpush1.bf16.msra.mxu0 0
    %114 = vmatprep.subr.bf16.mxu0 0
    %115 = vmatpush1.bf16.msra.mxu0 0
    %116 = vmatprep.subr.bf16.mxu0 0
    %117 = vmatpush1.bf16.msra.mxu0 0
    %118 = vmatprep.subr.bf16.mxu0 0
    %119 = vmatpush1.bf16.msra.mxu0 0
    %120 = vmatprep.subr.bf16.mxu0 0
    %121 = vmatpush1.bf16.msra.mxu0 0
    %122 = vmatprep.subr.bf16.mxu0 0
    %123 = vmatpush1.bf16.msra.mxu0 0
    %124 = vmatprep.subr.bf16.mxu0 0
    %125 = vmatpush1.bf16.msra.mxu0 0
    %126 = vmatprep.subr.bf16.mxu0 0
    %127 = vmatpush1.bf16.msra.mxu0 0
    %128 = vmatprep.subr.bf16.mxu0 0
    %129 = vmatpush1.bf16.msra.mxu0 0
    %130 = vmatprep.subr.bf16.mxu0 0
    %131 = vmatpush1.bf16.msra.mxu0 0
    %132 = vmatprep.subr.bf16.mxu0 0
    %133 = vmatpush1.bf16.msra.mxu0 0
    %134 = vmatprep.subr.bf16.mxu0 0
    %135 = vmatpush1.bf16.msra.mxu0 0
    %136 = vmatprep.subr.bf16.mxu0 0
    %137 = vmatpush1.bf16.msra.mxu0 0
    %138 = vmatprep.subr.bf16.mxu0 0
    %139 = vmatpush1.bf16.msra.mxu0 0
    %140 = vmatprep.mubr.bf16.mxu0 0
    %141 = vmatmul.mubr.bf16.gmra.mrb[0].mxu0 %v106
    %v142 = vpop.f32.mrb[0].mxu0
    %v143 = vadd.f32 0.0, %v142
    %v144 = vpop.f32.mrb[0].mxu0
    %v145 = vpop.f32.mrb[0].mxu0
    %v146 = vadd.f32 0.0, %v145
    %v147 = vpop.f32.mrb[0].mxu0
    %148 = vdwg.mxu0
    %v149 = vadd.f32 %v79, %v143
    %v150 = vadd.f32 %v80, %v146
    %151 = vst.msk [vmem:[#allocation2] sm:$0xff] %vm104, %v149
    %152 = vst.msk [vmem:[#allocation2 + $0x8] sm:$0xff] %vm104, %v150
    // Predicated region
    $region38: #{gpt_forward.14} parent=1 // pred_check
      %p153 = pneg %p72
    $region39: #{gpt_forward.14} parent=1 // pred_check_branch
      %155 = sbr.rel (%p153) target = $region41
    $region40: #{gpt_forward.14} parent=1 // pred_region
      %v156 = vld [vmem:[#allocation2] sm:$0xff]
      %v157 = vld [vmem:[#allocation2 + $0x8] sm:$0xff]
      %v158 = vld [vmem:[#allocation8] sm:$0x1]
      %v160 = vlaneseq
      %v161 = vshrl.u32 %v160, 7
      %v162 = vsub.s32 0, %v161
      %v163 = vrot.slane %v158, %v162
      %v165 = vadd.f32 %v156, %v163
      %v166 = vadd.f32 %v157, %v163
      %v167 = vld [vmem:[#allocation9] sm:$0xff]
      %v168 = vld [vmem:[#allocation9 + $0x8] sm:$0xff]
      %v169 = vadd.f32 %v165, %v167
      %v170 = vadd.f32 %v166, %v168
      %171 = vst.msk [vmem:[#allocation11] sm:$0xff] %vm104, %v169
      %172 = vst.msk [vmem:[#allocation11 + $0x8] sm:$0xff] %vm104, %v170
    $region41: #{gpt_forward.14} parent=1 // pred_fallthru
      _
    // Predicated region
    $region42: #{gpt_forward.14} parent=1 // pred_check
      _
    $region43: #{gpt_forward.14} parent=1 // pred_check_branch
      %174 = sbr.rel (0) target = $region45
    $region44: #{gpt_forward.14} parent=1 // pred_region
      %s176 = ssub.s32 256, 256
      %177 = vsyncadd [#allocation5], %s176
      %s178 = sshll.u32 [#allocation11], 4
      %s179 = int_to_ptr.vmem [resolvable:$true] %s178
      %184 = dma.vmem_to_hbm [thread:$0]  %s179, 256, %s4, [#allocation5], 128, 128, 8
    $region45: #{gpt_forward.14} parent=1 // pred_fallthru
      _
    // Predicated region
    $region46: #{gpt_forward.14} parent=1 // pred_check
      _
    $region47: #{gpt_forward.14} parent=1 // pred_check_branch
      %186 = sbr.rel (0) target = $region49
    $region48: #{gpt_forward.14} parent=1 // pred_region
      %187 = dma.done [#allocation5], 256
    $region49: #{gpt_forward.14} parent=1 // pred_fallthru
      _
    %188 = vsyncpa [#allocation4], 1
    %189 = vsyncpa [#allocation7], 1
    %190 = vsyncpa [#allocation10], 1
    %191 = vsyncpa [#allocation5], 1

// kernel: gpt_forward.13
$region0: #{gpt_forward.13}
  #allocation0 [shape = 'u32[]', space=smem, size = 0x4, offset = 0x4, fixed_abs, tag = 'smem constant byte address 0x4 - core index']
  #allocation1 [shape = 'u32[144,128]{1,0:T(1,128)}', space=vmem, size = 0x12000, scoped, tag = 'internal scratch']
  #allocation2 [shape = 'f32[8,1]{1,0:T(8,128)}', space=vmem, size = 0x1000, scoped, tag = 'scratch operand']
  #allocation3 [shape = 'f32[8,1]{1,0:T(8,128)}', space=vmem, size = 0x1000, scoped, tag = 'scratch operand']
  #allocation4 [shape = 'f32[8,8]{1,0:T(8,128)}', space=vmem, size = 0x1000, scoped, tag = 'scratch operand']
  #allocation5 [shape = 's32[1]{0}', space=sflag, size = 0x4, scoped, tag = 'scoped memory for gpt_forward.13']
  #allocation6 [shape = 's32[1]{0:T(128)S(6)}', space=smem, size = 0x200, scoped, tag = 'prefetched SMEM operand 0']
  #allocation7 [shape = 's32[1]{0:T(128)S(6)}', space=smem, size = 0x200, scoped, tag = 'prefetched SMEM operand 1']
  %s0 = inlined_call_operand.<no memory space> [shape: s32[1], index: 0, kind: input, shape index: {}, may-alias: {0,1}]
  %s1 = inlined_call_operand.<no memory space> [shape: s32[1], index: 1, kind: input, shape index: {}, may-alias: {0,1}]
  %s2 = inlined_call_operand.hbm [shape: bf16[8,8,8], index: 2, kind: input, shape index: {}]
  %s3 = inlined_call_operand.hbm [shape: bf16[8,8,8], index: 3, kind: input, shape index: {}]
  %s4 = inlined_call_operand.hbm [shape: bf16[8,8,8], index: 4, kind: input, shape index: {}]
  %s5 = inlined_call_operand.hbm [shape: bf16[8,8,8], index: 5, kind: output, shape index: {}]
  %s6 = sld [smem:[#allocation0]]
  $region65: #{gpt_forward.13} parent=0
    _
  %s8 = ssub.s32 1, %s6
  %s9 = scalar_select 0, %s8, %s6
  %10 = sst [smem:[#allocation6]] %s0
  %11 = sst [smem:[#allocation7]] %s1
  $region1: #{gpt_forward.13} parent=0
    #allocation8 [shape = 'u8[4096]{0}', space=vmem, size = 0x1000, scoped, tag = 'input window, operand 2']
    #allocation9 [shape = 's32[2]{0}', space=sflag, size = 0x8, scoped, tag = 'scoped memory for gpt_forward.13']
    #allocation10 [shape = 's32[2]{0}', space=sflag, size = 0x8, scoped, tag = 'scoped memory for gpt_forward.13']
    #allocation11 [shape = 'u8[4096]{0}', space=vmem, size = 0x1000, scoped, tag = 'input window, operand 3']
    #allocation12 [shape = 's32[2]{0}', space=sflag, size = 0x8, scoped, tag = 'scoped memory for gpt_forward.13']
    #allocation13 [shape = 'u8[4096]{0}', space=vmem, size = 0x1000, scoped, tag = 'input window, operand 4']
    #allocation14 [shape = 'u8[4096]{0}', space=vmem, size = 0x1000, scoped, tag = 'output window, operand 0']
    %12 = vsyncpa [#allocation9], 0
    %s13 = scalar_lea.sflag [#allocation9], 1
    %14 = vsyncpa %s13, 0
    %15 = vsyncpa [#allocation12], 0
    %s16 = scalar_lea.sflag [#allocation12], 1
    %17 = vsyncpa %s16, 0
    %18 = vsyncpa [#allocation10], 0
    %s19 = scalar_lea.sflag [#allocation10], 1
    %20 = vsyncpa %s19, 0
    loop: start=0, step=1, limit=10
    $region2: #{gpt_forward.13} parent=1 // loop_pre_header
      _
    $region3: #{gpt_forward.13} parent=1 // loop_header
      %s22 = sphi 0, %s26
      %p23 = scmp.ge.s32.totalorder %s22, 10
      %s29 = sphi 0, %s41
      %s30 = sphi 0, %s37
      %s31 = sphi 0, %s29
      %s32 = sphi 0, %s30
      %s33 = sphi 0, %s31
      %s34 = sphi 0, %s32
      %s48 = sphi 0, %s50
      %s51 = sphi 0, %s48
      %s52 = sphi 0, %s51
      %s68 = sphi 0, %s52
      %s78 = sphi 0, %s80
      %s81 = sphi 0, %s78
      %s82 = sphi 0, %s81
      %s98 = sphi 0, %s82
      %s108 = sphi 0, %s110
      %s111 = sphi 0, %s108
      %s112 = sphi 0, %s111
      %s128 = sphi 0, %s112
      %s138 = sphi 0, %s140
      %s141 = sphi 0, %s138
      %s142 = sphi 0, %s141
      %s158 = sphi 0, %s142
    $region4: #{gpt_forward.13} parent=1 // loop_header_branch
      %25 = sbr.rel (%p23) target = $region8
    $region5: #{gpt_forward.13} parent=1 // loop_body
      %s27 = ssub.s32 %s22, 1
      %s28 = ssub.s32 %s22, 2
      %s35 = sadd.s32 1, %s30
      %p36 = scmp.ge.s32.totalorder %s35, 1
      %s37 = scalar_select %p36, 0, %s35
      %s38 = sadd.s32 1, %s29
      %s39 = scalar_select %p36, %s38, %s29
      %p40 = scmp.ge.s32.totalorder %s39, 8
      %s41 = scalar_select %p40, 0, %s39
      %s42 = sld [smem:[#allocation6 + %s30]]
      %s43 = sld [smem:[#allocation6 + %s37]]
      %s44 = ssub.s32 %s29, %s41
      %s45 = ssub.s32 %s42, %s43
      %s46 = sor.u32 %s44, %s45
      %p47 = scmp.eq.s32.totalorder %s46, 0
      %s49 = sadd.s32 %s48, 1
      %s50 = scalar_select %p47, %s48, %s49
      %p53 = pneg %p47
      %p54 = scmp.eq.s32.totalorder %s22, 7
      %p55 = por %p53, %p54
      %p56 = scmp.ne.s32.totalorder %s48, %s51
      %p57 = scmp.eq.s32.totalorder %s22, 0
      %p58 = por %p56, %p57
      %p59 = scmp.ne.s32.totalorder %s48, %s51
      %p60 = scmp.eq.s32.totalorder %s27, 7
      %p61 = por %p59, %p60
      %p62 = scmp.ne.s32.totalorder %s51, %s52
      %p63 = scmp.eq.s32.totalorder %s27, 0
      %p64 = por %p62, %p63
      %p65 = scmp.ne.s32.totalorder %s51, %s52
      %p66 = scmp.eq.s32.totalorder %s28, 7
      %p67 = por %p65, %p66
      %p69 = scmp.ne.s32.totalorder %s52, %s68
      %p70 = scmp.eq.s32.totalorder %s28, 0
      %p71 = por %p69, %p70
      %s72 = sld [smem:[#allocation7 + %s30]]
      %s73 = sld [smem:[#allocation7 + %s37]]
      %s74 = ssub.s32 %s29, %s41
      %s75 = ssub.s32 %s72, %s73
      %s76 = sor.u32 %s74, %s75
      %p77 = scmp.eq.s32.totalorder %s76, 0
      %s79 = sadd.s32 %s78, 1
      %s80 = scalar_select %p77, %s78, %s79
      %p83 = pneg %p77
      %p84 = scmp.eq.s32.totalorder %s22, 7
      %p85 = por %p83, %p84
      %p86 = scmp.ne.s32.totalorder %s78, %s81
      %p87 = scmp.eq.s32.totalorder %s22, 0
      %p88 = por %p86, %p87
      %p89 = scmp.ne.s32.totalorder %s78, %s81
      %p90 = scmp.eq.s32.totalorder %s27, 7
      %p91 = por %p89, %p90
      %p92 = scmp.ne.s32.totalorder %s81, %s82
      %p93 = scmp.eq.s32.totalorder %s27, 0
      %p94 = por %p92, %p93
      %p95 = scmp.ne.s32.totalorder %s81, %s82
      %p96 = scmp.eq.s32.totalorder %s28, 7
      %p97 = por %p95, %p96
      %p99 = scmp.ne.s32.totalorder %s82, %s98
      %p100 = scmp.eq.s32.totalorder %s28, 0
      %p101 = por %p99, %p100
      %s102 = sld [smem:[#allocation7 + %s30]]
      %s103 = sld [smem:[#allocation7 + %s37]]
      %s104 = ssub.s32 %s29, %s41
      %s105 = ssub.s32 %s102, %s103
      %s106 = sor.u32 %s104, %s105
      %p107 = scmp.eq.s32.totalorder %s106, 0
      %s109 = sadd.s32 %s108, 1
      %s110 = scalar_select %p107, %s108, %s109
      %p113 = pneg %p107
      %p114 = scmp.eq.s32.totalorder %s22, 7
      %p115 = por %p113, %p114
      %p116 = scmp.ne.s32.totalorder %s108, %s111
      %p117 = scmp.eq.s32.totalorder %s22, 0
      %p118 = por %p116, %p117
      %p119 = scmp.ne.s32.totalorder %s108, %s111
      %p120 = scmp.eq.s32.totalorder %s27, 7
      %p121 = por %p119, %p120
      %p122 = scmp.ne.s32.totalorder %s111, %s112
      %p123 = scmp.eq.s32.totalorder %s27, 0
      %p124 = por %p122, %p123
      %p125 = scmp.ne.s32.totalorder %s111, %s112
      %p126 = scmp.eq.s32.totalorder %s28, 7
      %p127 = por %p125, %p126
      %p129 = scmp.ne.s32.totalorder %s112, %s128
      %p130 = scmp.eq.s32.totalorder %s28, 0
      %p131 = por %p129, %p130
      %s132 = sld [smem:[#allocation6 + %s30]]
      %s133 = sld [smem:[#allocation6 + %s37]]
      %s134 = ssub.s32 %s29, %s41
      %s135 = ssub.s32 %s132, %s133
      %s136 = sor.u32 %s134, %s135
      %p137 = scmp.eq.s32.totalorder %s136, 0
      %s139 = sadd.s32 %s138, 1
      %s140 = scalar_select %p137, %s138, %s139
      %p143 = pneg %p137
      %p144 = scmp.eq.s32.totalorder %s22, 7
      %p145 = por %p143, %p144
      %p146 = scmp.ne.s32.totalorder %s138, %s141
      %p147 = scmp.eq.s32.totalorder %s22, 0
      %p148 = por %p146, %p147
      %p149 = scmp.ne.s32.totalorder %s138, %s141
      %p150 = scmp.eq.s32.totalorder %s27, 7
      %p151 = por %p149, %p150
      %p152 = scmp.ne.s32.totalorder %s141, %s142
      %p153 = scmp.eq.s32.totalorder %s27, 0
      %p154 = por %p152, %p153
      %p155 = scmp.ne.s32.totalorder %s141, %s142
      %p156 = scmp.eq.s32.totalorder %s28, 7
      %p157 = por %p155, %p156
      %p159 = scmp.ne.s32.totalorder %s142, %s158
      %p160 = scmp.eq.s32.totalorder %s28, 0
      %p161 = por %p159, %p160
      %p162 = scmp.le.s32.totalorder 1, %s22
      %p163 = scmp.lt.s32.totalorder %s22, 9
      %p164 = pnand %p162, %p163
      %p165 = pneg %p164
      // Predicated region
      $region9: #{gpt_forward.13} parent=5 // pred_check
        _
      $region10: #{gpt_forward.13} parent=5 // pred_check_branch
        %167 = sbr.rel (%p164) target = $region12
      $region11: #{gpt_forward.13} parent=5 // pred_region
        %s168 = ssub.s32 %s22, 1
      $region12: #{gpt_forward.13} parent=5 // pred_fallthru
        _
      %p169 = scmp.lt.s32.totalorder %s22, 8
      // Predicated region
      $region13: #{gpt_forward.13} parent=5 // pred_check
        %p170 = pneg %p169
      $region14: #{gpt_forward.13} parent=5 // pred_check_branch
        %172 = sbr.rel (%p170) target = $region16
      $region15: #{gpt_forward.13} parent=5 // pred_region
        // Predicated region
        $region17: #{gpt_forward.13} parent=15 // pred_check
          %p173 = pneg %p58
        $region18: #{gpt_forward.13} parent=15 // pred_check_branch
          %175 = sbr.rel (%p173) target = $region20
        $region19: #{gpt_forward.13} parent=15 // pred_region
          %s176 = sand.u32 %s48, 1
          %s177 = scalar_lea.sflag [#allocation9], %s176
          %s178 = sand.u32 %s48, 1
          %s179 = smul.addr %s178, 4
          %s180 = scalar_lea.vmem [#allocation8], %s179
          %s181 = sld [smem:[#allocation6 + %s30]]
          %s183 = ssub.s32 64, 64
          %184 = vsyncadd %s177, %s183
          %s185 = sadd.s32 %s181, %s29
          %s186 = smul.addr %s185, 64
          %s187 = scalar_lea.hbm %s2, %s186
          %s189 = sshll.u32 %s180, 4
          %s190 = int_to_ptr.vmem [resolvable:$true] %s189
          %192 = dma.hbm_to_vmem [thread:$0]  %s187, 64, %s190, %s177
        $region20: #{gpt_forward.13} parent=15 // pred_fallthru
          _
        // Predicated region
        $region21: #{gpt_forward.13} parent=15 // pred_check
          %p193 = pneg %p88
        $region22: #{gpt_forward.13} parent=15 // pred_check_branch
          %195 = sbr.rel (%p193) target = $region24
        $region23: #{gpt_forward.13} parent=15 // pred_region
          %s196 = sand.u32 %s22, 1
          %s197 = scalar_lea.sflag [#allocation12], %s196
          %s198 = sand.u32 %s78, 1
          %s199 = smul.addr %s198, 4
          %s200 = scalar_lea.vmem [#allocation11], %s199
          %s201 = sld [smem:[#allocation7 + %s30]]
          %s203 = ssub.s32 64, 64
          %204 = vsyncadd %s197, %s203
          %s205 = sadd.s32 %s201, %s29
          %s206 = smul.addr %s205, 64
          %s207 = scalar_lea.hbm %s3, %s206
          %s209 = sshll.u32 %s200, 4
          %s210 = int_to_ptr.vmem [resolvable:$true] %s209
          %212 = dma.hbm_to_vmem [thread:$0]  %s207, 64, %s210, %s197
        $region24: #{gpt_forward.13} parent=15 // pred_fallthru
          _
        // Predicated region
        $region25: #{gpt_forward.13} parent=15 // pred_check
          %p213 = pneg %p118
        $region26: #{gpt_forward.13} parent=15 // pred_check_branch
          %215 = sbr.rel (%p213) target = $region28
        $region27: #{gpt_forward.13} parent=15 // pred_region
          %s216 = sand.u32 %s22, 1
          %s217 = scalar_lea.sflag [#allocation12], %s216
          %s218 = sand.u32 %s108, 1
          %s219 = smul.addr %s218, 4
          %s220 = scalar_lea.vmem [#allocation13], %s219
          %s221 = sld [smem:[#allocation7 + %s30]]
          %s223 = ssub.s32 64, 64
          %224 = vsyncadd %s217, %s223
          %s225 = sadd.s32 %s221, %s29
          %s226 = smul.addr %s225, 64
          %s227 = scalar_lea.hbm %s4, %s226
          %s229 = sshll.u32 %s220, 4
          %s230 = int_to_ptr.vmem [resolvable:$true] %s229
          %232 = dma.hbm_to_vmem [thread:$0]  %s227, 64, %s230, %s217
        $region28: #{gpt_forward.13} parent=15 // pred_fallthru
          _
      $region16: #{gpt_forward.13} parent=5 // pred_fallthru
        _
      %p233 = scmp.le.s32.totalorder 1, %s22
      %p234 = scmp.lt.s32.totalorder %s22, 9
      %p235 = pnand %p233, %p234
      %p236 = pneg %p235
      // Predicated region
      $region29: #{gpt_forward.13} parent=5 // pred_check
        _
      $region30: #{gpt_forward.13} parent=5 // pred_check_branch
        %238 = sbr.rel (%p235) target = $region32
      $region31: #{gpt_forward.13} parent=5 // pred_region
        %s239 = ssub.s32 %s22, 1
        %s240 = sand.u32 %s51, 1
        %s241 = scalar_lea.sflag [#allocation9], %s240
        %s242 = sand.u32 %s51, 1
        %s243 = smul.addr %s242, 4
        %s244 = scalar_lea.vmem [#allocation8], %s243
        // Predicated region
        $region33: #{gpt_forward.13} parent=31 // pred_check
          %p245 = pneg %p64
        $region34: #{gpt_forward.13} parent=31 // pred_check_branch
          %247 = sbr.rel (%p245) target = $region36
        $region35: #{gpt_forward.13} parent=31 // pred_region
          %248 = dma.done %s241, 64
        $region36: #{gpt_forward.13} parent=31 // pred_fallthru
          _
        %s249 = sand.u32 %s27, 1
        %s250 = scalar_lea.sflag [#allocation12], %s249
        %s251 = sand.u32 %s81, 1
        %s252 = smul.addr %s251, 4
        %s253 = scalar_lea.vmem [#allocation11], %s252
        // Predicated region
        $region37: #{gpt_forward.13} parent=31 // pred_check
          %p254 = pneg %p94
        $region38: #{gpt_forward.13} parent=31 // pred_check_branch
          %256 = sbr.rel (%p254) target = $region40
        $region39: #{gpt_forward.13} parent=31 // pred_region
          %257 = dma.done %s250, 64
        $region40: #{gpt_forward.13} parent=31 // pred_fallthru
          _
        %s258 = sand.u32 %s27, 1
        %s259 = scalar_lea.sflag [#allocation12], %s258
        %s260 = sand.u32 %s111, 1
        %s261 = smul.addr %s260, 4
        %s262 = scalar_lea.vmem [#allocation13], %s261
        // Predicated region
        $region41: #{gpt_forward.13} parent=31 // pred_check
          %p263 = pneg %p124
        $region42: #{gpt_forward.13} parent=31 // pred_check_branch
          %265 = sbr.rel (%p263) target = $region44
        $region43: #{gpt_forward.13} parent=31 // pred_region
          %266 = dma.done %s259, 64
        $region44: #{gpt_forward.13} parent=31 // pred_fallthru
          _
        %s267 = sand.u32 %s51, 1
        %s268 = scalar_lea.sflag [#allocation9], %s267
        %s269 = sand.u32 %s51, 1
        %s270 = smul.addr %s269, 4
        %s271 = scalar_lea.vmem [#allocation8], %s270
        %p272 = pneg %p64
        %p273 = pneg %p61
        %s274 = sand.u32 %s27, 1
        %s275 = scalar_lea.sflag [#allocation12], %s274
        %s276 = sand.u32 %s81, 1
        %s277 = smul.addr %s276, 4
        %s278 = scalar_lea.vmem [#allocation11], %s277
        %p279 = pneg %p94
        %p280 = pneg %p91
        %s281 = sand.u32 %s27, 1
        %s282 = scalar_lea.sflag [#allocation12], %s281
        %s283 = sand.u32 %s111, 1
        %s284 = smul.addr %s283, 4
        %s285 = scalar_lea.vmem [#allocation13], %s284
        %p286 = pneg %p124
        %p287 = pneg %p121
        %p288 = pneg %p154
        %p289 = pneg %p151
        %s290 = sand.u32 %s141, 1
        %s291 = scalar_lea.sflag [#allocation10], %s290
        %s292 = sand.u32 %s141, 1
        %s293 = smul.addr %s292, 4
        %s294 = scalar_lea.vmem [#allocation14], %s293
        %s295 = sld [smem:[#allocation6 + %s32]]
        %s296 = sld [smem:[#allocation7 + %s32]]
        %s297 = sld [smem:[#allocation7 + %s32]]
        %s298 = sld [smem:[#allocation6 + %s32]]
        %s300 = sld [smem:[#allocation6 + %s32]]
        %s301 = sld [smem:[#allocation7 + %s32]]
        %p302 = scmp.eq.s32.totalorder %s301, 0
        // Predicated region
        $region45: #{gpt_forward.13} parent=31 // pred_check
          %p303 = pneg %p302
        $region46: #{gpt_forward.13} parent=31 // pred_check_branch
          %305 = sbr.rel (%p303) target = $region48
        $region47: #{gpt_forward.13} parent=31 // pred_region
          %vm306 = vcmask 7168
          %307 = vst.msk [vmem:[#allocation2] sm:$0xff] %vm306, -1e+30
          %308 = vst.msk [vmem:[#allocation3] sm:$0xff] %vm306, 0.0
          %vm309 = vcmask 64512
          %310 = vst.msk [vmem:[#allocation4] sm:$0xff] %vm309, 0.0
        $region48: #{gpt_forward.13} parent=31 // pred_fallthru
          _
        %v311 = vld [vmem:[%s244] sm:$0xf]
        %v312 = vld [vmem:[%s253] sm:$0xf]
        %v313 = vld [vmem:[%s262] sm:$0xf]
        %vm314 = vcmask 64512
        %v316 = vsel %vm314, %v311, 0
        %v319 = vsel %vm314, %v312, 0
        %321 = vmatprep.subr.bf16.mxu0 0
        %322 = vmatpush1.bf16.xpose.msra.mxu0 %v319
        %323 = vmatprep.subr.bf16.mxu0 0
        %324 = vmatpush1.bf16.xpose.msra.mxu0 0
        %325 = vmatprep.subr.bf16.mxu0 0
        %326 = vmatpush1.bf16.xpose.msra.mxu0 0
        %327 = vmatprep.subr.bf16.mxu0 0
        %328 = vmatpush1.bf16.xpose.msra.mxu0 0
        %329 = vmatprep.subr.bf16.mxu0 0
        %330 = vmatpush1.bf16.xpose.msra.mxu0 0
        %331 = vmatprep.subr.bf16.mxu0 0
        %332 = vmatpush1.bf16.xpose.msra.mxu0 0
        %333 = vmatprep.subr.bf16.mxu0 0
        %334 = vmatpush1.bf16.xpose.msra.mxu0 0
        %335 = vmatprep.subr.bf16.mxu0 0
        %336 = vmatpush1.bf16.xpose.msra.mxu0 0
        %337 = vmatprep.subr.bf16.mxu0 0
        %338 = vmatpush1.bf16.xpose.msra.mxu0 0
        %339 = vmatprep.subr.bf16.mxu0 0
        %340 = vmatpush1.bf16.xpose.msra.mxu0 0
        %341 = vmatprep.subr.bf16.mxu0 0
        %342 = vmatpush1.bf16.xpose.msra.mxu0 0
        %343 = vmatprep.subr.bf16.mxu0 0
        %344 = vmatpush1.bf16.xpose.msra.mxu0 0
        %345 = vmatprep.subr.bf16.mxu0 0
        %346 = vmatpush1.bf16.xpose.msra.mxu0 0
        %347 = vmatprep.subr.bf16.mxu0 0
        %348 = vmatpush1.bf16.xpose.msra.mxu0 0
        %349 = vmatprep.subr.bf16.mxu0 0
        %350 = vmatpush1.bf16.xpose.msra.mxu0 0
        %351 = vmatprep.subr.bf16.mxu0 0
        %352 = vmatpush1.bf16.xpose.msra.mxu0 0
        %353 = vmatprep.mubr.bf16.mxu0 0
        %354 = vmatmul.mubr.bf16.gmra.mrb[0].mxu0 %v316
        %v355 = vpop.f32.mrb[0].mxu0
        %v356 = vadd.f32 0.0, %v355
        %v357 = vpop.f32.mrb[0].mxu0
        %v358 = vpop.f32.mrb[0].mxu0
        %v359 = vpop.f32.mrb[0].mxu0
        %360 = vdwg.mxu0
        %v361 = vmul.f32 %v356, 0.35355338
        %s362 = smul.u32 %s300, 8
        %v363 = vlaneseq
        %v364 = vshrl.u32 %v363, 7
        %v365 = vstv %s362
        %v366 = vadd.s32 %v365, %v364
        %s367 = smul.u32 %s301, 8
        %v368 = vlaneseq
        %v369 = vand.u32 %v368, 127
        %v370 = vstv %s367
        %v371 = vadd.s32 %v370, %v369
        %vm372 = vcmp.le.s32.totalorder %v371, %v366
        %v373 = vsel %vm372, %v361, -1e+30
        %v374 = vld [vmem:[#allocation2] sm:$0xff]
        %v375 = vsel %vm314, %v373, -inf
        %376 = vmax.xlane.f32.xlu0 %v375
        %v377 = vpop.xlane.xlu0 %376
        %v378 = vmax.f32 %v374, %v377
        %v379 = vsub.f32 %v374, %v378
        %v380 = vmul.f32 %v379, 1.442695
        %v381 = vpow.pop %v380
        %383 = vset.pattern.permute.xlu0 0
        %384 = vperm.xlu0 %383, %v378
        %v385 = vpop.permute.xlu0 %384
        %v387 = vsub.f32 %v373, %v385
        %v388 = vmul.f32 %v387, 1.442695
        %v389 = vpow.pop %v388
        %v390 = vld [vmem:[#allocation3] sm:$0xff]
        %v391 = vmul.f32 %v381, %v390
        %v392 = vsel %vm314, %v389, 0.0
        %393 = vadd.xlane.f32.xlu0 %v392
        %v394 = vpop.xlane.xlu0 %393
        %v395 = vadd.f32 %v391, %v394
        %vm396 = vcmask 7168
        %397 = vst.msk [vmem:[#allocation3] sm:$0xff] %vm396, %v395
        %v398 = vld [vmem:[#allocation4] sm:$0xff]
        %400 = vset.pattern.permute.xlu0 0
        %401 = vperm.xlu0 %400, %v381
        %v402 = vpop.permute.xlu0 %401
        %v404 = vmul.f32 %v402, %v398
        %v405 = vpack.c.bf16 %v389, %v389
        %v407 = vsel %vm314, %v405, 0
        %vm409 = vcmask 1043456
        %v411 = vsel %vm409, %v313, 0
        %413 = vmatprep.subr.bf16.mxu0 0
        %414 = vmatpush1.bf16.msra.mxu0 %v411
        %415 = vmatprep.subr.bf16.mxu0 0
        %416 = vmatpush1.bf16.msra.mxu0 0
        %417 = vmatprep.subr.bf16.mxu0 0
        %418 = vmatpush1.bf16.msra.mxu0 0
        %419 = vmatprep.subr.bf16.mxu0 0
        %420 = vmatpush1.bf16.msra.mxu0 0
        %421 = vmatprep.subr.bf16.mxu0 0
        %422 = vmatpush1.bf16.msra.mxu0 0
        %423 = vmatprep.subr.bf16.mxu0 0
        %424 = vmatpush1.bf16.msra.mxu0 0
        %425 = vmatprep.subr.bf16.mxu0 0
        %426 = vmatpush1.bf16.msra.mxu0 0
        %427 = vmatprep.subr.bf16.mxu0 0
        %428 = vmatpush1.bf16.msra.mxu0 0
        %429 = vmatprep.subr.bf16.mxu0 0
        %430 = vmatpush1.bf16.msra.mxu0 0
        %431 = vmatprep.subr.bf16.mxu0 0
        %432 = vmatpush1.bf16.msra.mxu0 0
        %433 = vmatprep.subr.bf16.mxu0 0
        %434 = vmatpush1.bf16.msra.mxu0 0
        %435 = vmatprep.subr.bf16.mxu0 0
        %436 = vmatpush1.bf16.msra.mxu0 0
        %437 = vmatprep.subr.bf16.mxu0 0
        %438 = vmatpush1.bf16.msra.mxu0 0
        %439 = vmatprep.subr.bf16.mxu0 0
        %440 = vmatpush1.bf16.msra.mxu0 0
        %441 = vmatprep.subr.bf16.mxu0 0
        %442 = vmatpush1.bf16.msra.mxu0 0
        %443 = vmatprep.subr.bf16.mxu0 0
        %444 = vmatpush1.bf16.msra.mxu0 0
        %445 = vmatprep.mubr.bf16.mxu0 0
        %446 = vmatmul.mubr.bf16.gmra.mrb[0].mxu0 %v407
        %v447 = vpop.f32.mrb[0].mxu0
        %v448 = vadd.f32 0.0, %v447
        %v449 = vpop.f32.mrb[0].mxu0
        %v450 = vpop.f32.mrb[0].mxu0
        %v451 = vpop.f32.mrb[0].mxu0
        %452 = vdwg.mxu0
        %v453 = vadd.f32 %v404, %v448
        %454 = vst.msk [vmem:[#allocation4] sm:$0xff] %vm314, %v453
        %455 = vst.msk [vmem:[#allocation2] sm:$0xff] %vm396, %v378
        %p456 = scmp.eq.s32.totalorder %s301, %s300
        // Predicated region
        $region49: #{gpt_forward.13} parent=31 // pred_check
          %p457 = pneg %p456
        $region50: #{gpt_forward.13} parent=31 // pred_check_branch
          %459 = sbr.rel (%p457) target = $region52
        $region51: #{gpt_forward.13} parent=31 // pred_region
          %v460 = vld [vmem:[#allocation4] sm:$0xff]
          %v461 = vld [vmem:[#allocation3] sm:$0xff]
          %v462 = vrcp.pop %v461
          %464 = vset.pattern.permute.xlu0 0
          %465 = vperm.xlu0 %464, %v462
          %v466 = vpop.permute.xlu0 %465
          %v468 = vmul.f32 %v460, %v466
          %v469 = vpack.c.bf16 %v468, %v468
          %vm470 = vcmask 60416
          %471 = vst.msk [vmem:[%s294] sm:$0xf] %vm470, %v469
        $region52: #{gpt_forward.13} parent=31 // pred_fallthru
          _
        %s472 = sand.u32 %s141, 1
        %s473 = scalar_lea.sflag [#allocation10], %s472
        %s474 = sand.u32 %s141, 1
        %s475 = smul.addr %s474, 4
        %s476 = scalar_lea.vmem [#allocation14], %s475
        // Predicated region
        $region53: #{gpt_forward.13} parent=31 // pred_check
          %p477 = pneg %p151
        $region54: #{gpt_forward.13} parent=31 // pred_check_branch
          %479 = sbr.rel (%p477) target = $region56
        $region55: #{gpt_forward.13} parent=31 // pred_region
          %s480 = sld [smem:[#allocation6 + %s32]]
          %s482 = ssub.s32 64, 64
          %483 = vsyncadd %s473, %s482
          %s484 = sadd.s32 %s480, %s31
          %s485 = smul.addr %s484, 64
          %s486 = scalar_lea.hbm %s5, %s485
          %s488 = sshll.u32 %s476, 4
          %s489 = int_to_ptr.vmem [resolvable:$true] %s488
          %491 = dma.vmem_to_hbm [thread:$0]  %s489, 64, %s486, %s473
        $region56: #{gpt_forward.13} parent=31 // pred_fallthru
          _
      $region32: #{gpt_forward.13} parent=5 // pred_fallthru
        _
      %p492 = scmp.le.s32.totalorder 2, %s22
      // Predicated region
      $region57: #{gpt_forward.13} parent=5 // pred_check
        %p493 = pneg %p492
      $region58: #{gpt_forward.13} parent=5 // pred_check_branch
        %495 = sbr.rel (%p493) target = $region60
      $region59: #{gpt_forward.13} parent=5 // pred_region
        %s496 = ssub.s32 %s22, 2
        // Predicated region
        $region61: #{gpt_forward.13} parent=59 // pred_check
          %p497 = pneg %p157
        $region62: #{gpt_forward.13} parent=59 // pred_check_branch
          %499 = sbr.rel (%p497) target = $region64
        $region63: #{gpt_forward.13} parent=59 // pred_region
          %s500 = sand.u32 %s142, 1
          %s501 = scalar_lea.sflag [#allocation10], %s500
          %s502 = sand.u32 %s142, 1
          %s503 = smul.addr %s502, 4
          %s504 = scalar_lea.vmem [#allocation14], %s503
          %505 = dma.done %s501, 64
        $region64: #{gpt_forward.13} parent=59 // pred_fallthru
          _
      $region60: #{gpt_forward.13} parent=5 // pred_fallthru
        _
    $region6: #{gpt_forward.13} parent=1 // loop_footer
      %s26 = sadd.s32 1, %s22
    $region7: #{gpt_forward.13} parent=1 // loop_footer_branch
      %21 = sbr.rel target = $region3
    $region8: #{gpt_forward.13} parent=1 // loop_exit
      _
    %506 = vsyncpa [#allocation9], 1
    %s507 = scalar_lea.sflag [#allocation9], 1
    %508 = vsyncpa %s507, 1
    %509 = vsyncpa [#allocation12], 1
    %s510 = scalar_lea.sflag [#allocation12], 1
    %511 = vsyncpa %s510, 1
    %512 = vsyncpa [#allocation10], 1
    %s513 = scalar_lea.sflag [#allocation10], 1
    %514 = vsyncpa %s513, 1

// kernel: gpt_forward.12
$region0: #{gpt_forward.12}
  #allocation0 [shape = 'u32[]', space=smem, size = 0x4, offset = 0x4, fixed_abs, tag = 'smem constant byte address 0x4 - core index']
  #allocation1 [shape = 'u32[144,128]{1,0:T(1,128)}', space=vmem, size = 0x12000, scoped, tag = 'internal scratch']
  %s0 = inlined_call_operand.hbm [shape: f32[16,32], index: 0, kind: input, shape index: {}]
  %s1 = inlined_call_operand.hbm [shape: f32[1,32], index: 1, kind: input, shape index: {}]
  %s2 = inlined_call_operand.hbm [shape: f32[1,32], index: 2, kind: input, shape index: {}]
  %s3 = inlined_call_operand.hbm [shape: bf16[32,32], index: 3, kind: input, shape index: {}]
  %s4 = inlined_call_operand.hbm [shape: bf16[32,32], index: 4, kind: input, shape index: {}]
  %s5 = inlined_call_operand.hbm [shape: bf16[32,32], index: 5, kind: input, shape index: {}]
  %s6 = inlined_call_operand.hbm [shape: f32[1,32], index: 6, kind: input, shape index: {}]
  %s7 = inlined_call_operand.hbm [shape: f32[1,32], index: 7, kind: input, shape index: {}]
  %s8 = inlined_call_operand.hbm [shape: f32[1,32], index: 8, kind: input, shape index: {}]
  %s9 = inlined_call_operand.hbm [shape: bf16[16,32], index: 9, kind: output, shape index: {0}]
  %s10 = inlined_call_operand.hbm [shape: bf16[16,32], index: 10, kind: output, shape index: {1}]
  %s11 = inlined_call_operand.hbm [shape: bf16[16,32], index: 11, kind: output, shape index: {2}]
  %12 = xla_tuple %s9, %s10, %s11
  %s13 = sld [smem:[#allocation0]]
  $region98: #{gpt_forward.12} parent=0
    _
  %s15 = ssub.s32 1, %s13
  %s16 = scalar_select 0, %s15, %s13
  $region1: #{gpt_forward.12} parent=0
    #allocation2 [shape = 'u8[8192]{0}', space=vmem, size = 0x2000, scoped, tag = 'input window, operand 0, single buffered']
    #allocation3 [shape = 's32[1]{0}', space=sflag, size = 0x4, scoped, tag = 'scoped memory for gpt_forward.12']
    #allocation4 [shape = 's32[1]{0}', space=sflag, size = 0x4, scoped, tag = 'scoped memory for gpt_forward.12']
    #allocation5 [shape = 'u8[512]{0}', space=vmem, size = 0x400, scoped, tag = 'input window, operand 1, single buffered']
    #allocation6 [shape = 's32[1]{0}', space=sflag, size = 0x4, scoped, tag = 'scoped memory for gpt_forward.12']
    #allocation7 [shape = 'u8[512]{0}', space=vmem, size = 0x400, scoped, tag = 'input window, operand 2, single buffered']
    #allocation8 [shape = 'u8[8192]{0}', space=vmem, size = 0x2000, scoped, tag = 'input window, operand 3, single buffered']
    #allocation9 [shape = 's32[1]{0}', space=sflag, size = 0x4, scoped, tag = 'scoped memory for gpt_forward.12']
    #allocation10 [shape = 'u8[8192]{0}', space=vmem, size = 0x2000, scoped, tag = 'input window, operand 4, single buffered']
    #allocation11 [shape = 'u8[8192]{0}', space=vmem, size = 0x2000, scoped, tag = 'input window, operand 5, single buffered']
    #allocation12 [shape = 's32[1]{0}', space=sflag, size = 0x4, scoped, tag = 'scoped memory for gpt_forward.12']
    #allocation13 [shape = 'u8[512]{0}', space=vmem, size = 0x400, scoped, tag = 'input window, operand 6, single buffered']
    #allocation14 [shape = 'u8[512]{0}', space=vmem, size = 0x400, scoped, tag = 'input window, operand 7, single buffered']
    #allocation15 [shape = 's32[1]{0}', space=sflag, size = 0x4, scoped, tag = 'scoped memory for gpt_forward.12']
    #allocation16 [shape = 'u8[512]{0}', space=vmem, size = 0x400, scoped, tag = 'input window, operand 8, single buffered']
    #allocation17 [shape = 'u8[4096]{0}', space=vmem, size = 0x1000, scoped, tag = 'output window, operand 0, single buffered']
    #allocation18 [shape = 'u8[4096]{0}', space=vmem, size = 0x1000, scoped, tag = 'output window, operand 1, single buffered']
    #allocation19 [shape = 's32[1]{0}', space=sflag, size = 0x4, scoped, tag = 'scoped memory for gpt_forward.12']
    #allocation20 [shape = 'u8[4096]{0}', space=vmem, size = 0x1000, scoped, tag = 'output window, operand 2, single buffered']
    %17 = vsyncpa [#allocation3], 0
    %18 = vsyncpa [#allocation6], 0
    %19 = vsyncpa [#allocation9], 0
    %20 = vsyncpa [#allocation12], 0
    %21 = vsyncpa [#allocation15], 0
    %22 = vsyncpa [#allocation4], 0
    %23 = vsyncpa [#allocation19], 0
    // Predicated region
    $region2: #{gpt_forward.12} parent=1 // pred_check
      _
    $region3: #{gpt_forward.12} parent=1 // pred_check_branch
      %25 = sbr.rel (0) target = $region5
    $region4: #{gpt_forward.12} parent=1 // pred_region
      %s27 = ssub.s32 256, 256
      %28 = vsyncadd [#allocation3], %s27
      %s29 = sshll.u32 [#allocation2], 4
      %s30 = int_to_ptr.vmem [resolvable:$true] %s29
      %35 = dma.hbm_to_vmem [thread:$0]  %s0, 256, %s30, [#allocation3], 128, 128, 8
    $region5: #{gpt_forward.12} parent=1 // pred_fallthru
      _
    // Predicated region
    $region6: #{gpt_forward.12} parent=1 // pred_check
      _
    $region7: #{gpt_forward.12} parent=1 // pred_check_branch
      %37 = sbr.rel (0) target = $region9
    $region8: #{gpt_forward.12} parent=1 // pred_region
      %s39 = ssub.s32 16, 16
      %40 = vsyncadd [#allocation6], %s39
      %s42 = sshll.u32 [#allocation5], 4
      %s43 = int_to_ptr.vmem [resolvable:$true] %s42
      %45 = dma.hbm_to_vmem [thread:$0]  %s1, 16, %s43, [#allocation6]
    $region9: #{gpt_forward.12} parent=1 // pred_fallthru
      _
    // Predicated region
    $region10: #{gpt_forward.12} parent=1 // pred_check
      _
    $region11: #{gpt_forward.12} parent=1 // pred_check_branch
      %47 = sbr.rel (0) target = $region13
    $region12: #{gpt_forward.12} parent=1 // pred_region
      %s49 = ssub.s32 16, 16
      %50 = vsyncadd [#allocation6], %s49
      %s52 = sshll.u32 [#allocation7], 4
      %s53 = int_to_ptr.vmem [resolvable:$true] %s52
      %55 = dma.hbm_to_vmem [thread:$0]  %s2, 16, %s53, [#allocation6]
    $region13: #{gpt_forward.12} parent=1 // pred_fallthru
      _
    // Predicated region
    $region14: #{gpt_forward.12} parent=1 // pred_check
      _
    $region15: #{gpt_forward.12} parent=1 // pred_check_branch
      %57 = sbr.rel (0) target = $region17
    $region16: #{gpt_forward.12} parent=1 // pred_region
      %s59 = ssub.s32 256, 256
      %60 = vsyncadd [#allocation9], %s59
      %s61 = sshll.u32 [#allocation8], 4
      %s62 = int_to_ptr.vmem [resolvable:$true] %s61
      %67 = dma.hbm_to_vmem [thread:$0]  %s3, 256, %s62, [#allocation9], 64, 64, 4
    $region17: #{gpt_forward.12} parent=1 // pred_fallthru
      _
    // Predicated region
    $region18: #{gpt_forward.12} parent=1 // pred_check
      _
    $region19: #{gpt_forward.12} parent=1 // pred_check_branch
      %69 = sbr.rel (0) target = $region21
    $region20: #{gpt_forward.12} parent=1 // pred_region
      %s71 = ssub.s32 256, 256
      %72 = vsyncadd [#allocation9], %s71
      %s73 = sshll.u32 [#allocation10], 4
      %s74 = int_to_ptr.vmem [resolvable:$true] %s73
      %79 = dma.hbm_to_vmem [thread:$0]  %s4, 256, %s74, [#allocation9], 64, 64, 4
    $region21: #{gpt_forward.12} parent=1 // pred_fallthru
      _
    // Predicated region
    $region22: #{gpt_forward.12} parent=1 // pred_check
      _
    $region23: #{gpt_forward.12} parent=1 // pred_check_branch
      %81 = sbr.rel (0) target = $region25
    $region24: #{gpt_forward.12} parent=1 // pred_region
      %s83 = ssub.s32 256, 256
      %84 = vsyncadd [#allocation12], %s83
      %s85 = sshll.u32 [#allocation11], 4
      %s86 = int_to_ptr.vmem [resolvable:$true] %s85
      %91 = dma.hbm_to_vmem [thread:$0]  %s5, 256, %s86, [#allocation12], 64, 64, 4
    $region25: #{gpt_forward.12} parent=1 // pred_fallthru
      _
    // Predicated region
    $region26: #{gpt_forward.12} parent=1 // pred_check
      _
    $region27: #{gpt_forward.12} parent=1 // pred_check_branch
      %93 = sbr.rel (0) target = $region29
    $region28: #{gpt_forward.12} parent=1 // pred_region
      %s95 = ssub.s32 16, 16
      %96 = vsyncadd [#allocation12], %s95
      %s98 = sshll.u32 [#allocation13], 4
      %s99 = int_to_ptr.vmem [resolvable:$true] %s98
      %101 = dma.hbm_to_vmem [thread:$0]  %s6, 16, %s99, [#allocation12]
    $region29: #{gpt_forward.12} parent=1 // pred_fallthru
      _
    // Predicated region
    $region30: #{gpt_forward.12} parent=1 // pred_check
      _
    $region31: #{gpt_forward.12} parent=1 // pred_check_branch
      %103 = sbr.rel (0) target = $region33
    $region32: #{gpt_forward.12} parent=1 // pred_region
      %s105 = ssub.s32 16, 16
      %106 = vsyncadd [#allocation15], %s105
      %s108 = sshll.u32 [#allocation14], 4
      %s109 = int_to_ptr.vmem [resolvable:$true] %s108
      %111 = dma.hbm_to_vmem [thread:$0]  %s7, 16, %s109, [#allocation15]
    $region33: #{gpt_forward.12} parent=1 // pred_fallthru
      _
    // Predicated region
    $region34: #{gpt_forward.12} parent=1 // pred_check
      _
    $region35: #{gpt_forward.12} parent=1 // pred_check_branch
      %113 = sbr.rel (0) target = $region37
    $region36: #{gpt_forward.12} parent=1 // pred_region
      %s115 = ssub.s32 16, 16
      %116 = vsyncadd [#allocation15], %s115
      %s118 = sshll.u32 [#allocation16], 4
      %s119 = int_to_ptr.vmem [resolvable:$true] %s118
      %121 = dma.hbm_to_vmem [thread:$0]  %s8, 16, %s119, [#allocation15]
    $region37: #{gpt_forward.12} parent=1 // pred_fallthru
      _
    // Predicated region
    $region38: #{gpt_forward.12} parent=1 // pred_check
      _
    $region39: #{gpt_forward.12} parent=1 // pred_check_branch
      %123 = sbr.rel (0) target = $region41
    $region40: #{gpt_forward.12} parent=1 // pred_region
      %124 = dma.done [#allocation3], 256
    $region41: #{gpt_forward.12} parent=1 // pred_fallthru
      _
    // Predicated region
    $region42: #{gpt_forward.12} parent=1 // pred_check
      _
    $region43: #{gpt_forward.12} parent=1 // pred_check_branch
      %126 = sbr.rel (0) target = $region45
    $region44: #{gpt_forward.12} parent=1 // pred_region
      %127 = dma.done [#allocation6], 16
    $region45: #{gpt_forward.12} parent=1 // pred_fallthru
      _
    // Predicated region
    $region46: #{gpt_forward.12} parent=1 // pred_check
      _
    $region47: #{gpt_forward.12} parent=1 // pred_check_branch
      %129 = sbr.rel (0) target = $region49
    $region48: #{gpt_forward.12} parent=1 // pred_region
      %130 = dma.done [#allocation6], 16
    $region49: #{gpt_forward.12} parent=1 // pred_fallthru
      _
    // Predicated region
    $region50: #{gpt_forward.12} parent=1 // pred_check
      _
    $region51: #{gpt_forward.12} parent=1 // pred_check_branch
      %132 = sbr.rel (0) target = $region53
    $region52: #{gpt_forward.12} parent=1 // pred_region
      %133 = dma.done [#allocation9], 256
    $region53: #{gpt_forward.12} parent=1 // pred_fallthru
      _
    // Predicated region
    $region54: #{gpt_forward.12} parent=1 // pred_check
      _
    $region55: #{gpt_forward.12} parent=1 // pred_check_branch
      %135 = sbr.rel (0) target = $region57
    $region56: #{gpt_forward.12} parent=1 // pred_region
      %136 = dma.done [#allocation9], 256
    $region57: #{gpt_forward.12} parent=1 // pred_fallthru
      _
    // Predicated region
    $region58: #{gpt_forward.12} parent=1 // pred_check
      _
    $region59: #{gpt_forward.12} parent=1 // pred_check_branch
      %138 = sbr.rel (0) target = $region61
    $region60: #{gpt_forward.12} parent=1 // pred_region
      %139 = dma.done [#allocation12], 256
    $region61: #{gpt_forward.12} parent=1 // pred_fallthru
      _
    // Predicated region
    $region62: #{gpt_forward.12} parent=1 // pred_check
      _
    $region63: #{gpt_forward.12} parent=1 // pred_check_branch
      %141 = sbr.rel (0) target = $region65
    $region64: #{gpt_forward.12} parent=1 // pred_region
      %142 = dma.done [#allocation12], 16
    $region65: #{gpt_forward.12} parent=1 // pred_fallthru
      _
    // Predicated region
    $region66: #{gpt_forward.12} parent=1 // pred_check
      _
    $region67: #{gpt_forward.12} parent=1 // pred_check_branch
      %144 = sbr.rel (0) target = $region69
    $region68: #{gpt_forward.12} parent=1 // pred_region
      %145 = dma.done [#allocation15], 16
    $region69: #{gpt_forward.12} parent=1 // pred_fallthru
      _
    // Predicated region
    $region70: #{gpt_forward.12} parent=1 // pred_check
      _
    $region71: #{gpt_forward.12} parent=1 // pred_check_branch
      %147 = sbr.rel (0) target = $region73
    $region72: #{gpt_forward.12} parent=1 // pred_region
      %148 = dma.done [#allocation15], 16
    $region73: #{gpt_forward.12} parent=1 // pred_fallthru
      _
    %v150 = vld [vmem:[#allocation2] sm:$0xff]
    %v151 = vld [vmem:[#allocation2 + $0x8] sm:$0xff]
    %vm152 = vcmask 261120
    %v153 = vsel %vm152, %v150, 0.0
    %154 = vadd.xlane.f32.xlu0 %v153
    %v155 = vpop.xlane.xlu0 %154
    %v156 = vsel %vm152, %v151, 0.0
    %157 = vadd.xlane.f32.xlu0 %v156
    %v158 = vpop.xlane.xlu0 %157
    %v159 = vrcp.pop 32.0
    %v160 = vmul.f32 %v155, %v159
    %v161 = vmul.f32 %v158, %v159
    %v162 = vsub.f32 %v150, %v160
    %v163 = vsub.f32 %v151, %v161
    %v164 = vmul.f32 %v162, %v162
    %v165 = vmul.f32 %v163, %v163
    %v166 = vsel %vm152, %v164, 0.0
    %167 = vadd.xlane.f32.xlu0 %v166
    %v168 = vpop.xlane.xlu0 %167
    %v169 = vsel %vm152, %v165, 0.0
    %170 = vadd.xlane.f32.xlu0 %v169
    %v171 = vpop.xlane.xlu0 %170
    %v172 = vmul.f32 %v168, %v159
    %v173 = vmul.f32 %v171, %v159
    %v174 = vadd.f32 %v172, 1e-05
    %v175 = vadd.f32 %v173, 1e-05
    %v176 = vrsqrt.pop %v174
    %v177 = vrsqrt.pop %v175
    %v178 = vmul.f32 %v162, %v176
    %v179 = vmul.f32 %v163, %v177
    %v180 = vld [vmem:[#allocation5] sm:$0x1]
    %v182 = vlaneseq
    %v183 = vshrl.u32 %v182, 7
    %v184 = vsub.s32 0, %v183
    %v185 = vrot.slane %v180, %v184
    %v187 = vmul.f32 %v178, %v185
    %v188 = vmul.f32 %v179, %v185
    %v189 = vld [vmem:[#allocation7] sm:$0x1]
    %v191 = vlaneseq
    %v192 = vshrl.u32 %v191, 7
    %v193 = vsub.s32 0, %v192
    %v194 = vrot.slane %v189, %v193
    %v196 = vadd.f32 %v187, %v194
    %v197 = vadd.f32 %v188, %v194
    %v198 = vpack.c.bf16 %v197, %v196
    %v199 = vld [vmem:[#allocation8] sm:$0xf]
    %v200 = vld [vmem:[#allocation8 + $0x4] sm:$0xf]
    %v201 = vld [vmem:[#allocation8 + $0x8] sm:$0xf]
    %v202 = vld [vmem:[#allocation8 + $0xc] sm:$0xf]
    %v203 = vld [vmem:[#allocation13] sm:$0x1]
    %v205 = vlaneseq
    %v206 = vshrl.u32 %v205, 7
    %v207 = vsub.s32 0, %v206
    %v208 = vrot.slane %v203, %v207
    %v214 = vunpack.c.l.b16 %v199
    %v215 = vunpack.c.l.b16 %v200
    %v216 = vunpack.c.l.b16 %v201
    %v217 = vunpack.c.l.b16 %v202
    %v218 = vpack.c.b16 %v215, %v214
    %v219 = vpack.c.b16 %v217, %v216
    %v223 = vsel %vm152, %v198, 0
    %225 = vmatprep.subr.bf16.mxu0 0
    %226 = vmatpush1.bf16.msra.mxu0 %v218
    %227 = vmatprep.subr.bf16.mxu0 0
    %228 = vmatpush1.bf16.msra.mxu0 %v219
    %229 = vmatprep.subr.bf16.mxu0 0
    %230 = vmatpush1.bf16.msra.mxu0 0
    %231 = vmatprep.subr.bf16.mxu0 0
    %232 = vmatpush1.bf16.msra.mxu0 0
    %233 = vmatprep.subr.bf16.mxu0 0
    %234 = vmatpush1.bf16.msra.mxu0 0
    %235 = vmatprep.subr.bf16.mxu0 0
    %236 = vmatpush1.bf16.msra.mxu0 0
    %237 = vmatprep.subr.bf16.mxu0 0
    %238 = vmatpush1.bf16.msra.mxu0 0
    %239 = vmatprep.subr.bf16.mxu0 0
    %240 = vmatpush1.bf16.msra.mxu0 0
    %241 = vmatprep.subr.bf16.mxu0 0
    %242 = vmatpush1.bf16.msra.mxu0 0
    %243 = vmatprep.subr.bf16.mxu0 0
    %244 = vmatpush1.bf16.msra.mxu0 0
    %245 = vmatprep.subr.bf16.mxu0 0
    %246 = vmatpush1.bf16.msra.mxu0 0
    %247 = vmatprep.subr.bf16.mxu0 0
    %248 = vmatpush1.bf16.msra.mxu0 0
    %249 = vmatprep.subr.bf16.mxu0 0
    %250 = vmatpush1.bf16.msra.mxu0 0
    %251 = vmatprep.subr.bf16.mxu0 0
    %252 = vmatpush1.bf16.msra.mxu0 0
    %253 = vmatprep.subr.bf16.mxu0 0
    %254 = vmatpush1.bf16.msra.mxu0 0
    %255 = vmatprep.subr.bf16.mxu0 0
    %256 = vmatpush1.bf16.msra.mxu0 0
    %257 = vmatprep.mubr.bf16.mxu0 0
    %258 = vmatmul.mubr.bf16.gmra.mrb[0].mxu0 %v223
    %v259 = vpop.f32.mrb[0].mxu0
    %v260 = vadd.f32 %v208, %v259
    %v261 = vpop.f32.mrb[0].mxu0
    %v262 = vpop.f32.mrb[0].mxu0
    %v263 = vadd.f32 %v208, %v262
    %v264 = vpop.f32.mrb[0].mxu0
    %265 = vdwg.mxu0
    %v266 = vpack.c.bf16 %v263, %v260
    %v268 = vunpack.c.l.b16 %v266
    %v269 = vunpack.c.h.b16 %v266
    %v270 = vpack.c.b16 %v268, %v268
    %v271 = vpack.c.b16 %v269, %v269
    %vm274 = vcmask 257024
    %275 = vst.msk [vmem:[#allocation17] sm:$0xf] %vm274, %v270
    %276 = vst.msk [vmem:[#allocation17 + $0x4] sm:$0xf] %vm274, %v271
    %v277 = vld [vmem:[#allocation10] sm:$0xf]
    %v278 = vld [vmem:[#allocation10 + $0x4] sm:$0xf]
    %v279 = vld [vmem:[#allocation10 + $0x8] sm:$0xf]
    %v280 = vld [vmem:[#allocation10 + $0xc] sm:$0xf]
    %v281 = vld [vmem:[#allocation14] sm:$0x1]
    %v283 = vlaneseq
    %v284 = vshrl.u32 %v283, 7
    %v285 = vsub.s32 0, %v284
    %v286 = vrot.slane %v281, %v285
    %v292 = vunpack.c.l.b16 %v277
    %v293 = vunpack.c.l.b16 %v278
    %v294 = vunpack.c.l.b16 %v279
    %v295 = vunpack.c.l.b16 %v280
    %v296 = vpack.c.b16 %v293, %v292
    %v297 = vpack.c.b16 %v295, %v294
    %300 = vmatprep.subr.bf16.mxu0 0
    %301 = vmatpush1.bf16.msra.mxu0 %v296
    %302 = vmatprep.subr.bf16.mxu0 0
    %303 = vmatpush1.bf16.msra.mxu0 %v297
    %304 = vmatprep.subr.bf16.mxu0 0
    %305 = vmatpush1.bf16.msra.mxu0 0
    %306 = vmatprep.subr.bf16.mxu0 0
    %307 = vmatpush1.bf16.msra.mxu0 0
    %308 = vmatprep.subr.bf16.mxu0 0
    %309 = vmatpush1.bf16.msra.mxu0 0
    %310 = vmatprep.subr.bf16.mxu0 0
    %311 = vmatpush1.bf16.msra.mxu0 0
    %312 = vmatprep.subr.bf16.mxu0 0
    %313 = vmatpush1.bf16.msra.mxu0 0
    %314 = vmatprep.subr.bf16.mxu0 0
    %315 = vmatpush1.bf16.msra.mxu0 0
    %316 = vmatprep.subr.bf16.mxu0 0
    %317 = vmatpush1.bf16.msra.mxu0 0
    %318 = vmatprep.subr.bf16.mxu0 0
    %319 = vmatpush1.bf16.msra.mxu0 0
    %320 = vmatprep.subr.bf16.mxu0 0
    %321 = vmatpush1.bf16.msra.mxu0 0
    %322 = vmatprep.subr.bf16.mxu0 0
    %323 = vmatpush1.bf16.msra.mxu0 0
    %324 = vmatprep.subr.bf16.mxu0 0
    %325 = vmatpush1.bf16.msra.mxu0 0
    %326 = vmatprep.subr.bf16.mxu0 0
    %327 = vmatpush1.bf16.msra.mxu0 0
    %328 = vmatprep.subr.bf16.mxu0 0
    %329 = vmatpush1.bf16.msra.mxu0 0
    %330 = vmatprep.subr.bf16.mxu0 0
    %331 = vmatpush1.bf16.msra.mxu0 0
    %332 = vmatprep.mubr.bf16.mxu0 0
    %333 = vmatmul.mubr.bf16.gmra.mrb[0].mxu0 %v223
    %v334 = vpop.f32.mrb[0].mxu0
    %v335 = vadd.f32 %v286, %v334
    %v336 = vpop.f32.mrb[0].mxu0
    %v337 = vpop.f32.mrb[0].mxu0
    %v338 = vadd.f32 %v286, %v337
    %v339 = vpop.f32.mrb[0].mxu0
    %340 = vdwg.mxu0
    %v341 = vpack.c.bf16 %v338, %v335
    %v343 = vunpack.c.l.b16 %v341
    %v344 = vunpack.c.h.b16 %v341
    %v345 = vpack.c.b16 %v343, %v343
    %v346 = vpack.c.b16 %v344, %v344
    %349 = vst.msk [vmem:[#allocation18] sm:$0xf] %vm274, %v345
    %350 = vst.msk [vmem:[#allocation18 + $0x4] sm:$0xf] %vm274, %v346
    %v351 = vld [vmem:[#allocation11] sm:$0xf]
    %v352 = vld [vmem:[#allocation11 + $0x4] sm:$0xf]
    %v353 = vld [vmem:[#allocation11 + $0x8] sm:$0xf]
    %v354 = vld [vmem:[#allocation11 + $0xc] sm:$0xf]
    %v355 = vld [vmem:[#allocation16] sm:$0x1]
    %v357 = vlaneseq
    %v358 = vshrl.u32 %v357, 7
    %v359 = vsub.s32 0, %v358
    %v360 = vrot.slane %v355, %v359
    %v366 = vunpack.c.l.b16 %v351
    %v367 = vunpack.c.l.b16 %v352
    %v368 = vunpack.c.l.b16 %v353
    %v369 = vunpack.c.l.b16 %v354
    %v370 = vpack.c.b16 %v367, %v366
    %v371 = vpack.c.b16 %v369, %v368
    %374 = vmatprep.subr.bf16.mxu0 0
    %375 = vmatpush1.bf16.msra.mxu0 %v370
    %376 = vmatprep.subr.bf16.mxu0 0
    %377 = vmatpush1.bf16.msra.mxu0 %v371
    %378 = vmatprep.subr.bf16.mxu0 0
    %379 = vmatpush1.bf16.msra.mxu0 0
    %380 = vmatprep.subr.bf16.mxu0 0
    %381 = vmatpush1.bf16.msra.mxu0 0
    %382 = vmatprep.subr.bf16.mxu0 0
    %383 = vmatpush1.bf16.msra.mxu0 0
    %384 = vmatprep.subr.bf16.mxu0 0
    %385 = vmatpush1.bf16.msra.mxu0 0
    %386 = vmatprep.subr.bf16.mxu0 0
    %387 = vmatpush1.bf16.msra.mxu0 0
    %388 = vmatprep.subr.bf16.mxu0 0
    %389 = vmatpush1.bf16.msra.mxu0 0
    %390 = vmatprep.subr.bf16.mxu0 0
    %391 = vmatpush1.bf16.msra.mxu0 0
    %392 = vmatprep.subr.bf16.mxu0 0
    %393 = vmatpush1.bf16.msra.mxu0 0
    %394 = vmatprep.subr.bf16.mxu0 0
    %395 = vmatpush1.bf16.msra.mxu0 0
    %396 = vmatprep.subr.bf16.mxu0 0
    %397 = vmatpush1.bf16.msra.mxu0 0
    %398 = vmatprep.subr.bf16.mxu0 0
    %399 = vmatpush1.bf16.msra.mxu0 0
    %400 = vmatprep.subr.bf16.mxu0 0
    %401 = vmatpush1.bf16.msra.mxu0 0
    %402 = vmatprep.subr.bf16.mxu0 0
    %403 = vmatpush1.bf16.msra.mxu0 0
    %404 = vmatprep.subr.bf16.mxu0 0
    %405 = vmatpush1.bf16.msra.mxu0 0
    %406 = vmatprep.mubr.bf16.mxu0 0
    %407 = vmatmul.mubr.bf16.gmra.mrb[0].mxu0 %v223
    %v408 = vpop.f32.mrb[0].mxu0
    %v409 = vadd.f32 %v360, %v408
    %v410 = vpop.f32.mrb[0].mxu0
    %v411 = vpop.f32.mrb[0].mxu0
    %v412 = vadd.f32 %v360, %v411
    %v413 = vpop.f32.mrb[0].mxu0
    %414 = vdwg.mxu0
    %v415 = vpack.c.bf16 %v412, %v409
    %v417 = vunpack.c.l.b16 %v415
    %v418 = vunpack.c.h.b16 %v415
    %v419 = vpack.c.b16 %v417, %v417
    %v420 = vpack.c.b16 %v418, %v418
    %423 = vst.msk [vmem:[#allocation20] sm:$0xf] %vm274, %v419
    %424 = vst.msk [vmem:[#allocation20 + $0x4] sm:$0xf] %vm274, %v420
    // Predicated region
    $region74: #{gpt_forward.12} parent=1 // pred_check
      _
    $region75: #{gpt_forward.12} parent=1 // pred_check_branch
      %426 = sbr.rel (0) target = $region77
    $region76: #{gpt_forward.12} parent=1 // pred_region
      %s428 = ssub.s32 128, 128
      %429 = vsyncadd [#allocation4], %s428
      %s430 = sshll.u32 [#allocation17], 4
      %s431 = int_to_ptr.vmem [resolvable:$true] %s430
      %436 = dma.vmem_to_hbm [thread:$0]  %s431, 128, %s9, [#allocation4], 64, 64, 4
    $region77: #{gpt_forward.12} parent=1 // pred_fallthru
      _
    // Predicated region
    $region78: #{gpt_forward.12} parent=1 // pred_check
      _
    $region79: #{gpt_forward.12} parent=1 // pred_check_branch
      %438 = sbr.rel (0) target = $region81
    $region80: #{gpt_forward.12} parent=1 // pred_region
      %s440 = ssub.s32 128, 128
      %441 = vsyncadd [#allocation19], %s440
      %s442 = sshll.u32 [#allocation18], 4
      %s443 = int_to_ptr.vmem [resolvable:$true] %s442
      %448 = dma.vmem_to_hbm [thread:$0]  %s443, 128, %s10, [#allocation19], 64, 64, 4
    $region81: #{gpt_forward.12} parent=1 // pred_fallthru
      _
    // Predicated region
    $region82: #{gpt_forward.12} parent=1 // pred_check
      _
    $region83: #{gpt_forward.12} parent=1 // pred_check_branch
      %450 = sbr.rel (0) target = $region85
    $region84: #{gpt_forward.12} parent=1 // pred_region
      %s452 = ssub.s32 128, 128
      %453 = vsyncadd [#allocation19], %s452
      %s454 = sshll.u32 [#allocation20], 4
      %s455 = int_to_ptr.vmem [resolvable:$true] %s454
      %460 = dma.vmem_to_hbm [thread:$0]  %s455, 128, %s11, [#allocation19], 64, 64, 4
    $region85: #{gpt_forward.12} parent=1 // pred_fallthru
      _
    // Predicated region
    $region86: #{gpt_forward.12} parent=1 // pred_check
      _
    $region87: #{gpt_forward.12} parent=1 // pred_check_branch
      %462 = sbr.rel (0) target = $region89
    $region88: #{gpt_forward.12} parent=1 // pred_region
      %463 = dma.done [#allocation4], 128
    $region89: #{gpt_forward.12} parent=1 // pred_fallthru
      _
    // Predicated region
    $region90: #{gpt_forward.12} parent=1 // pred_check
      _
    $region91: #{gpt_forward.12} parent=1 // pred_check_branch
      %465 = sbr.rel (0) target = $region93
    $region92: #{gpt_forward.12} parent=1 // pred_region
      %466 = dma.done [#allocation19], 128
    $region93: #{gpt_forward.12} parent=1 // pred_fallthru
      _
    // Predicated region
    $region94: #{gpt_forward.12} parent=1 // pred_check
      _
    $region95: #{gpt_forward.12} parent=1 // pred_check_branch
      %468 = sbr.rel (0) target = $region97
    $region96: #{gpt_forward.12} parent=1 // pred_region
      %469 = dma.done [#allocation19], 128
    $region97: #{gpt_forward.12} parent=1 // pred_fallthru
      _
    %470 = vsyncpa [#allocation3], 1
    %471 = vsyncpa [#allocation6], 1
    %472 = vsyncpa [#allocation9], 1
    %473 = vsyncpa [#allocation12], 1
    %474 = vsyncpa [#allocation15], 1
    %475 = vsyncpa [#allocation4], 1
    %476 = vsyncpa [#allocation19], 1

// kernel: gpt_forward.15
$region0: #{gpt_forward.15}
  #allocation0 [shape = 'u32[]', space=smem, size = 0x4, offset = 0x4, fixed_abs, tag = 'smem constant byte address 0x4 - core index']
  #allocation1 [shape = 'u32[144,128]{1,0:T(1,128)}', space=vmem, size = 0x12000, scoped, tag = 'internal scratch']
  %s0 = inlined_call_operand.hbm [shape: f32[16,32], index: 0, kind: input, shape index: {}]
  %s1 = inlined_call_operand.hbm [shape: f32[1,32], index: 1, kind: input, shape index: {}]
  %s2 = inlined_call_operand.hbm [shape: f32[1,32], index: 2, kind: input, shape index: {}]
  %s3 = inlined_call_operand.hbm [shape: bf16[32,128], index: 3, kind: input, shape index: {}]
  %s4 = inlined_call_operand.hbm [shape: f32[1,128], index: 4, kind: input, shape index: {}]
  %s5 = inlined_call_operand.hbm [shape: bf16[16,128], index: 5, kind: output, shape index: {}]
  %s6 = sld [smem:[#allocation0]]
  $region50: #{gpt_forward.15} parent=0
    _
  %s8 = ssub.s32 1, %s6
  %s9 = scalar_select 0, %s8, %s6
  $region1: #{gpt_forward.15} parent=0
    #allocation2 [shape = 'u8[8192]{0}', space=vmem, size = 0x2000, scoped, tag = 'input window, operand 0, single buffered']
    #allocation3 [shape = 's32[1]{0}', space=sflag, size = 0x4, scoped, tag = 'scoped memory for gpt_forward.15']
    #allocation4 [shape = 's32[1]{0}', space=sflag, size = 0x4, scoped, tag = 'scoped memory for gpt_forward.15']
    #allocation5 [shape = 'u8[512]{0}', space=vmem, size = 0x400, scoped, tag = 'input window, operand 1, single buffered']
    #allocation6 [shape = 's32[1]{0}', space=sflag, size = 0x4, scoped, tag = 'scoped memory for gpt_forward.15']
    #allocation7 [shape = 'u8[512]{0}', space=vmem, size = 0x400, scoped, tag = 'input window, operand 2, single buffered']
    #allocation8 [shape = 'u8[8192]{0}', space=vmem, size = 0x2000, scoped, tag = 'input window, operand 3, single buffered']
    #allocation9 [shape = 's32[1]{0}', space=sflag, size = 0x4, scoped, tag = 'scoped memory for gpt_forward.15']
    #allocation10 [shape = 'u8[512]{0}', space=vmem, size = 0x400, scoped, tag = 'input window, operand 4, single buffered']
    #allocation11 [shape = 'u8[4096]{0}', space=vmem, size = 0x1000, scoped, tag = 'output window, operand 0, single buffered']
    %10 = vsyncpa [#allocation3], 0
    %11 = vsyncpa [#allocation6], 0
    %12 = vsyncpa [#allocation9], 0
    %13 = vsyncpa [#allocation4], 0
    // Predicated region
    $region2: #{gpt_forward.15} parent=1 // pred_check
      _
    $region3: #{gpt_forward.15} parent=1 // pred_check_branch
      %15 = sbr.rel (0) target = $region5
    $region4: #{gpt_forward.15} parent=1 // pred_region
      %s17 = ssub.s32 256, 256
      %18 = vsyncadd [#allocation3], %s17
      %s19 = sshll.u32 [#allocation2], 4
      %s20 = int_to_ptr.vmem [resolvable:$true] %s19
      %25 = dma.hbm_to_vmem [thread:$0]  %s0, 256, %s20, [#allocation3], 128, 128, 8
    $region5: #{gpt_forward.15} parent=1 // pred_fallthru
      _
    // Predicated region
    $region6: #{gpt_forward.15} parent=1 // pred_check
      _
    $region7: #{gpt_forward.15} parent=1 // pred_check_branch
      %27 = sbr.rel (0) target = $region9
    $region8: #{gpt_forward.15} parent=1 // pred_region
      %s29 = ssub.s32 16, 16
      %30 = vsyncadd [#allocation6], %s29
      %s32 = sshll.u32 [#allocation5], 4
      %s33 = int_to_ptr.vmem [resolvable:$true] %s32
      %35 = dma.hbm_to_vmem [thread:$0]  %s1, 16, %s33, [#allocation6]
    $region9: #{gpt_forward.15} parent=1 // pred_fallthru
      _
    // Predicated region
    $region10: #{gpt_forward.15} parent=1 // pred_check
      _
    $region11: #{gpt_forward.15} parent=1 // pred_check_branch
      %37 = sbr.rel (0) target = $region13
    $region12: #{gpt_forward.15} parent=1 // pred_region
      %s39 = ssub.s32 16, 16
      %40 = vsyncadd [#allocation6], %s39
      %s42 = sshll.u32 [#allocation7], 4
      %s43 = int_to_ptr.vmem [resolvable:$true] %s42
      %45 = dma.hbm_to_vmem [thread:$0]  %s2, 16, %s43, [#allocation6]
    $region13: #{gpt_forward.15} parent=1 // pred_fallthru
      _
    // Predicated region
    $region14: #{gpt_forward.15} parent=1 // pred_check
      _
    $region15: #{gpt_forward.15} parent=1 // pred_check_branch
      %47 = sbr.rel (0) target = $region17
    $region16: #{gpt_forward.15} parent=1 // pred_region
      %s49 = ssub.s32 256, 256
      %50 = vsyncadd [#allocation9], %s49
      %s51 = sshll.u32 [#allocation8], 4
      %s52 = int_to_ptr.vmem [resolvable:$true] %s51
      %57 = dma.hbm_to_vmem [thread:$0]  %s3, 256, %s52, [#allocation9], 64, 64, 4
    $region17: #{gpt_forward.15} parent=1 // pred_fallthru
      _
    // Predicated region
    $region18: #{gpt_forward.15} parent=1 // pred_check
      _
    $region19: #{gpt_forward.15} parent=1 // pred_check_branch
      %59 = sbr.rel (0) target = $region21
    $region20: #{gpt_forward.15} parent=1 // pred_region
      %s61 = ssub.s32 16, 16
      %62 = vsyncadd [#allocation9], %s61
      %s64 = sshll.u32 [#allocation10], 4
      %s65 = int_to_ptr.vmem [resolvable:$true] %s64
      %67 = dma.hbm_to_vmem [thread:$0]  %s4, 16, %s65, [#allocation9]
    $region21: #{gpt_forward.15} parent=1 // pred_fallthru
      _
    // Predicated region
    $region22: #{gpt_forward.15} parent=1 // pred_check
      _
    $region23: #{gpt_forward.15} parent=1 // pred_check_branch
      %69 = sbr.rel (0) target = $region25
    $region24: #{gpt_forward.15} parent=1 // pred_region
      %70 = dma.done [#allocation3], 256
    $region25: #{gpt_forward.15} parent=1 // pred_fallthru
      _
    // Predicated region
    $region26: #{gpt_forward.15} parent=1 // pred_check
      _
    $region27: #{gpt_forward.15} parent=1 // pred_check_branch
      %72 = sbr.rel (0) target = $region29
    $region28: #{gpt_forward.15} parent=1 // pred_region
      %73 = dma.done [#allocation6], 16
    $region29: #{gpt_forward.15} parent=1 // pred_fallthru
      _
    // Predicated region
    $region30: #{gpt_forward.15} parent=1 // pred_check
      _
    $region31: #{gpt_forward.15} parent=1 // pred_check_branch
      %75 = sbr.rel (0) target = $region33
    $region32: #{gpt_forward.15} parent=1 // pred_region
      %76 = dma.done [#allocation6], 16
    $region33: #{gpt_forward.15} parent=1 // pred_fallthru
      _
    // Predicated region
    $region34: #{gpt_forward.15} parent=1 // pred_check
      _
    $region35: #{gpt_forward.15} parent=1 // pred_check_branch
      %78 = sbr.rel (0) target = $region37
    $region36: #{gpt_forward.15} parent=1 // pred_region
      %79 = dma.done [#allocation9], 256
    $region37: #{gpt_forward.15} parent=1 // pred_fallthru
      _
    // Predicated region
    $region38: #{gpt_forward.15} parent=1 // pred_check
      _
    $region39: #{gpt_forward.15} parent=1 // pred_check_branch
      %81 = sbr.rel (0) target = $region41
    $region40: #{gpt_forward.15} parent=1 // pred_region
      %82 = dma.done [#allocation9], 16
    $region41: #{gpt_forward.15} parent=1 // pred_fallthru
      _
    %v84 = vld [vmem:[#allocation2] sm:$0xff]
    %v85 = vld [vmem:[#allocation2 + $0x8] sm:$0xff]
    %vm86 = vcmask 261120
    %v87 = vsel %vm86, %v84, 0.0
    %88 = vadd.xlane.f32.xlu0 %v87
    %v89 = vpop.xlane.xlu0 %88
    %v90 = vsel %vm86, %v85, 0.0
    %91 = vadd.xlane.f32.xlu0 %v90
    %v92 = vpop.xlane.xlu0 %91
    %v93 = vrcp.pop 32.0
    %v94 = vmul.f32 %v89, %v93
    %v95 = vmul.f32 %v92, %v93
    %v96 = vsub.f32 %v84, %v94
    %v97 = vsub.f32 %v85, %v95
    %v98 = vmul.f32 %v96, %v96
    %v99 = vmul.f32 %v97, %v97
    %v100 = vsel %vm86, %v98, 0.0
    %101 = vadd.xlane.f32.xlu0 %v100
    %v102 = vpop.xlane.xlu0 %101
    %v103 = vsel %vm86, %v99, 0.0
    %104 = vadd.xlane.f32.xlu0 %v103
    %v105 = vpop.xlane.xlu0 %104
    %v106 = vmul.f32 %v102, %v93
    %v107 = vmul.f32 %v105, %v93
    %v108 = vadd.f32 %v106, 1e-05
    %v109 = vadd.f32 %v107, 1e-05
    %v110 = vrsqrt.pop %v108
    %v111 = vrsqrt.pop %v109
    %v112 = vmul.f32 %v96, %v110
    %v113 = vmul.f32 %v97, %v111
    %v114 = vld [vmem:[#allocation5] sm:$0x1]
    %v116 = vlaneseq
    %v117 = vshrl.u32 %v116, 7
    %v118 = vsub.s32 0, %v117
    %v119 = vrot.slane %v114, %v118
    %v121 = vmul.f32 %v112, %v119
    %v122 = vmul.f32 %v113, %v119
    %v123 = vld [vmem:[#allocation7] sm:$0x1]
    %v125 = vlaneseq
    %v126 = vshrl.u32 %v125, 7
    %v127 = vsub.s32 0, %v126
    %v128 = vrot.slane %v123, %v127
    %v130 = vadd.f32 %v121, %v128
    %v131 = vadd.f32 %v122, %v128
    %v132 = vpack.c.bf16 %v131, %v130
    %v133 = vld [vmem:[#allocation8] sm:$0xf]
    %v134 = vld [vmem:[#allocation8 + $0x4] sm:$0xf]
    %v135 = vld [vmem:[#allocation8 + $0x8] sm:$0xf]
    %v136 = vld [vmem:[#allocation8 + $0xc] sm:$0xf]
    %v137 = vld [vmem:[#allocation10] sm:$0x1]
    %v139 = vlaneseq
    %v140 = vshrl.u32 %v139, 7
    %v141 = vsub.s32 0, %v140
    %v142 = vrot.slane %v137, %v141
    %v148 = vunpack.c.l.b16 %v133
    %v149 = vunpack.c.l.b16 %v134
    %v150 = vunpack.c.l.b16 %v135
    %v151 = vunpack.c.l.b16 %v136
    %v152 = vpack.c.b16 %v149, %v148
    %v153 = vpack.c.b16 %v151, %v150
    %v157 = vsel %vm86, %v132, 0
    %159 = vmatprep.subr.bf16.mxu0 0
    %160 = vmatpush1.bf16.msra.mxu0 %v152
    %161 = vmatprep.subr.bf16.mxu0 0
    %162 = vmatpush1.bf16.msra.mxu0 %v153
    %163 = vmatprep.subr.bf16.mxu0 0
    %164 = vmatpush1.bf16.msra.mxu0 0
    %165 = vmatprep.subr.bf16.mxu0 0
    %166 = vmatpush1.bf16.msra.mxu0 0
    %167 = vmatprep.subr.bf16.mxu0 0
    %168 = vmatpush1.bf16.msra.mxu0 0
    %169 = vmatprep.subr.bf16.mxu0 0
    %170 = vmatpush1.bf16.msra.mxu0 0
    %171 = vmatprep.subr.bf16.mxu0 0
    %172 = vmatpush1.bf16.msra.mxu0 0
    %173 = vmatprep.subr.bf16.mxu0 0
    %174 = vmatpush1.bf16.msra.mxu0 0
    %175 = vmatprep.subr.bf16.mxu0 0
    %176 = vmatpush1.bf16.msra.mxu0 0
    %177 = vmatprep.subr.bf16.mxu0 0
    %178 = vmatpush1.bf16.msra.mxu0 0
    %179 = vmatprep.subr.bf16.mxu0 0
    %180 = vmatpush1.bf16.msra.mxu0 0
    %181 = vmatprep.subr.bf16.mxu0 0
    %182 = vmatpush1.bf16.msra.mxu0 0
    %183 = vmatprep.subr.bf16.mxu0 0
    %184 = vmatpush1.bf16.msra.mxu0 0
    %185 = vmatprep.subr.bf16.mxu0 0
    %186 = vmatpush1.bf16.msra.mxu0 0
    %187 = vmatprep.subr.bf16.mxu0 0
    %188 = vmatpush1.bf16.msra.mxu0 0
    %189 = vmatprep.subr.bf16.mxu0 0
    %190 = vmatpush1.bf16.msra.mxu0 0
    %191 = vmatprep.mubr.bf16.mxu0 0
    %192 = vmatmul.mubr.bf16.gmra.mrb[0].mxu0 %v157
    %v193 = vpop.f32.mrb[0].mxu0
    %v194 = vadd.f32 %v142, %v193
    %v195 = vpop.f32.mrb[0].mxu0
    %v196 = vpop.f32.mrb[0].mxu0
    %v197 = vadd.f32 %v142, %v196
    %v198 = vpop.f32.mrb[0].mxu0
    %199 = vdwg.mxu0
    %v200 = vmul.f32 %v194, %v194
    %v201 = vmul.f32 %v197, %v197
    %v202 = vmul.f32 %v194, %v200
    %v203 = vmul.f32 %v197, %v201
    %v204 = vmul.f32 %v202, 0.044715
    %v205 = vmul.f32 %v203, 0.044715
    %v206 = vadd.f32 %v194, %v204
    %v207 = vadd.f32 %v197, %v205
    %v208 = vmul.f32 %v206, 0.7978846
    %v209 = vmul.f32 %v207, 0.7978846
    %v210 = vtanh.pop %v208
    %v211 = vtanh.pop %v209
    %v212 = vadd.f32 %v210, 1.0
    %v213 = vadd.f32 %v211, 1.0
    %v214 = vmul.f32 %v212, 0.5
    %v215 = vmul.f32 %v213, 0.5
    %v216 = vmul.f32 %v194, %v214
    %v217 = vmul.f32 %v197, %v215
    %v218 = vpack.c.bf16 %v217, %v216
    %v220 = vunpack.c.l.b16 %v218
    %v221 = vunpack.c.h.b16 %v218
    %v222 = vpack.c.b16 %v220, %v220
    %v223 = vpack.c.b16 %v221, %v221
    %226 = vst [vmem:[#allocation11] sm:$0xf] %v222
    %227 = vst [vmem:[#allocation11 + $0x4] sm:$0xf] %v223
    // Predicated region
    $region42: #{gpt_forward.15} parent=1 // pred_check
      _
    $region43: #{gpt_forward.15} parent=1 // pred_check_branch
      %229 = sbr.rel (0) target = $region45
    $region44: #{gpt_forward.15} parent=1 // pred_region
      %s231 = ssub.s32 128, 128
      %232 = vsyncadd [#allocation4], %s231
      %s233 = sshll.u32 [#allocation11], 4
      %s234 = int_to_ptr.vmem [resolvable:$true] %s233
      %239 = dma.vmem_to_hbm [thread:$0]  %s234, 128, %s5, [#allocation4], 64, 64, 4
    $region45: #{gpt_forward.15} parent=1 // pred_fallthru
      _
    // Predicated region
    $region46: #{gpt_forward.15} parent=1 // pred_check
      _
    $region47: #{gpt_forward.15} parent=1 // pred_check_branch
      %241 = sbr.rel (0) target = $region49
    $region48: #{gpt_forward.15} parent=1 // pred_region
      %242 = dma.done [#allocation4], 128
    $region49: #{gpt_forward.15} parent=1 // pred_fallthru
      _
    %243 = vsyncpa [#allocation3], 1
    %244 = vsyncpa [#allocation6], 1
    %245 = vsyncpa [#allocation9], 1
    %246 = vsyncpa [#allocation4], 1

// kernel: gpt_forward.22
$region0: #{gpt_forward.22}
  #allocation0 [shape = 'u32[]', space=smem, size = 0x4, offset = 0x4, fixed_abs, tag = 'smem constant byte address 0x4 - core index']
  #allocation1 [shape = 'u32[144,128]{1,0:T(1,128)}', space=vmem, size = 0x12000, scoped, tag = 'internal scratch']
  %s0 = inlined_call_operand.hbm [shape: f32[16,32], index: 0, kind: input, shape index: {}]
  %s1 = inlined_call_operand.hbm [shape: f32[1,32], index: 1, kind: input, shape index: {}]
  %s2 = inlined_call_operand.hbm [shape: f32[1,32], index: 2, kind: input, shape index: {}]
  %s3 = inlined_call_operand.hbm [shape: bf16[16,32], index: 3, kind: output, shape index: {}]
  %s4 = sld [smem:[#allocation0]]
  $region34: #{gpt_forward.22} parent=0
    _
  %s6 = ssub.s32 1, %s4
  %s7 = scalar_select 0, %s6, %s4
  $region1: #{gpt_forward.22} parent=0
    #allocation2 [shape = 'u8[8192]{0}', space=vmem, size = 0x2000, scoped, tag = 'input window, operand 0, single buffered']
    #allocation3 [shape = 's32[1]{0}', space=sflag, size = 0x4, scoped, tag = 'scoped memory for gpt_forward.22']
    #allocation4 [shape = 's32[1]{0}', space=sflag, size = 0x4, scoped, tag = 'scoped memory for gpt_forward.22']
    #allocation5 [shape = 'u8[512]{0}', space=vmem, size = 0x400, scoped, tag = 'input window, operand 1, single buffered']
    #allocation6 [shape = 's32[1]{0}', space=sflag, size = 0x4, scoped, tag = 'scoped memory for gpt_forward.22']
    #allocation7 [shape = 'u8[512]{0}', space=vmem, size = 0x400, scoped, tag = 'input window, operand 2, single buffered']
    #allocation8 [shape = 'u8[4096]{0}', space=vmem, size = 0x1000, scoped, tag = 'output window, operand 0, single buffered']
    %8 = vsyncpa [#allocation3], 0
    %9 = vsyncpa [#allocation6], 0
    %10 = vsyncpa [#allocation4], 0
    // Predicated region
    $region2: #{gpt_forward.22} parent=1 // pred_check
      _
    $region3: #{gpt_forward.22} parent=1 // pred_check_branch
      %12 = sbr.rel (0) target = $region5
    $region4: #{gpt_forward.22} parent=1 // pred_region
      %s14 = ssub.s32 256, 256
      %15 = vsyncadd [#allocation3], %s14
      %s16 = sshll.u32 [#allocation2], 4
      %s17 = int_to_ptr.vmem [resolvable:$true] %s16
      %22 = dma.hbm_to_vmem [thread:$0]  %s0, 256, %s17, [#allocation3], 128, 128, 8
    $region5: #{gpt_forward.22} parent=1 // pred_fallthru
      _
    // Predicated region
    $region6: #{gpt_forward.22} parent=1 // pred_check
      _
    $region7: #{gpt_forward.22} parent=1 // pred_check_branch
      %24 = sbr.rel (0) target = $region9
    $region8: #{gpt_forward.22} parent=1 // pred_region
      %s26 = ssub.s32 16, 16
      %27 = vsyncadd [#allocation6], %s26
      %s29 = sshll.u32 [#allocation5], 4
      %s30 = int_to_ptr.vmem [resolvable:$true] %s29
      %32 = dma.hbm_to_vmem [thread:$0]  %s1, 16, %s30, [#allocation6]
    $region9: #{gpt_forward.22} parent=1 // pred_fallthru
      _
    // Predicated region
    $region10: #{gpt_forward.22} parent=1 // pred_check
      _
    $region11: #{gpt_forward.22} parent=1 // pred_check_branch
      %34 = sbr.rel (0) target = $region13
    $region12: #{gpt_forward.22} parent=1 // pred_region
      %s36 = ssub.s32 16, 16
      %37 = vsyncadd [#allocation6], %s36
      %s39 = sshll.u32 [#allocation7], 4
      %s40 = int_to_ptr.vmem [resolvable:$true] %s39
      %42 = dma.hbm_to_vmem [thread:$0]  %s2, 16, %s40, [#allocation6]
    $region13: #{gpt_forward.22} parent=1 // pred_fallthru
      _
    // Predicated region
    $region14: #{gpt_forward.22} parent=1 // pred_check
      _
    $region15: #{gpt_forward.22} parent=1 // pred_check_branch
      %44 = sbr.rel (0) target = $region17
    $region16: #{gpt_forward.22} parent=1 // pred_region
      %45 = dma.done [#allocation3], 256
    $region17: #{gpt_forward.22} parent=1 // pred_fallthru
      _
    // Predicated region
    $region18: #{gpt_forward.22} parent=1 // pred_check
      _
    $region19: #{gpt_forward.22} parent=1 // pred_check_branch
      %47 = sbr.rel (0) target = $region21
    $region20: #{gpt_forward.22} parent=1 // pred_region
      %48 = dma.done [#allocation6], 16
    $region21: #{gpt_forward.22} parent=1 // pred_fallthru
      _
    // Predicated region
    $region22: #{gpt_forward.22} parent=1 // pred_check
      _
    $region23: #{gpt_forward.22} parent=1 // pred_check_branch
      %50 = sbr.rel (0) target = $region25
    $region24: #{gpt_forward.22} parent=1 // pred_region
      %51 = dma.done [#allocation6], 16
    $region25: #{gpt_forward.22} parent=1 // pred_fallthru
      _
    %v52 = vld [vmem:[#allocation2] sm:$0xff]
    %v53 = vld [vmem:[#allocation2 + $0x8] sm:$0xff]
    %vm54 = vcmask 261120
    %v55 = vsel %vm54, %v52, 0.0
    %56 = vadd.xlane.f32.xlu0 %v55
    %v57 = vpop.xlane.xlu0 %56
    %v58 = vsel %vm54, %v53, 0.0
    %59 = vadd.xlane.f32.xlu0 %v58
    %v60 = vpop.xlane.xlu0 %59
    %v61 = vrcp.pop 32.0
    %v62 = vmul.f32 %v57, %v61
    %v63 = vmul.f32 %v60, %v61
    %v64 = vsub.f32 %v52, %v62
    %v65 = vsub.f32 %v53, %v63
    %v66 = vmul.f32 %v64, %v64
    %v67 = vmul.f32 %v65, %v65
    %v68 = vsel %vm54, %v66, 0.0
    %69 = vadd.xlane.f32.xlu0 %v68
    %v70 = vpop.xlane.xlu0 %69
    %v71 = vsel %vm54, %v67, 0.0
    %72 = vadd.xlane.f32.xlu0 %v71
    %v73 = vpop.xlane.xlu0 %72
    %v74 = vmul.f32 %v70, %v61
    %v75 = vmul.f32 %v73, %v61
    %v76 = vadd.f32 %v74, 1e-05
    %v77 = vadd.f32 %v75, 1e-05
    %v78 = vrsqrt.pop %v76
    %v79 = vrsqrt.pop %v77
    %v80 = vmul.f32 %v64, %v78
    %v81 = vmul.f32 %v65, %v79
    %v82 = vld [vmem:[#allocation5] sm:$0x1]
    %v84 = vlaneseq
    %v85 = vshrl.u32 %v84, 7
    %v86 = vsub.s32 0, %v85
    %v87 = vrot.slane %v82, %v86
    %v89 = vmul.f32 %v80, %v87
    %v90 = vmul.f32 %v81, %v87
    %v91 = vld [vmem:[#allocation7] sm:$0x1]
    %v93 = vlaneseq
    %v94 = vshrl.u32 %v93, 7
    %v95 = vsub.s32 0, %v94
    %v96 = vrot.slane %v91, %v95
    %v98 = vadd.f32 %v89, %v96
    %v99 = vadd.f32 %v90, %v96
    %v100 = vpack.c.bf16 %v99, %v98
    %v102 = vunpack.c.l.b16 %v100
    %v103 = vunpack.c.h.b16 %v100
    %v104 = vpack.c.b16 %v102, %v102
    %v105 = vpack.c.b16 %v103, %v103
    %vm108 = vcmask 257024
    %109 = vst.msk [vmem:[#allocation8] sm:$0xf] %vm108, %v104
    %110 = vst.msk [vmem:[#allocation8 + $0x4] sm:$0xf] %vm108, %v105
    // Predicated region
    $region26: #{gpt_forward.22} parent=1 // pred_check
      _
    $region27: #{gpt_forward.22} parent=1 // pred_check_branch
      %112 = sbr.rel (0) target = $region29
    $region28: #{gpt_forward.22} parent=1 // pred_region
      %s114 = ssub.s32 128, 128
      %115 = vsyncadd [#allocation4], %s114
      %s116 = sshll.u32 [#allocation8], 4
      %s117 = int_to_ptr.vmem [resolvable:$true] %s116
      %122 = dma.vmem_to_hbm [thread:$0]  %s117, 128, %s3, [#allocation4], 64, 64, 4
    $region29: #{gpt_forward.22} parent=1 // pred_fallthru
      _
    // Predicated region
    $region30: #{gpt_forward.22} parent=1 // pred_check
      _
    $region31: #{gpt_forward.22} parent=1 // pred_check_branch
      %124 = sbr.rel (0) target = $region33
    $region32: #{gpt_forward.22} parent=1 // pred_region
      %125 = dma.done [#allocation4], 128
    $region33: #{gpt_forward.22} parent=1 // pred_fallthru
      _
    %126 = vsyncpa [#allocation3], 1
    %127 = vsyncpa [#allocation6], 1
    %128 = vsyncpa [#allocation4], 1

// kernel: gpt_forward.23
$region0: #{gpt_forward.23}
  #allocation0 [shape = 'u32[]', space=smem, size = 0x4, offset = 0x4, fixed_abs, tag = 'smem constant byte address 0x4 - core index']
  #allocation1 [shape = 'u32[144,128]{1,0:T(1,128)}', space=vmem, size = 0x12000, scoped, tag = 'internal scratch']
  %s0 = inlined_call_operand.hbm [shape: bf16[16,32], index: 0, kind: input, shape index: {}]
  %s1 = inlined_call_operand.hbm [shape: bf16[64,32], index: 1, kind: input, shape index: {}]
  %s2 = inlined_call_operand.hbm [shape: f32[16,64], index: 2, kind: output, shape index: {}]
  %s3 = sld [smem:[#allocation0]]
  $region26: #{gpt_forward.23} parent=0
    _
  %s5 = ssub.s32 1, %s3
  %s6 = scalar_select 0, %s5, %s3
  $region1: #{gpt_forward.23} parent=0
    #allocation2 [shape = 'u8[4096]{0}', space=vmem, size = 0x1000, scoped, tag = 'input window, operand 0, single buffered']
    #allocation3 [shape = 's32[1]{0}', space=sflag, size = 0x4, scoped, tag = 'scoped memory for gpt_forward.23']
    #allocation4 [shape = 's32[1]{0}', space=sflag, size = 0x4, scoped, tag = 'scoped memory for gpt_forward.23']
    #allocation5 [shape = 'u8[16384]{0}', space=vmem, size = 0x4000, scoped, tag = 'input window, operand 1, single buffered']
    #allocation6 [shape = 's32[1]{0}', space=sflag, size = 0x4, scoped, tag = 'scoped memory for gpt_forward.23']
    #allocation7 [shape = 'u8[8192]{0}', space=vmem, size = 0x2000, scoped, tag = 'output window, operand 0, single buffered']
    %7 = vsyncpa [#allocation3], 0
    %8 = vsyncpa [#allocation6], 0
    %9 = vsyncpa [#allocation4], 0
    // Predicated region
    $region2: #{gpt_forward.23} parent=1 // pred_check
      _
    $region3: #{gpt_forward.23} parent=1 // pred_check_branch
      %11 = sbr.rel (0) target = $region5
    $region4: #{gpt_forward.23} parent=1 // pred_region
      %s13 = ssub.s32 128, 128
      %14 = vsyncadd [#allocation3], %s13
      %s15 = sshll.u32 [#allocation2], 4
      %s16 = int_to_ptr.vmem [resolvable:$true] %s15
      %21 = dma.hbm_to_vmem [thread:$0]  %s0, 128, %s16, [#allocation3], 64, 64, 4
    $region5: #{gpt_forward.23} parent=1 // pred_fallthru
      _
    // Predicated region
    $region6: #{gpt_forward.23} parent=1 // pred_check
      _
    $region7: #{gpt_forward.23} parent=1 // pred_check_branch
      %23 = sbr.rel (0) target = $region9
    $region8: #{gpt_forward.23} parent=1 // pred_region
      %s25 = ssub.s32 512, 512
      %26 = vsyncadd [#allocation6], %s25
      %s27 = sshll.u32 [#allocation5], 4
      %s28 = int_to_ptr.vmem [resolvable:$true] %s27
      %33 = dma.hbm_to_vmem [thread:$0]  %s1, 512, %s28, [#allocation6], 64, 64, 4
    $region9: #{gpt_forward.23} parent=1 // pred_fallthru
      _
    // Predicated region
    $region10: #{gpt_forward.23} parent=1 // pred_check
      _
    $region11: #{gpt_forward.23} parent=1 // pred_check_branch
      %35 = sbr.rel (0) target = $region13
    $region12: #{gpt_forward.23} parent=1 // pred_region
      %36 = dma.done [#allocation3], 128
    $region13: #{gpt_forward.23} parent=1 // pred_fallthru
      _
    // Predicated region
    $region14: #{gpt_forward.23} parent=1 // pred_check
      _
    $region15: #{gpt_forward.23} parent=1 // pred_check_branch
      %38 = sbr.rel (0) target = $region17
    $region16: #{gpt_forward.23} parent=1 // pred_region
      %39 = dma.done [#allocation6], 512
    $region17: #{gpt_forward.23} parent=1 // pred_fallthru
      _
    %v41 = vld [vmem:[#allocation2] sm:$0xf]
    %v42 = vld [vmem:[#allocation2 + $0x4] sm:$0xf]
    %v43 = vld [vmem:[#allocation5] sm:$0xf]
    %v44 = vld [vmem:[#allocation5 + $0x4] sm:$0xf]
    %v45 = vld [vmem:[#allocation5 + $0x8] sm:$0xf]
    %v46 = vld [vmem:[#allocation5 + $0xc] sm:$0xf]
    %v47 = vld [vmem:[#allocation5 + $0x10] sm:$0xf]
    %v48 = vld [vmem:[#allocation5 + $0x14] sm:$0xf]
    %v49 = vld [vmem:[#allocation5 + $0x18] sm:$0xf]
    %v50 = vld [vmem:[#allocation5 + $0x1c] sm:$0xf]
    %v53 = vunpack.c.l.b16 %v41
    %v54 = vunpack.c.l.b16 %v42
    %v55 = vpack.c.b16 %v54, %v53
    %v64 = vunpack.c.l.b16 %v43
    %v65 = vunpack.c.l.b16 %v44
    %v66 = vunpack.c.l.b16 %v45
    %v67 = vunpack.c.l.b16 %v46
    %v68 = vunpack.c.l.b16 %v47
    %v69 = vunpack.c.l.b16 %v48
    %v70 = vunpack.c.l.b16 %v49
    %v71 = vunpack.c.l.b16 %v50
    %v72 = vpack.c.b16 %v65, %v64
    %v73 = vpack.c.b16 %v67, %v66
    %v74 = vpack.c.b16 %v69, %v68
    %v75 = vpack.c.b16 %v71, %v70
    %vm76 = vcmask 261120
    %v78 = vsel %vm76, %v55, 0
    %v81 = vsel %vm76, %v72, 0
    %v84 = vsel %vm76, %v73, 0
    %v87 = vsel %vm76, %v74, 0
    %v90 = vsel %vm76, %v75, 0
    %92 = vmatprep.subr.bf16.mxu0 0
    %93 = vmatpush1.bf16.xpose.msra.mxu0 %v81
    %94 = vmatprep.subr.bf16.mxu0 0
    %95 = vmatpush1.bf16.xpose.msra.mxu0 %v84
    %96 = vmatprep.subr.bf16.mxu0 0
    %97 = vmatpush1.bf16.xpose.msra.mxu0 %v87
    %98 = vmatprep.subr.bf16.mxu0 0
    %99 = vmatpush1.bf16.xpose.msra.mxu0 %v90
    %100 = vmatprep.subr.bf16.mxu0 0
    %101 = vmatpush1.bf16.xpose.msra.mxu0 0
    %102 = vmatprep.subr.bf16.mxu0 0
    %103 = vmatpush1.bf16.xpose.msra.mxu0 0
    %104 = vmatprep.subr.bf16.mxu0 0
    %105 = vmatpush1.bf16.xpose.msra.mxu0 0
    %106 = vmatprep.subr.bf16.mxu0 0
    %107 = vmatpush1.bf16.xpose.msra.mxu0 0
    %108 = vmatprep.subr.bf16.mxu0 0
    %109 = vmatpush1.bf16.xpose.msra.mxu0 0
    %110 = vmatprep.subr.bf16.mxu0 0
    %111 = vmatpush1.bf16.xpose.msra.mxu0 0
    %112 = vmatprep.subr.bf16.mxu0 0
    %113 = vmatpush1.bf16.xpose.msra.mxu0 0
    %114 = vmatprep.subr.bf16.mxu0 0
    %115 = vmatpush1.bf16.xpose.msra.mxu0 0
    %116 = vmatprep.subr.bf16.mxu0 0
    %117 = vmatpush1.bf16.xpose.msra.mxu0 0
    %118 = vmatprep.subr.bf16.mxu0 0
    %119 = vmatpush1.bf16.xpose.msra.mxu0 0
    %120 = vmatprep.subr.bf16.mxu0 0
    %121 = vmatpush1.bf16.xpose.msra.mxu0 0
    %122 = vmatprep.subr.bf16.mxu0 0
    %123 = vmatpush1.bf16.xpose.msra.mxu0 0
    %124 = vmatprep.mubr.bf16.mxu0 0
    %125 = vmatmul.mubr.bf16.gmra.mrb[0].mxu0 %v78
    %v126 = vpop.f32.mrb[0].mxu0
    %v127 = vadd.f32 0.0, %v126
    %v128 = vpop.f32.mrb[0].mxu0
    %v129 = vpop.f32.mrb[0].mxu0
    %v130 = vadd.f32 0.0, %v129
    %v131 = vpop.f32.mrb[0].mxu0
    %132 = vdwg.mxu0
    %vm133 = vcmask 523264
    %134 = vst.msk [vmem:[#allocation7] sm:$0xff] %vm133, %v127
    %135 = vst.msk [vmem:[#allocation7 + $0x8] sm:$0xff] %vm133, %v130
    // Predicated region
    $region18: #{gpt_forward.23} parent=1 // pred_check
      _
    $region19: #{gpt_forward.23} parent=1 // pred_check_branch
      %137 = sbr.rel (0) target = $region21
    $region20: #{gpt_forward.23} parent=1 // pred_region
      %s139 = ssub.s32 256, 256
      %140 = vsyncadd [#allocation4], %s139
      %s141 = sshll.u32 [#allocation7], 4
      %s142 = int_to_ptr.vmem [resolvable:$true] %s141
      %147 = dma.vmem_to_hbm [thread:$0]  %s142, 256, %s2, [#allocation4], 128, 128, 8
    $region21: #{gpt_forward.23} parent=1 // pred_fallthru
      _
    // Predicated region
    $region22: #{gpt_forward.23} parent=1 // pred_check
      _
    $region23: #{gpt_forward.23} parent=1 // pred_check_branch
      %149 = sbr.rel (0) target = $region25
    $region24: #{gpt_forward.23} parent=1 // pred_region
      %150 = dma.done [#allocation4], 256
    $region25: #{gpt_forward.23} parent=1 // pred_fallthru
      _
    %151 = vsyncpa [#allocation3], 1
    %152 = vsyncpa [#allocation6], 1
    %153 = vsyncpa [#allocation4], 1

// kernel: gpt_forward.16
$region0: #{gpt_forward.16}
  #allocation0 [shape = 'u32[]', space=smem, size = 0x4, offset = 0x4, fixed_abs, tag = 'smem constant byte address 0x4 - core index']
  #allocation1 [shape = 'u32[144,128]{1,0:T(1,128)}', space=vmem, size = 0x12000, scoped, tag = 'internal scratch']
  #allocation2 [shape = 'f32[16,32]{1,0:T(8,128)}', space=vmem, size = 0x2000, scoped, tag = 'scratch operand']
  %s0 = inlined_call_operand.hbm [shape: bf16[16,128], index: 0, kind: input, shape index: {}]
  %s1 = inlined_call_operand.hbm [shape: bf16[128,32], index: 1, kind: input, shape index: {}]
  %s2 = inlined_call_operand.hbm [shape: f32[1,32], index: 2, kind: input, shape index: {}]
  %s3 = inlined_call_operand.hbm [shape: f32[16,32], index: 3, kind: input, shape index: {}]
  %s4 = inlined_call_operand.hbm [shape: f32[16,32], index: 4, kind: output, shape index: {}]
  %s5 = sld [smem:[#allocation0]]
  $region50: #{gpt_forward.16} parent=0
    _
  %s7 = ssub.s32 1, %s5
  %s8 = scalar_select 0, %s7, %s5
  $region1: #{gpt_forward.16} parent=0
    #allocation3 [shape = 'u8[4096]{0}', space=vmem, size = 0x1000, scoped, tag = 'input window, operand 0, single buffered']
    #allocation4 [shape = 's32[1]{0}', space=sflag, size = 0x4, scoped, tag = 'scoped memory for gpt_forward.16']
    #allocation5 [shape = 's32[1]{0}', space=sflag, size = 0x4, scoped, tag = 'scoped memory for gpt_forward.16']
    #allocation6 [shape = 'u8[32768]{0}', space=vmem, size = 0x8000, scoped, tag = 'input window, operand 1, single buffered']
    #allocation7 [shape = 's32[1]{0}', space=sflag, size = 0x4, scoped, tag = 'scoped memory for gpt_forward.16']
    #allocation8 [shape = 'u8[512]{0}', space=vmem, size = 0x400, scoped, tag = 'input window, operand 2, single buffered']
    #allocation9 [shape = 'u8[8192]{0}', space=vmem, size = 0x2000, scoped, tag = 'input window, operand 3, single buffered']
    #allocation10 [shape = 's32[1]{0}', space=sflag, size = 0x4, scoped, tag = 'scoped memory for gpt_forward.16']
    #allocation11 [shape = 'u8[8192]{0}', space=vmem, size = 0x2000, scoped, tag = 'output window, operand 0, single buffered']
    %9 = vsyncpa [#allocation4], 0
    %10 = vsyncpa [#allocation7], 0
    %11 = vsyncpa [#allocation10], 0
    %12 = vsyncpa [#allocation5], 0
    // Predicated region
    $region2: #{gpt_forward.16} parent=1 // pred_check
      _
    $region3: #{gpt_forward.16} parent=1 // pred_check_branch
      %14 = sbr.rel (0) target = $region5
    $region4: #{gpt_forward.16} parent=1 // pred_region
      %s16 = ssub.s32 128, 128
      %17 = vsyncadd [#allocation4], %s16
      %s18 = sshll.u32 [#allocation3], 4
      %s19 = int_to_ptr.vmem [resolvable:$true] %s18
      %24 = dma.hbm_to_vmem [thread:$0]  %s0, 128, %s19, [#allocation4], 64, 64, 4
    $region5: #{gpt_forward.16} parent=1 // pred_fallthru
      _
    // Predicated region
    $region6: #{gpt_forward.16} parent=1 // pred_check
      _
    $region7: #{gpt_forward.16} parent=1 // pred_check_branch
      %26 = sbr.rel (0) target = $region9
    $region8: #{gpt_forward.16} parent=1 // pred_region
      %s28 = ssub.s32 1024, 1024
      %29 = vsyncadd [#allocation7], %s28
      %s30 = sshll.u32 [#allocation6], 4
      %s31 = int_to_ptr.vmem [resolvable:$true] %s30
      %36 = dma.hbm_to_vmem [thread:$0]  %s1, 1024, %s31, [#allocation7], 64, 64, 4
    $region9: #{gpt_forward.16} parent=1 // pred_fallthru
      _
    // Predicated region
    $region10: #{gpt_forward.16} parent=1 // pred_check
      _
    $region11: #{gpt_forward.16} parent=1 // pred_check_branch
      %38 = sbr.rel (0) target = $region13
    $region12: #{gpt_forward.16} parent=1 // pred_region
      %s40 = ssub.s32 16, 16
      %41 = vsyncadd [#allocation7], %s40
      %s43 = sshll.u32 [#allocation8], 4
      %s44 = int_to_ptr.vmem [resolvable:$true] %s43
      %46 = dma.hbm_to_vmem [thread:$0]  %s2, 16, %s44, [#allocation7]
    $region13: #{gpt_forward.16} parent=1 // pred_fallthru
      _
    // Predicated region
    $region14: #{gpt_forward.16} parent=1 // pred_check
      _
    $region15: #{gpt_forward.16} parent=1 // pred_check_branch
      %48 = sbr.rel (0) target = $region17
    $region16: #{gpt_forward.16} parent=1 // pred_region
      %s50 = ssub.s32 256, 256
      %51 = vsyncadd [#allocation10], %s50
      %s52 = sshll.u32 [#allocation9], 4
      %s53 = int_to_ptr.vmem [resolvable:$true] %s52
      %58 = dma.hbm_to_vmem [thread:$0]  %s3, 256, %s53, [#allocation10], 128, 128, 8
    $region17: #{gpt_forward.16} parent=1 // pred_fallthru
      _
    // Predicated region
    $region18: #{gpt_forward.16} parent=1 // pred_check
      _
    $region19: #{gpt_forward.16} parent=1 // pred_check_branch
      %60 = sbr.rel (0) target = $region21
    $region20: #{gpt_forward.16} parent=1 // pred_region
      %61 = dma.done [#allocation4], 128
    $region21: #{gpt_forward.16} parent=1 // pred_fallthru
      _
    // Predicated region
    $region22: #{gpt_forward.16} parent=1 // pred_check
      _
    $region23: #{gpt_forward.16} parent=1 // pred_check_branch
      %63 = sbr.rel (0) target = $region25
    $region24: #{gpt_forward.16} parent=1 // pred_region
      %64 = dma.done [#allocation7], 1024
    $region25: #{gpt_forward.16} parent=1 // pred_fallthru
      _
    // Predicated region
    $region26: #{gpt_forward.16} parent=1 // pred_check
      _
    $region27: #{gpt_forward.16} parent=1 // pred_check_branch
      %66 = sbr.rel (0) target = $region29
    $region28: #{gpt_forward.16} parent=1 // pred_region
      %67 = dma.done [#allocation7], 16
    $region29: #{gpt_forward.16} parent=1 // pred_fallthru
      _
    // Predicated region
    $region30: #{gpt_forward.16} parent=1 // pred_check
      _
    $region31: #{gpt_forward.16} parent=1 // pred_check_branch
      %69 = sbr.rel (0) target = $region33
    $region32: #{gpt_forward.16} parent=1 // pred_region
      %70 = dma.done [#allocation10], 256
    $region33: #{gpt_forward.16} parent=1 // pred_fallthru
      _
    %p72 = scmp.eq.s32.totalorder 0, 0
    // Predicated region
    $region34: #{gpt_forward.16} parent=1 // pred_check
      %p73 = pneg %p72
    $region35: #{gpt_forward.16} parent=1 // pred_check_branch
      %75 = sbr.rel (%p73) target = $region37
    $region36: #{gpt_forward.16} parent=1 // pred_region
      %vm76 = vcmask 261120
      %77 = vst.msk [vmem:[#allocation2] sm:$0xff] %vm76, 0.0
      %78 = vst.msk [vmem:[#allocation2 + $0x8] sm:$0xff] %vm76, 0.0
    $region37: #{gpt_forward.16} parent=1 // pred_fallthru
      _
    %v79 = vld [vmem:[#allocation2] sm:$0xff]
    %v80 = vld [vmem:[#allocation2 + $0x8] sm:$0xff]
    %v81 = vld [vmem:[#allocation3] sm:$0xf]
    %v82 = vld [vmem:[#allocation3 + $0x4] sm:$0xf]
    %v83 = vld [vmem:[#allocation6] sm:$0xf]
    %v84 = vld [vmem:[#allocation6 + $0x4] sm:$0xf]
    %v85 = vld [vmem:[#allocation6 + $0x8] sm:$0xf]
    %v86 = vld [vmem:[#allocation6 + $0xc] sm:$0xf]
    %v87 = vld [vmem:[#allocation6 + $0x10] sm:$0xf]
    %v88 = vld [vmem:[#allocation6 + $0x14] sm:$0xf]
    %v89 = vld [vmem:[#allocation6 + $0x18] sm:$0xf]
    %v90 = vld [vmem:[#allocation6 + $0x1c] sm:$0xf]
    %v91 = vld [vmem:[#allocation6 + $0x20] sm:$0xf]
    %v92 = vld [vmem:[#allocation6 + $0x24] sm:$0xf]
    %v93 = vld [vmem:[#allocation6 + $0x28] sm:$0xf]
    %v94 = vld [vmem:[#allocation6 + $0x2c] sm:$0xf]
    %v95 = vld [vmem:[#allocation6 + $0x30] sm:$0xf]
    %v96 = vld [vmem:[#allocation6 + $0x34] sm:$0xf]
    %v97 = vld [vmem:[#allocation6 + $0x38] sm:$0xf]
    %v98 = vld [vmem:[#allocation6 + $0x3c] sm:$0xf]
    %v101 = vunpack.c.l.b16 %v81
    %v102 = vunpack.c.l.b16 %v82
    %v103 = vpack.c.b16 %v102, %v101
    %v121 = vunpack.c.l.b16 %v83
    %v122 = vunpack.c.l.b16 %v84
    %v123 = vunpack.c.l.b16 %v85
    %v124 = vunpack.c.l.b16 %v86
    %v125 = vunpack.c.l.b16 %v87
    %v126 = vunpack.c.l.b16 %v88
    %v127 = vunpack.c.l.b16 %v89
    %v128 = vunpack.c.l.b16 %v90
    %v129 = vunpack.c.l.b16 %v91
    %v130 = vunpack.c.l.b16 %v92
    %v131 = vunpack.c.l.b16 %v93
    %v132 = vunpack.c.l.b16 %v94
    %v133 = vunpack.c.l.b16 %v95
    %v134 = vunpack.c.l.b16 %v96
    %v135 = vunpack.c.l.b16 %v97
    %v136 = vunpack.c.l.b16 %v98
    %v137 = vpack.c.b16 %v122, %v121
    %v138 = vpack.c.b16 %v124, %v123
    %v139 = vpack.c.b16 %v126, %v125
    %v140 = vpack.c.b16 %v128, %v127
    %v141 = vpack.c.b16 %v130, %v129
    %v142 = vpack.c.b16 %v132, %v131
    %v143 = vpack.c.b16 %v134, %v133
    %v144 = vpack.c.b16 %v136, %v135
    %153 = vmatprep.subr.bf16.mxu0 0
    %154 = vmatpush1.bf16.msra.mxu0 %v137
    %155 = vmatprep.subr.bf16.mxu0 0
    %156 = vmatpush1.bf16.msra.mxu0 %v138
    %157 = vmatprep.subr.bf16.mxu0 0
    %158 = vmatpush1.bf16.msra.mxu0 %v139
    %159 = vmatprep.subr.bf16.mxu0 0
    %160 = vmatpush1.bf16.msra.mxu0 %v140
    %161 = vmatprep.subr.bf16.mxu0 0
    %162 = vmatpush1.bf16.msra.mxu0 %v141
    %163 = vmatprep.subr.bf16.mxu0 0
    %164 = vmatpush1.bf16.msra.mxu0 %v142
    %165 = vmatprep.subr.bf16.mxu0 0
    %166 = vmatpush1.bf16.msra.mxu0 %v143
    %167 = vmatprep.subr.bf16.mxu0 0
    %168 = vmatpush1.bf16.msra.mxu0 %v144
    %169 = vmatprep.subr.bf16.mxu0 0
    %170 = vmatpush1.bf16.msra.mxu0 0
    %171 = vmatprep.subr.bf16.mxu0 0
    %172 = vmatpush1.bf16.msra.mxu0 0
    %173 = vmatprep.subr.bf16.mxu0 0
    %174 = vmatpush1.bf16.msra.mxu0 0
    %175 = vmatprep.subr.bf16.mxu0 0
    %176 = vmatpush1.bf16.msra.mxu0 0
    %177 = vmatprep.subr.bf16.mxu0 0
    %178 = vmatpush1.bf16.msra.mxu0 0
    %179 = vmatprep.subr.bf16.mxu0 0
    %180 = vmatpush1.bf16.msra.mxu0 0
    %181 = vmatprep.subr.bf16.mxu0 0
    %182 = vmatpush1.bf16.msra.mxu0 0
    %183 = vmatprep.subr.bf16.mxu0 0
    %184 = vmatpush1.bf16.msra.mxu0 0
    %185 = vmatprep.mubr.bf16.mxu0 0
    %186 = vmatmul.mubr.bf16.gmra.mrb[0].mxu0 %v103
    %v187 = vpop.f32.mrb[0].mxu0
    %v188 = vadd.f32 0.0, %v187
    %v189 = vpop.f32.mrb[0].mxu0
    %v190 = vpop.f32.mrb[0].mxu0
    %v191 = vadd.f32 0.0, %v190
    %v192 = vpop.f32.mrb[0].mxu0
    %193 = vdwg.mxu0
    %v194 = vadd.f32 %v79, %v188
    %v195 = vadd.f32 %v80, %v191
    %vm196 = vcmask 261120
    %197 = vst.msk [vmem:[#allocation2] sm:$0xff] %vm196, %v194
    %198 = vst.msk [vmem:[#allocation2 + $0x8] sm:$0xff] %vm196, %v195
    // Predicated region
    $region38: #{gpt_forward.16} parent=1 // pred_check
      %p199 = pneg %p72
    $region39: #{gpt_forward.16} parent=1 // pred_check_branch
      %201 = sbr.rel (%p199) target = $region41
    $region40: #{gpt_forward.16} parent=1 // pred_region
      %v202 = vld [vmem:[#allocation2] sm:$0xff]
      %v203 = vld [vmem:[#allocation2 + $0x8] sm:$0xff]
      %v204 = vld [vmem:[#allocation8] sm:$0x1]
      %v206 = vlaneseq
      %v207 = vshrl.u32 %v206, 7
      %v208 = vsub.s32 0, %v207
      %v209 = vrot.slane %v204, %v208
      %v211 = vadd.f32 %v202, %v209
      %v212 = vadd.f32 %v203, %v209
      %v213 = vld [vmem:[#allocation9] sm:$0xff]
      %v214 = vld [vmem:[#allocation9 + $0x8] sm:$0xff]
      %v215 = vadd.f32 %v211, %v213
      %v216 = vadd.f32 %v212, %v214
      %217 = vst.msk [vmem:[#allocation11] sm:$0xff] %vm196, %v215
      %218 = vst.msk [vmem:[#allocation11 + $0x8] sm:$0xff] %vm196, %v216
    $region41: #{gpt_forward.16} parent=1 // pred_fallthru
      _
    // Predicated region
    $region42: #{gpt_forward.16} parent=1 // pred_check
      _
    $region43: #{gpt_forward.16} parent=1 // pred_check_branch
      %220 = sbr.rel (0) target = $region45
    $region44: #{gpt_forward.16} parent=1 // pred_region
      %s222 = ssub.s32 256, 256
      %223 = vsyncadd [#allocation5], %s222
      %s224 = sshll.u32 [#allocation11], 4
      %s225 = int_to_ptr.vmem [resolvable:$true] %s224
      %230 = dma.vmem_to_hbm [thread:$0]  %s225, 256, %s4, [#allocation5], 128, 128, 8
    $region45: #{gpt_forward.16} parent=1 // pred_fallthru
      _
    // Predicated region
    $region46: #{gpt_forward.16} parent=1 // pred_check
      _
    $region47: #{gpt_forward.16} parent=1 // pred_check_branch
      %232 = sbr.rel (0) target = $region49
    $region48: #{gpt_forward.16} parent=1 // pred_region
      %233 = dma.done [#allocation5], 256
    $region49: #{gpt_forward.16} parent=1 // pred_fallthru
      _
    %234 = vsyncpa [#allocation4], 1
    %235 = vsyncpa [#allocation7], 1
    %236 = vsyncpa [#allocation10], 1
    %237 = vsyncpa [#allocation5], 1

</llo_original>
